<compile_context>
chip_gen: v5e
topology: v5e:2x2
jax: 0.10.0
libtpu: 0.0.40
codegen_flags: <defaults>
</compile_context>

<pallas_src>
import math
import functools

import jax
import jax.numpy as jnp
from jax.experimental import pallas as pl
from jax.experimental.pallas import tpu as pltpu

NEG = -1e30  # additive mask value (acts as -inf in f32 softmax)

# Row indices inside the packed per-layer vector tensor (NL, 12, WMAX).
(V_BQKV_T, V_BO_T, V_G1, V_B1,
 V_BQKV_P, V_BO_P, V_GP, V_BP,
 V_BH1, V_BH2, V_G2, V_B2) = range(12)
NUM_VEC_ROWS = 12


# ----------------------------------------------------------------------------
# In-kernel helpers (pure jnp / lax, traced inside the Pallas kernel)
# ----------------------------------------------------------------------------
def _dot(a, b):
    return jnp.dot(a, b, preferred_element_type=jnp.float32)


def _dot_nt(a, b):
    # a @ b.T without materialising the transpose
    return jax.lax.dot_general(
        a, b, (((1,), (1,)), ((), ())), preferred_element_type=jnp.float32)


def _layer_norm(x, g, b):
    mu = jnp.mean(x, axis=-1, keepdims=True)
    xc = x - mu
    var = jnp.mean(xc * xc, axis=-1, keepdims=True)
    return xc * jax.lax.rsqrt(var + 1e-5) * g + b


def _softmax_zero_attn(s):
    """Softmax over keys with one implicit extra zero-logit / zero-value key.

    Equivalent to torch nn.MultiheadAttention(add_zero_attn=True) without
    materialising the concatenated zero key/value column.  Keys masked with
    -1e30 contribute exactly 0 to numerator and denominator.
    """
    m = jnp.maximum(jnp.max(s, axis=-1, keepdims=True), 0.0)  # include the 0 logit
    p = jnp.exp(s - m)
    denom = jnp.sum(p, axis=-1, keepdims=True) + jnp.exp(-m)
    return p * pl.reciprocal(denom, approx=True)              # EUP slot


# ----------------------------------------------------------------------------
# Fused kernel: whole MotionTransformer forward for one batch element
# ----------------------------------------------------------------------------
def _motion_kernel(x_ref, maskt_ref, maskp_ref, stat_ref, embw_ref, brow_ref,
                   wqkvt_ref, wot_ref, wqkvp_ref, wop_ref, w1_ref, w2_ref,
                   vec_ref, projw_ref,
                   out_ref,
                   *, T, P, E, F, FP, H, NH, NL, ML, OUT, person_attn):
    R = P * T  # person-major rows: row = p*T + t

    mean = stat_ref[0:1, :]                     # (1, F)
    std = stat_ref[1:2, :]                      # (1, F)
    projb = stat_ref[2:3, :]                    # (1, F)

    # Masks hoisted out of the layer loop (loaded once per batch element).
    mask_t = maskt_ref[...]                     # (R, R) additive
    mask_p = maskp_ref[...]                     # (R, R) additive

    # ---- input normalisation + embedding + positional encoding --------------
    xn = (x_ref[...] - mean) / std                                  # (R, F)
    # embw is pre-scaled by `scale`; brow = scale*emb_bias + pos_enc per row.
    x = _dot(xn, embw_ref[...]) + brow_ref[...]                     # (R, E)

    def mha(xin, wqkv, bqkv, wo, bo, mask, nheads):
        """Full (R, R) masked multi-head attention; the mask encodes the
        per-person (temporal) / per-timestep (person) sequence structure."""
        dh = E // nheads
        sc = 1.0 / math.sqrt(dh)
        qkv = _dot(xin, wqkv) + bqkv                                # (R, 3E)
        heads = []
        for h in range(nheads):
            q = qkv[:, h * dh:(h + 1) * dh]
            k = qkv[:, E + h * dh:E + (h + 1) * dh]
            v = qkv[:, 2 * E + h * dh:2 * E + (h + 1) * dh]
            s = _dot_nt(q, k) * sc + mask                           # (R, R)
            heads.append(_dot(_softmax_zero_attn(s), v))            # (R, dh)
        cat = jnp.concatenate(heads, axis=1)                        # (R, E)
        return _dot(cat, wo) + bo

    for l in range(NL):
        vl = vec_ref[l]                                             # (12, WMAX)

        # ---------- temporal self-attention (per person, causal) ------------
        branch = mha(x, wqkvt_ref[l], vl[V_BQKV_T:V_BQKV_T + 1, :3 * E],
                     wot_ref[l], vl[V_BO_T:V_BO_T + 1, :E], mask_t, NH)
        x = _layer_norm(x + branch, vl[V_G1:V_G1 + 1, :E], vl[V_B1:V_B1 + 1, :E])

        # ---------- person self-attention (per time step, 2 heads) ----------
        if person_attn:
            branch = mha(x, wqkvp_ref[l], vl[V_BQKV_P:V_BQKV_P + 1, :3 * E],
                         wop_ref[l], vl[V_BO_P:V_BO_P + 1, :E], mask_p, 2)
            x = _layer_norm(x + branch, vl[V_GP:V_GP + 1, :E], vl[V_BP:V_BP + 1, :E])

        # ---------- feed-forward MLP ----------------------------------------
        hmid = jnp.maximum(_dot(x, w1_ref[l]) + vl[V_BH1:V_BH1 + 1, :H], 0.0)
        branch = _dot(hmid, w2_ref[l]) + vl[V_BH2:V_BH2 + 1, :E]
        x = _layer_norm(x + branch, vl[V_G2:V_G2 + 1, :E], vl[V_B2:V_B2 + 1, :E])

    # ---- projection (full slab) + cumsum-as-matmul + de-normalisation -------
    proj = _dot(x, projw_ref[...]) + projb                          # (R, F)
    ri = jax.lax.broadcasted_iota(jnp.int32, (OUT, OUT), 0)
    ci = jax.lax.broadcasted_iota(jnp.int32, (OUT, OUT), 1)
    tril = (ri >= ci).astype(jnp.float32)                           # cumsum matrix
    rows = []
    for p in range(P):
        change = proj[p * T + ML:p * T + T, :]                      # (OUT, F)
        base = (x_ref[p * T + ML - 1:p * T + ML, :] - mean) / std   # (1, F)
        rows.append(base + _dot(tril, change))                      # cumsum via MXU
    res = jnp.concatenate(rows, axis=0) * std + mean                # (P*OUT, F)
    if FP > F:                                                      # lane-pad to 128
        res = jnp.concatenate(
            [res, jnp.zeros((P * OUT, FP - F), jnp.float32)], axis=1)
    out_ref[...] = res                                              # single store


# ----------------------------------------------------------------------------
# Positional encoding (host-side, tiny)
# ----------------------------------------------------------------------------
def make_positional_encoding(d_model, len_in, len_out):
    position = jnp.arange(-len_in, len_out, dtype=jnp.float32)[:, None]
    div_term = jnp.exp(jnp.arange(0, d_model, 2, dtype=jnp.float32)
                       * (-math.log(10000.0) / d_model))
    pe = jnp.zeros((len_in + len_out, d_model), jnp.float32)
    pe = pe.at[:, 0::2].set(jnp.sin(position * div_term))
    pe = pe.at[:, 1::2].set(jnp.cos(position * div_term))
    return pe


# ----------------------------------------------------------------------------
# MotionTransformer forward (wrapper: layout plumbing + single pallas_call)
# ----------------------------------------------------------------------------
def motion_transformer_forward(params, batch_u, padding_mask, output_length, *,
                               embedding_dim, num_heads, len_in, len_out,
                               person_attn, scale, use_temp_mask):
    F = batch_u.shape[-1]
    max_len = batch_u.shape[0] - len_out
    assert max_len >= 1, "max_len must be >= 1 (last observed frame is the cumsum base)"
    T = max_len + output_length
    batch_u = batch_u[:T]
    padding_mask = padding_mask[:T]
    _, B, P, _ = batch_u.shape
    E = embedding_dim
    layers = params["layers"]
    NL = len(layers)
    H = layers[0]["lin1_w"].shape[1]
    R = P * T                               # person-major rows: row = p*T + t
    FP = ((F + 127) // 128) * 128           # lane-dense output width
    WMAX = max(3 * E, H, E)

    # ---- one-time layout plumbing (XLA, tiny) -------------------------------
    x_rows = jnp.transpose(batch_u, (1, 2, 0, 3)).reshape(B, R, F)

    pe = make_positional_encoding(E, len_in, len_out)[
        len_in - max_len:len_in + output_length]                     # (T, E)
    emb_w = jnp.asarray(params["emb_w"], jnp.float32) * scale
    brow = jnp.tile(scale * jnp.asarray(params["emb_b"], jnp.float32)[None, :]
                    + pe, (P, 1))                                    # (R, E)

    # ---- additive (R, R) attention masks, one slab per batch element --------
    pid = jnp.arange(R) // T                                         # person of row
    tid = jnp.arange(R) % T                                          # time of row
    kpad = jnp.transpose(
        jnp.where(padding_mask, NEG, 0.0).astype(jnp.float32),
        (1, 2, 0)).reshape(B, R)                                     # key j = p*T + t
    if use_temp_mask:
        causal_ok = tid[:, None] >= tid[None, :]
    else:
        causal_ok = jnp.ones((R, R), dtype=bool)
    mask_t = (jnp.where((pid[:, None] == pid[None, :]) & causal_ok, 0.0, NEG)
              .astype(jnp.float32)[None] + kpad[:, None, :])         # (B, R, R)
    mask_p = (jnp.where(tid[:, None] == tid[None, :], 0.0, NEG)
              .astype(jnp.float32)[None] + kpad[:, None, :])         # (B, R, R)

    # ---- parameter packing ---------------------------------------------------
    def stack_mat(name, shape):
        if name in layers[0]:
            return jnp.stack([jnp.asarray(lp[name], jnp.float32).reshape(shape)
                              for lp in layers], axis=0)
        return jnp.zeros((NL,) + shape, jnp.float32)

    def vec_row(name, width):
        if name in layers[0]:
            v = jnp.stack([jnp.asarray(lp[name], jnp.float32).reshape(width)
                           for lp in layers], axis=0)
        else:
            v = jnp.zeros((NL, width), jnp.float32)
        return jnp.pad(v, ((0, 0), (0, WMAX - width)))

    wqkv_t = stack_mat("time_in_w", (E, 3 * E))
    wo_t = stack_mat("time_out_w", (E, E))
    wqkv_p = stack_mat("pers_in_w", (E, 3 * E))
    wo_p = stack_mat("pers_out_w", (E, E))
    w1 = stack_mat("lin1_w", (E, H))
    w2 = stack_mat("lin2_w", (H, E))

    vec_rows = [None] * NUM_VEC_ROWS
    vec_rows[V_BQKV_T] = vec_row("time_in_b", 3 * E)
    vec_rows[V_BO_T] = vec_row("time_out_b", E)
    vec_rows[V_G1] = vec_row("norm1_g", E)
    vec_rows[V_B1] = vec_row("norm1_b", E)
    vec_rows[V_BQKV_P] = vec_row("pers_in_b", 3 * E)
    vec_rows[V_BO_P] = vec_row("pers_out_b", E)
    vec_rows[V_GP] = vec_row("pnorm_g", E)
    vec_rows[V_BP] = vec_row("pnorm_b", E)
    vec_rows[V_BH1] = vec_row("lin1_b", H)
    vec_rows[V_BH2] = vec_row("lin2_b", E)
    vec_rows[V_G2] = vec_row("norm2_g", E)
    vec_rows[V_B2] = vec_row("norm2_b", E)
    vecs = jnp.stack(vec_rows, axis=1)                               # (NL, 12, WMAX)

    stat = jnp.concatenate(
        [jnp.asarray(params["data_mean"], jnp.float32).reshape(1, F),
         jnp.asarray(params["data_std"], jnp.float32).reshape(1, F),
         jnp.asarray(params["proj_b"], jnp.float32).reshape(1, F)], axis=0)
    proj_w = jnp.asarray(params["proj_w"], jnp.float32)

    kernel = functools.partial(
        _motion_kernel, T=T, P=P, E=E, F=F, FP=FP, H=H, NH=num_heads, NL=NL,
        ML=max_len, OUT=output_length, person_attn=person_attn)

    def batched(*shape):
        n = len(shape)
        return pl.BlockSpec((None,) + shape, lambda b, n=n: (b,) + (0,) * n)

    def shared(*shape):
        n = len(shape)
        return pl.BlockSpec(shape, lambda b, n=n: (0,) * n)

    # ---- explicit VMEM budget (resident weights + double-buffered blocks) ---
    def vbytes(shape):
        s = tuple(int(d) for d in shape)
        lead = 1
        for d in s[:-2]:
            lead *= d
        sub = -(-s[-2] // 8) * 8
        lane = -(-s[-1] // 128) * 128
        return lead * sub * lane * 4

    block_shapes = [(R, F), (R, R), (R, R), (3, F), (F, E), (R, E),
                    (NL, E, 3 * E), (NL, E, E), (NL, E, 3 * E), (NL, E, E),
                    (NL, E, H), (NL, H, E), (NL, NUM_VEC_ROWS, WMAX), (E, F),
                    (P * output_length, FP)]
    footprint = 2 * sum(vbytes(s) for s in block_shapes)   # double-buffered
    vmem_limit = int(min(max(4 * footprint, 16 * 1024 * 1024), 48 * 1024 * 1024))

    out = pl.pallas_call(
        kernel,
        out_shape=jax.ShapeDtypeStruct((B, P * output_length, FP), jnp.float32),
        grid=(B,),
        in_specs=[
            batched(R, F),                  # raw input rows
            batched(R, R),                  # temporal additive mask (person+causal+pad)
            batched(R, R),                  # person additive mask (same-time+pad)
            shared(3, F),                   # [mean; std; proj_bias]
            shared(F, E),                   # embedding weight (pre-scaled)
            shared(R, E),                   # scale*emb_bias + positional enc.
            shared(NL, E, 3 * E),           # temporal QKV weights
            shared(NL, E, E),               # temporal out-proj weights
            shared(NL, E, 3 * E),           # person QKV weights
            shared(NL, E, E),               # person out-proj weights
            shared(NL, E, H),               # MLP lin1 weights
            shared(NL, H, E),               # MLP lin2 weights
            shared(NL, NUM_VEC_ROWS, WMAX),  # packed biases / LN gamma+beta
            shared(E, F),                   # projection weight
        ],
        out_specs=pl.BlockSpec((None, P * output_length, FP),
                               lambda b: (b, 0, 0)),
        compiler_params=pltpu.CompilerParams(
            dimension_semantics=("parallel",),
            vmem_limit_bytes=vmem_limit),
    )(x_rows, mask_t, mask_p, stat, emb_w, brow,
      wqkv_t, wo_t, wqkv_p, wo_p, w1, w2, vecs, proj_w)

    # (B, P*OUT, FP) -> slice lanes -> (OUT, B, P, F) -> (OUT, B*P, F)
    out = out[:, :, :F].reshape(B, P, output_length, F)
    return jnp.transpose(out, (2, 0, 1, 3)).reshape(output_length, B * P, F)


# ----------------------------------------------------------------------------
# Deterministic parameter initialization
# ----------------------------------------------------------------------------
def init_params(key, num_layers, E, H, person_attn):
    keys = iter(jax.random.split(key, 8 + num_layers * 16))

    def dense(fin, fout, s=0.05):
        w = jax.random.normal(next(keys), (fin, fout), jnp.float32) * s
        b = jax.random.normal(next(keys), (fout,), jnp.float32) * s
        return w, b

    params = {}
    params["emb_w"], params["emb_b"] = dense(72, E)
    params["proj_w"], params["proj_b"] = dense(E, 72)
    params["data_mean"] = jnp.zeros((1, 1, 1, 72), jnp.float32)
    params["data_std"] = jnp.ones((1, 1, 1, 72), jnp.float32)

    layers = []
    for _ in range(num_layers):
        lp = {}
        lp["time_in_w"], lp["time_in_b"] = dense(E, 3 * E)
        lp["time_out_w"], lp["time_out_b"] = dense(E, E)
        if person_attn:
            lp["pers_in_w"], lp["pers_in_b"] = dense(E, 3 * E)
            lp["pers_out_w"], lp["pers_out_b"] = dense(E, E)
            lp["pnorm_g"] = jnp.ones((E,), jnp.float32)
            lp["pnorm_b"] = jnp.zeros((E,), jnp.float32)
        lp["lin1_w"], lp["lin1_b"] = dense(E, H)
        lp["lin2_w"], lp["lin2_b"] = dense(H, E)
        lp["norm1_g"] = jnp.ones((E,), jnp.float32)
        lp["norm1_b"] = jnp.zeros((E,), jnp.float32)
        lp["norm2_g"] = jnp.ones((E,), jnp.float32)
        lp["norm2_b"] = jnp.zeros((E,), jnp.float32)
        layers.append(lp)
    params["layers"] = layers
    return params


# ----------------------------------------------------------------------------
if __name__ == "__main__":
    num_layers = 2
    embedding_dim = 32
    hidden_dim = 64
    num_heads = 4
    len_in, len_out = 6, 4
    batch, people = 2, 3
    output_length = 4
    person_attn = True
    scale_input = True
    use_temp_mask = True

    key = jax.random.PRNGKey(0)
    kp, kx, km = jax.random.split(key, 3)
    params = init_params(kp, num_layers, embedding_dim, hidden_dim, person_attn)

    T = len_in + len_out
    batch_u = jax.random.normal(kx, (T, batch, people, 72), jnp.float32)
    padding_mask = jax.random.bernoulli(km, 0.15, (T, batch, people))

    fwd = jax.jit(
        functools.partial(
            motion_transformer_forward,
            embedding_dim=embedding_dim, num_heads=num_heads,
            len_in=len_in, len_out=len_out, person_attn=person_attn,
            scale=math.sqrt(embedding_dim) if scale_input else 1.0,
            use_temp_mask=use_temp_mask),
        static_argnums=(3,))

    out = fwd(params, batch_u, padding_mask, output_length)
    jax.block_until_ready(out)
    assert out.shape == (output_length, batch * people, 72)
    assert bool(jnp.all(jnp.isfinite(out)))
    print("KERNEL_OK")
</pallas_src>

<mosaic_0001>
module attributes {stable_mosaic.version = 11 : i64} {
  func.func @_motion_kernel(%arg0: i32, %arg1: memref<1x30x72xf32, #tpu.memory_space<vmem>>, %arg2: memref<1x30x30xf32, #tpu.memory_space<vmem>>, %arg3: memref<1x30x30xf32, #tpu.memory_space<vmem>>, %arg4: memref<3x72xf32, #tpu.memory_space<vmem>>, %arg5: memref<72x32xf32, #tpu.memory_space<vmem>>, %arg6: memref<30x32xf32, #tpu.memory_space<vmem>>, %arg7: memref<2x32x96xf32, #tpu.memory_space<vmem>>, %arg8: memref<2x32x32xf32, #tpu.memory_space<vmem>>, %arg9: memref<2x32x96xf32, #tpu.memory_space<vmem>>, %arg10: memref<2x32x32xf32, #tpu.memory_space<vmem>>, %arg11: memref<2x32x64xf32, #tpu.memory_space<vmem>>, %arg12: memref<2x64x32xf32, #tpu.memory_space<vmem>>, %arg13: memref<2x12x96xf32, #tpu.memory_space<vmem>>, %arg14: memref<32x72xf32, #tpu.memory_space<vmem>>, %arg15: memref<1x12x128xf32, #tpu.memory_space<vmem>>) attributes {dimension_semantics = [#tpu.dimension_semantics<parallel>], iteration_bounds = array<i64: 2>, scalar_prefetch = 0 : i64, scratch_operands = 0 : i64, tpu.core_type = #tpu.core_type<tc>, window_params = [{transform_indices = @transform_0, window_bounds = array<i64: 1, 30, 72>}, {transform_indices = @transform_1, window_bounds = array<i64: 1, 30, 30>}, {transform_indices = @transform_2, window_bounds = array<i64: 1, 30, 30>}, {pipeline_mode = #tpu.pipeline_mode<synchronous>, transform_indices = @transform_3, window_bounds = array<i64: 3, 72>}, {pipeline_mode = #tpu.pipeline_mode<synchronous>, transform_indices = @transform_4, window_bounds = array<i64: 72, 32>}, {pipeline_mode = #tpu.pipeline_mode<synchronous>, transform_indices = @transform_5, window_bounds = array<i64: 30, 32>}, {pipeline_mode = #tpu.pipeline_mode<synchronous>, transform_indices = @transform_6, window_bounds = array<i64: 2, 32, 96>}, {pipeline_mode = #tpu.pipeline_mode<synchronous>, transform_indices = @transform_7, window_bounds = array<i64: 2, 32, 32>}, {pipeline_mode = #tpu.pipeline_mode<synchronous>, transform_indices = @transform_8, window_bounds = array<i64: 2, 32, 96>}, {pipeline_mode = #tpu.pipeline_mode<synchronous>, transform_indices = @transform_9, window_bounds = array<i64: 2, 32, 32>}, {pipeline_mode = #tpu.pipeline_mode<synchronous>, transform_indices = @transform_10, window_bounds = array<i64: 2, 32, 64>}, {pipeline_mode = #tpu.pipeline_mode<synchronous>, transform_indices = @transform_11, window_bounds = array<i64: 2, 64, 32>}, {pipeline_mode = #tpu.pipeline_mode<synchronous>, transform_indices = @transform_12, window_bounds = array<i64: 2, 12, 96>}, {pipeline_mode = #tpu.pipeline_mode<synchronous>, transform_indices = @transform_13, window_bounds = array<i64: 32, 72>}, {transform_indices = @transform_14, window_bounds = array<i64: 1, 12, 128>}]} {
    %c0 = arith.constant 0 : index
    %c0_0 = arith.constant 0 : index
    %0 = vector.load %arg4[%c0, %c0_0] : memref<3x72xf32, #tpu.memory_space<vmem>>, vector<1x72xf32>
    %c1 = arith.constant 1 : index
    %c0_1 = arith.constant 0 : index
    %1 = vector.load %arg4[%c1, %c0_1] : memref<3x72xf32, #tpu.memory_space<vmem>>, vector<1x72xf32>
    %c2 = arith.constant 2 : index
    %c0_2 = arith.constant 0 : index
    %2 = vector.load %arg4[%c2, %c0_2] : memref<3x72xf32, #tpu.memory_space<vmem>>, vector<1x72xf32>
    %c0_3 = arith.constant 0 : index
    %c0_4 = arith.constant 0 : index
    %c0_5 = arith.constant 0 : index
    %3 = vector.load %arg2[%c0_3, %c0_4, %c0_5] : memref<1x30x30xf32, #tpu.memory_space<vmem>>, vector<1x30x30xf32>
    %4 = vector.shape_cast %3 : vector<1x30x30xf32> to vector<30x30xf32>
    %c0_6 = arith.constant 0 : index
    %c0_7 = arith.constant 0 : index
    %c0_8 = arith.constant 0 : index
    %5 = vector.load %arg3[%c0_6, %c0_7, %c0_8] : memref<1x30x30xf32, #tpu.memory_space<vmem>>, vector<1x30x30xf32>
    %6 = vector.shape_cast %5 : vector<1x30x30xf32> to vector<30x30xf32>
    %c0_9 = arith.constant 0 : index
    %c0_10 = arith.constant 0 : index
    %c0_11 = arith.constant 0 : index
    %7 = vector.load %arg1[%c0_9, %c0_10, %c0_11] : memref<1x30x72xf32, #tpu.memory_space<vmem>>, vector<1x30x72xf32>
    %8 = vector.shape_cast %7 : vector<1x30x72xf32> to vector<30x72xf32>
    %9 = vector.broadcast %0 : vector<1x72xf32> to vector<30x72xf32>
    %10 = arith.subf %8, %9 : vector<30x72xf32>
    %11 = vector.broadcast %1 : vector<1x72xf32> to vector<30x72xf32>
    %12 = arith.divf %10, %11 : vector<30x72xf32>
    %c0_12 = arith.constant 0 : index
    %c0_13 = arith.constant 0 : index
    %13 = vector.load %arg5[%c0_12, %c0_13] : memref<72x32xf32, #tpu.memory_space<vmem>>, vector<72x32xf32>
    %cst = arith.constant dense<0.000000e+00> : vector<30x32xf32>
    %14 = tpu.matmul %12, %13, %cst {dimension_numbers = #tpu.dot_dimension_numbers<[1], [0], [0], [1], [0, 0, 1, 1], [], []>} : vector<30x72xf32>, vector<72x32xf32>, vector<30x32xf32> -> vector<30x32xf32>
    %c0_14 = arith.constant 0 : index
    %c0_15 = arith.constant 0 : index
    %15 = vector.load %arg6[%c0_14, %c0_15] : memref<30x32xf32, #tpu.memory_space<vmem>>, vector<30x32xf32>
    %16 = arith.addf %14, %15 : vector<30x32xf32>
    %c0_16 = arith.constant 0 : index
    %c0_17 = arith.constant 0 : index
    %c0_18 = arith.constant 0 : index
    %17 = vector.load %arg13[%c0_16, %c0_17, %c0_18] : memref<2x12x96xf32, #tpu.memory_space<vmem>>, vector<1x12x96xf32>
    %18 = vector.shape_cast %17 : vector<1x12x96xf32> to vector<12x96xf32>
    %c0_19 = arith.constant 0 : index
    %c0_20 = arith.constant 0 : index
    %c0_21 = arith.constant 0 : index
    %19 = vector.load %arg7[%c0_19, %c0_20, %c0_21] : memref<2x32x96xf32, #tpu.memory_space<vmem>>, vector<1x32x96xf32>
    %20 = vector.shape_cast %19 : vector<1x32x96xf32> to vector<32x96xf32>
    %21 = vector.extract_strided_slice %18 {offsets = [0, 0], sizes = [1, 96], strides = [1, 1]} : vector<12x96xf32> to vector<1x96xf32>
    %c0_22 = arith.constant 0 : index
    %c0_23 = arith.constant 0 : index
    %c0_24 = arith.constant 0 : index
    %22 = vector.load %arg8[%c0_22, %c0_23, %c0_24] : memref<2x32x32xf32, #tpu.memory_space<vmem>>, vector<1x32x32xf32>
    %23 = vector.shape_cast %22 : vector<1x32x32xf32> to vector<32x32xf32>
    %24 = vector.extract_strided_slice %18 {offsets = [1, 0], sizes = [1, 32], strides = [1, 1]} : vector<12x96xf32> to vector<1x32xf32>
    %cst_25 = arith.constant dense<0.000000e+00> : vector<30x96xf32>
    %25 = tpu.matmul %16, %20, %cst_25 {dimension_numbers = #tpu.dot_dimension_numbers<[1], [0], [0], [1], [0, 0, 1, 1], [], []>} : vector<30x32xf32>, vector<32x96xf32>, vector<30x96xf32> -> vector<30x96xf32>
    %26 = vector.broadcast %21 : vector<1x96xf32> to vector<30x96xf32>
    %27 = arith.addf %25, %26 : vector<30x96xf32>
    %28 = vector.extract_strided_slice %27 {offsets = [0, 0], sizes = [30, 8], strides = [1, 1]} : vector<30x96xf32> to vector<30x8xf32>
    %29 = vector.extract_strided_slice %27 {offsets = [0, 32], sizes = [30, 8], strides = [1, 1]} : vector<30x96xf32> to vector<30x8xf32>
    %30 = vector.extract_strided_slice %27 {offsets = [0, 64], sizes = [30, 8], strides = [1, 1]} : vector<30x96xf32> to vector<30x8xf32>
    %cst_26 = arith.constant dense<0.000000e+00> : vector<30x30xf32>
    %31 = tpu.matmul %28, %29, %cst_26 {dimension_numbers = #tpu.dot_dimension_numbers<[1], [1], [0], [0], [0, 0, 1, 0], [], []>} : vector<30x8xf32>, vector<30x8xf32>, vector<30x30xf32> -> vector<30x30xf32>
    %cst_27 = arith.constant 0.353553385 : f32
    %32 = vector.broadcast %cst_27 : f32 to vector<30x30xf32>
    %33 = arith.mulf %31, %32 : vector<30x30xf32>
    %34 = arith.addf %33, %4 : vector<30x30xf32>
    %cst_28 = arith.constant dense<0xFF800000> : vector<30xf32>
    %35 = vector.multi_reduction <maximumf>, %34, %cst_28 [1] : vector<30x30xf32> to vector<30xf32>
    %36 = vector.shape_cast %35 : vector<30xf32> to vector<30x1xf32>
    %cst_29 = arith.constant 0.000000e+00 : f32
    %37 = vector.broadcast %cst_29 : f32 to vector<30x1xf32>
    %38 = arith.maximumf %36, %37 : vector<30x1xf32>
    %39 = vector.broadcast %38 : vector<30x1xf32> to vector<30x30xf32>
    %40 = arith.subf %34, %39 : vector<30x30xf32>
    %41 = math.exp %40 : vector<30x30xf32>
    %cst_30 = arith.constant dense<0.000000e+00> : vector<30xf32>
    %42 = vector.multi_reduction <add>, %41, %cst_30 [1] : vector<30x30xf32> to vector<30xf32>
    %43 = vector.shape_cast %42 : vector<30xf32> to vector<30x1xf32>
    %cst_31 = arith.constant 0.000000e+00 : f32
    %44 = vector.broadcast %cst_31 : f32 to vector<30x1xf32>
    %45 = arith.subf %44, %38 : vector<30x1xf32>
    %46 = math.exp %45 : vector<30x1xf32>
    %47 = arith.addf %43, %46 : vector<30x1xf32>
    %48 = tpu.reciprocal %47 {approx = true} : vector<30x1xf32> -> vector<30x1xf32>
    %49 = vector.broadcast %48 : vector<30x1xf32> to vector<30x30xf32>
    %50 = arith.mulf %41, %49 : vector<30x30xf32>
    %cst_32 = arith.constant dense<0.000000e+00> : vector<30x8xf32>
    %51 = tpu.matmul %50, %30, %cst_32 {dimension_numbers = #tpu.dot_dimension_numbers<[1], [0], [0], [1], [0, 0, 1, 1], [], []>} : vector<30x30xf32>, vector<30x8xf32>, vector<30x8xf32> -> vector<30x8xf32>
    %52 = vector.extract_strided_slice %27 {offsets = [0, 8], sizes = [30, 8], strides = [1, 1]} : vector<30x96xf32> to vector<30x8xf32>
    %53 = vector.extract_strided_slice %27 {offsets = [0, 40], sizes = [30, 8], strides = [1, 1]} : vector<30x96xf32> to vector<30x8xf32>
    %54 = vector.extract_strided_slice %27 {offsets = [0, 72], sizes = [30, 8], strides = [1, 1]} : vector<30x96xf32> to vector<30x8xf32>
    %cst_33 = arith.constant dense<0.000000e+00> : vector<30x30xf32>
    %55 = tpu.matmul %52, %53, %cst_33 {dimension_numbers = #tpu.dot_dimension_numbers<[1], [1], [0], [0], [0, 0, 1, 0], [], []>} : vector<30x8xf32>, vector<30x8xf32>, vector<30x30xf32> -> vector<30x30xf32>
    %cst_34 = arith.constant 0.353553385 : f32
    %56 = vector.broadcast %cst_34 : f32 to vector<30x30xf32>
    %57 = arith.mulf %55, %56 : vector<30x30xf32>
    %58 = arith.addf %57, %4 : vector<30x30xf32>
    %cst_35 = arith.constant dense<0xFF800000> : vector<30xf32>
    %59 = vector.multi_reduction <maximumf>, %58, %cst_35 [1] : vector<30x30xf32> to vector<30xf32>
    %60 = vector.shape_cast %59 : vector<30xf32> to vector<30x1xf32>
    %cst_36 = arith.constant 0.000000e+00 : f32
    %61 = vector.broadcast %cst_36 : f32 to vector<30x1xf32>
    %62 = arith.maximumf %60, %61 : vector<30x1xf32>
    %63 = vector.broadcast %62 : vector<30x1xf32> to vector<30x30xf32>
    %64 = arith.subf %58, %63 : vector<30x30xf32>
    %65 = math.exp %64 : vector<30x30xf32>
    %cst_37 = arith.constant dense<0.000000e+00> : vector<30xf32>
    %66 = vector.multi_reduction <add>, %65, %cst_37 [1] : vector<30x30xf32> to vector<30xf32>
    %67 = vector.shape_cast %66 : vector<30xf32> to vector<30x1xf32>
    %cst_38 = arith.constant 0.000000e+00 : f32
    %68 = vector.broadcast %cst_38 : f32 to vector<30x1xf32>
    %69 = arith.subf %68, %62 : vector<30x1xf32>
    %70 = math.exp %69 : vector<30x1xf32>
    %71 = arith.addf %67, %70 : vector<30x1xf32>
    %72 = tpu.reciprocal %71 {approx = true} : vector<30x1xf32> -> vector<30x1xf32>
    %73 = vector.broadcast %72 : vector<30x1xf32> to vector<30x30xf32>
    %74 = arith.mulf %65, %73 : vector<30x30xf32>
    %cst_39 = arith.constant dense<0.000000e+00> : vector<30x8xf32>
    %75 = tpu.matmul %74, %54, %cst_39 {dimension_numbers = #tpu.dot_dimension_numbers<[1], [0], [0], [1], [0, 0, 1, 1], [], []>} : vector<30x30xf32>, vector<30x8xf32>, vector<30x8xf32> -> vector<30x8xf32>
    %76 = vector.extract_strided_slice %27 {offsets = [0, 16], sizes = [30, 8], strides = [1, 1]} : vector<30x96xf32> to vector<30x8xf32>
    %77 = vector.extract_strided_slice %27 {offsets = [0, 48], sizes = [30, 8], strides = [1, 1]} : vector<30x96xf32> to vector<30x8xf32>
    %78 = vector.extract_strided_slice %27 {offsets = [0, 80], sizes = [30, 8], strides = [1, 1]} : vector<30x96xf32> to vector<30x8xf32>
    %cst_40 = arith.constant dense<0.000000e+00> : vector<30x30xf32>
    %79 = tpu.matmul %76, %77, %cst_40 {dimension_numbers = #tpu.dot_dimension_numbers<[1], [1], [0], [0], [0, 0, 1, 0], [], []>} : vector<30x8xf32>, vector<30x8xf32>, vector<30x30xf32> -> vector<30x30xf32>
    %cst_41 = arith.constant 0.353553385 : f32
    %80 = vector.broadcast %cst_41 : f32 to vector<30x30xf32>
    %81 = arith.mulf %79, %80 : vector<30x30xf32>
    %82 = arith.addf %81, %4 : vector<30x30xf32>
    %cst_42 = arith.constant dense<0xFF800000> : vector<30xf32>
    %83 = vector.multi_reduction <maximumf>, %82, %cst_42 [1] : vector<30x30xf32> to vector<30xf32>
    %84 = vector.shape_cast %83 : vector<30xf32> to vector<30x1xf32>
    %cst_43 = arith.constant 0.000000e+00 : f32
    %85 = vector.broadcast %cst_43 : f32 to vector<30x1xf32>
    %86 = arith.maximumf %84, %85 : vector<30x1xf32>
    %87 = vector.broadcast %86 : vector<30x1xf32> to vector<30x30xf32>
    %88 = arith.subf %82, %87 : vector<30x30xf32>
    %89 = math.exp %88 : vector<30x30xf32>
    %cst_44 = arith.constant dense<0.000000e+00> : vector<30xf32>
    %90 = vector.multi_reduction <add>, %89, %cst_44 [1] : vector<30x30xf32> to vector<30xf32>
    %91 = vector.shape_cast %90 : vector<30xf32> to vector<30x1xf32>
    %cst_45 = arith.constant 0.000000e+00 : f32
    %92 = vector.broadcast %cst_45 : f32 to vector<30x1xf32>
    %93 = arith.subf %92, %86 : vector<30x1xf32>
    %94 = math.exp %93 : vector<30x1xf32>
    %95 = arith.addf %91, %94 : vector<30x1xf32>
    %96 = tpu.reciprocal %95 {approx = true} : vector<30x1xf32> -> vector<30x1xf32>
    %97 = vector.broadcast %96 : vector<30x1xf32> to vector<30x30xf32>
    %98 = arith.mulf %89, %97 : vector<30x30xf32>
    %cst_46 = arith.constant dense<0.000000e+00> : vector<30x8xf32>
    %99 = tpu.matmul %98, %78, %cst_46 {dimension_numbers = #tpu.dot_dimension_numbers<[1], [0], [0], [1], [0, 0, 1, 1], [], []>} : vector<30x30xf32>, vector<30x8xf32>, vector<30x8xf32> -> vector<30x8xf32>
    %100 = vector.extract_strided_slice %27 {offsets = [0, 24], sizes = [30, 8], strides = [1, 1]} : vector<30x96xf32> to vector<30x8xf32>
    %101 = vector.extract_strided_slice %27 {offsets = [0, 56], sizes = [30, 8], strides = [1, 1]} : vector<30x96xf32> to vector<30x8xf32>
    %102 = vector.extract_strided_slice %27 {offsets = [0, 88], sizes = [30, 8], strides = [1, 1]} : vector<30x96xf32> to vector<30x8xf32>
    %cst_47 = arith.constant dense<0.000000e+00> : vector<30x30xf32>
    %103 = tpu.matmul %100, %101, %cst_47 {dimension_numbers = #tpu.dot_dimension_numbers<[1], [1], [0], [0], [0, 0, 1, 0], [], []>} : vector<30x8xf32>, vector<30x8xf32>, vector<30x30xf32> -> vector<30x30xf32>
    %cst_48 = arith.constant 0.353553385 : f32
    %104 = vector.broadcast %cst_48 : f32 to vector<30x30xf32>
    %105 = arith.mulf %103, %104 : vector<30x30xf32>
    %106 = arith.addf %105, %4 : vector<30x30xf32>
    %cst_49 = arith.constant dense<0xFF800000> : vector<30xf32>
    %107 = vector.multi_reduction <maximumf>, %106, %cst_49 [1] : vector<30x30xf32> to vector<30xf32>
    %108 = vector.shape_cast %107 : vector<30xf32> to vector<30x1xf32>
    %cst_50 = arith.constant 0.000000e+00 : f32
    %109 = vector.broadcast %cst_50 : f32 to vector<30x1xf32>
    %110 = arith.maximumf %108, %109 : vector<30x1xf32>
    %111 = vector.broadcast %110 : vector<30x1xf32> to vector<30x30xf32>
    %112 = arith.subf %106, %111 : vector<30x30xf32>
    %113 = math.exp %112 : vector<30x30xf32>
    %cst_51 = arith.constant dense<0.000000e+00> : vector<30xf32>
    %114 = vector.multi_reduction <add>, %113, %cst_51 [1] : vector<30x30xf32> to vector<30xf32>
    %115 = vector.shape_cast %114 : vector<30xf32> to vector<30x1xf32>
    %cst_52 = arith.constant 0.000000e+00 : f32
    %116 = vector.broadcast %cst_52 : f32 to vector<30x1xf32>
    %117 = arith.subf %116, %110 : vector<30x1xf32>
    %118 = math.exp %117 : vector<30x1xf32>
    %119 = arith.addf %115, %118 : vector<30x1xf32>
    %120 = tpu.reciprocal %119 {approx = true} : vector<30x1xf32> -> vector<30x1xf32>
    %121 = vector.broadcast %120 : vector<30x1xf32> to vector<30x30xf32>
    %122 = arith.mulf %113, %121 : vector<30x30xf32>
    %cst_53 = arith.constant dense<0.000000e+00> : vector<30x8xf32>
    %123 = tpu.matmul %122, %102, %cst_53 {dimension_numbers = #tpu.dot_dimension_numbers<[1], [0], [0], [1], [0, 0, 1, 1], [], []>} : vector<30x30xf32>, vector<30x8xf32>, vector<30x8xf32> -> vector<30x8xf32>
    %124 = tpu.concatenate %51, %75, %99, %123 in 1 : vector<30x8xf32>, vector<30x8xf32>, vector<30x8xf32>, vector<30x8xf32> -> vector<30x32xf32>
    %cst_54 = arith.constant dense<0.000000e+00> : vector<30x32xf32>
    %125 = tpu.matmul %124, %23, %cst_54 {dimension_numbers = #tpu.dot_dimension_numbers<[1], [0], [0], [1], [0, 0, 1, 1], [], []>} : vector<30x32xf32>, vector<32x32xf32>, vector<30x32xf32> -> vector<30x32xf32>
    %126 = vector.broadcast %24 : vector<1x32xf32> to vector<30x32xf32>
    %127 = arith.addf %125, %126 : vector<30x32xf32>
    %128 = arith.addf %16, %127 : vector<30x32xf32>
    %129 = vector.extract_strided_slice %18 {offsets = [2, 0], sizes = [1, 32], strides = [1, 1]} : vector<12x96xf32> to vector<1x32xf32>
    %130 = vector.extract_strided_slice %18 {offsets = [3, 0], sizes = [1, 32], strides = [1, 1]} : vector<12x96xf32> to vector<1x32xf32>
    %cst_55 = arith.constant dense<0.000000e+00> : vector<30xf32>
    %131 = vector.multi_reduction <add>, %128, %cst_55 [1] : vector<30x32xf32> to vector<30xf32>
    %132 = vector.shape_cast %131 : vector<30xf32> to vector<30x1xf32>
    %cst_56 = arith.constant 3.200000e+01 : f32
    %133 = vector.broadcast %cst_56 : f32 to vector<30x1xf32>
    %134 = arith.divf %132, %133 : vector<30x1xf32>
    %135 = vector.broadcast %134 : vector<30x1xf32> to vector<30x32xf32>
    %136 = arith.subf %128, %135 : vector<30x32xf32>
    %137 = arith.mulf %136, %136 : vector<30x32xf32>
    %cst_57 = arith.constant dense<0.000000e+00> : vector<30xf32>
    %138 = vector.multi_reduction <add>, %137, %cst_57 [1] : vector<30x32xf32> to vector<30xf32>
    %139 = vector.shape_cast %138 : vector<30xf32> to vector<30x1xf32>
    %cst_58 = arith.constant 3.200000e+01 : f32
    %140 = vector.broadcast %cst_58 : f32 to vector<30x1xf32>
    %141 = arith.divf %139, %140 : vector<30x1xf32>
    %cst_59 = arith.constant 9.99999974E-6 : f32
    %142 = vector.broadcast %cst_59 : f32 to vector<30x1xf32>
    %143 = arith.addf %141, %142 : vector<30x1xf32>
    %144 = math.rsqrt %143 : vector<30x1xf32>
    %145 = vector.broadcast %144 : vector<30x1xf32> to vector<30x32xf32>
    %146 = arith.mulf %136, %145 : vector<30x32xf32>
    %147 = vector.broadcast %129 : vector<1x32xf32> to vector<30x32xf32>
    %148 = arith.mulf %146, %147 : vector<30x32xf32>
    %149 = vector.broadcast %130 : vector<1x32xf32> to vector<30x32xf32>
    %150 = arith.addf %148, %149 : vector<30x32xf32>
    %c0_60 = arith.constant 0 : index
    %c0_61 = arith.constant 0 : index
    %c0_62 = arith.constant 0 : index
    %151 = vector.load %arg9[%c0_60, %c0_61, %c0_62] : memref<2x32x96xf32, #tpu.memory_space<vmem>>, vector<1x32x96xf32>
    %152 = vector.shape_cast %151 : vector<1x32x96xf32> to vector<32x96xf32>
    %153 = vector.extract_strided_slice %18 {offsets = [4, 0], sizes = [1, 96], strides = [1, 1]} : vector<12x96xf32> to vector<1x96xf32>
    %c0_63 = arith.constant 0 : index
    %c0_64 = arith.constant 0 : index
    %c0_65 = arith.constant 0 : index
    %154 = vector.load %arg10[%c0_63, %c0_64, %c0_65] : memref<2x32x32xf32, #tpu.memory_space<vmem>>, vector<1x32x32xf32>
    %155 = vector.shape_cast %154 : vector<1x32x32xf32> to vector<32x32xf32>
    %156 = vector.extract_strided_slice %18 {offsets = [5, 0], sizes = [1, 32], strides = [1, 1]} : vector<12x96xf32> to vector<1x32xf32>
    %cst_66 = arith.constant dense<0.000000e+00> : vector<30x96xf32>
    %157 = tpu.matmul %150, %152, %cst_66 {dimension_numbers = #tpu.dot_dimension_numbers<[1], [0], [0], [1], [0, 0, 1, 1], [], []>} : vector<30x32xf32>, vector<32x96xf32>, vector<30x96xf32> -> vector<30x96xf32>
    %158 = vector.broadcast %153 : vector<1x96xf32> to vector<30x96xf32>
    %159 = arith.addf %157, %158 : vector<30x96xf32>
    %160 = vector.extract_strided_slice %159 {offsets = [0, 0], sizes = [30, 16], strides = [1, 1]} : vector<30x96xf32> to vector<30x16xf32>
    %161 = vector.extract_strided_slice %159 {offsets = [0, 32], sizes = [30, 16], strides = [1, 1]} : vector<30x96xf32> to vector<30x16xf32>
    %162 = vector.extract_strided_slice %159 {offsets = [0, 64], sizes = [30, 16], strides = [1, 1]} : vector<30x96xf32> to vector<30x16xf32>
    %cst_67 = arith.constant dense<0.000000e+00> : vector<30x30xf32>
    %163 = tpu.matmul %160, %161, %cst_67 {dimension_numbers = #tpu.dot_dimension_numbers<[1], [1], [0], [0], [0, 0, 1, 0], [], []>} : vector<30x16xf32>, vector<30x16xf32>, vector<30x30xf32> -> vector<30x30xf32>
    %cst_68 = arith.constant 2.500000e-01 : f32
    %164 = vector.broadcast %cst_68 : f32 to vector<30x30xf32>
    %165 = arith.mulf %163, %164 : vector<30x30xf32>
    %166 = arith.addf %165, %6 : vector<30x30xf32>
    %cst_69 = arith.constant dense<0xFF800000> : vector<30xf32>
    %167 = vector.multi_reduction <maximumf>, %166, %cst_69 [1] : vector<30x30xf32> to vector<30xf32>
    %168 = vector.shape_cast %167 : vector<30xf32> to vector<30x1xf32>
    %cst_70 = arith.constant 0.000000e+00 : f32
    %169 = vector.broadcast %cst_70 : f32 to vector<30x1xf32>
    %170 = arith.maximumf %168, %169 : vector<30x1xf32>
    %171 = vector.broadcast %170 : vector<30x1xf32> to vector<30x30xf32>
    %172 = arith.subf %166, %171 : vector<30x30xf32>
    %173 = math.exp %172 : vector<30x30xf32>
    %cst_71 = arith.constant dense<0.000000e+00> : vector<30xf32>
    %174 = vector.multi_reduction <add>, %173, %cst_71 [1] : vector<30x30xf32> to vector<30xf32>
    %175 = vector.shape_cast %174 : vector<30xf32> to vector<30x1xf32>
    %cst_72 = arith.constant 0.000000e+00 : f32
    %176 = vector.broadcast %cst_72 : f32 to vector<30x1xf32>
    %177 = arith.subf %176, %170 : vector<30x1xf32>
    %178 = math.exp %177 : vector<30x1xf32>
    %179 = arith.addf %175, %178 : vector<30x1xf32>
    %180 = tpu.reciprocal %179 {approx = true} : vector<30x1xf32> -> vector<30x1xf32>
    %181 = vector.broadcast %180 : vector<30x1xf32> to vector<30x30xf32>
    %182 = arith.mulf %173, %181 : vector<30x30xf32>
    %cst_73 = arith.constant dense<0.000000e+00> : vector<30x16xf32>
    %183 = tpu.matmul %182, %162, %cst_73 {dimension_numbers = #tpu.dot_dimension_numbers<[1], [0], [0], [1], [0, 0, 1, 1], [], []>} : vector<30x30xf32>, vector<30x16xf32>, vector<30x16xf32> -> vector<30x16xf32>
    %184 = vector.extract_strided_slice %159 {offsets = [0, 16], sizes = [30, 16], strides = [1, 1]} : vector<30x96xf32> to vector<30x16xf32>
    %185 = vector.extract_strided_slice %159 {offsets = [0, 48], sizes = [30, 16], strides = [1, 1]} : vector<30x96xf32> to vector<30x16xf32>
    %186 = vector.extract_strided_slice %159 {offsets = [0, 80], sizes = [30, 16], strides = [1, 1]} : vector<30x96xf32> to vector<30x16xf32>
    %cst_74 = arith.constant dense<0.000000e+00> : vector<30x30xf32>
    %187 = tpu.matmul %184, %185, %cst_74 {dimension_numbers = #tpu.dot_dimension_numbers<[1], [1], [0], [0], [0, 0, 1, 0], [], []>} : vector<30x16xf32>, vector<30x16xf32>, vector<30x30xf32> -> vector<30x30xf32>
    %cst_75 = arith.constant 2.500000e-01 : f32
    %188 = vector.broadcast %cst_75 : f32 to vector<30x30xf32>
    %189 = arith.mulf %187, %188 : vector<30x30xf32>
    %190 = arith.addf %189, %6 : vector<30x30xf32>
    %cst_76 = arith.constant dense<0xFF800000> : vector<30xf32>
    %191 = vector.multi_reduction <maximumf>, %190, %cst_76 [1] : vector<30x30xf32> to vector<30xf32>
    %192 = vector.shape_cast %191 : vector<30xf32> to vector<30x1xf32>
    %cst_77 = arith.constant 0.000000e+00 : f32
    %193 = vector.broadcast %cst_77 : f32 to vector<30x1xf32>
    %194 = arith.maximumf %192, %193 : vector<30x1xf32>
    %195 = vector.broadcast %194 : vector<30x1xf32> to vector<30x30xf32>
    %196 = arith.subf %190, %195 : vector<30x30xf32>
    %197 = math.exp %196 : vector<30x30xf32>
    %cst_78 = arith.constant dense<0.000000e+00> : vector<30xf32>
    %198 = vector.multi_reduction <add>, %197, %cst_78 [1] : vector<30x30xf32> to vector<30xf32>
    %199 = vector.shape_cast %198 : vector<30xf32> to vector<30x1xf32>
    %cst_79 = arith.constant 0.000000e+00 : f32
    %200 = vector.broadcast %cst_79 : f32 to vector<30x1xf32>
    %201 = arith.subf %200, %194 : vector<30x1xf32>
    %202 = math.exp %201 : vector<30x1xf32>
    %203 = arith.addf %199, %202 : vector<30x1xf32>
    %204 = tpu.reciprocal %203 {approx = true} : vector<30x1xf32> -> vector<30x1xf32>
    %205 = vector.broadcast %204 : vector<30x1xf32> to vector<30x30xf32>
    %206 = arith.mulf %197, %205 : vector<30x30xf32>
    %cst_80 = arith.constant dense<0.000000e+00> : vector<30x16xf32>
    %207 = tpu.matmul %206, %186, %cst_80 {dimension_numbers = #tpu.dot_dimension_numbers<[1], [0], [0], [1], [0, 0, 1, 1], [], []>} : vector<30x30xf32>, vector<30x16xf32>, vector<30x16xf32> -> vector<30x16xf32>
    %208 = tpu.concatenate %183, %207 in 1 : vector<30x16xf32>, vector<30x16xf32> -> vector<30x32xf32>
    %cst_81 = arith.constant dense<0.000000e+00> : vector<30x32xf32>
    %209 = tpu.matmul %208, %155, %cst_81 {dimension_numbers = #tpu.dot_dimension_numbers<[1], [0], [0], [1], [0, 0, 1, 1], [], []>} : vector<30x32xf32>, vector<32x32xf32>, vector<30x32xf32> -> vector<30x32xf32>
    %210 = vector.broadcast %156 : vector<1x32xf32> to vector<30x32xf32>
    %211 = arith.addf %209, %210 : vector<30x32xf32>
    %212 = arith.addf %150, %211 : vector<30x32xf32>
    %213 = vector.extract_strided_slice %18 {offsets = [6, 0], sizes = [1, 32], strides = [1, 1]} : vector<12x96xf32> to vector<1x32xf32>
    %214 = vector.extract_strided_slice %18 {offsets = [7, 0], sizes = [1, 32], strides = [1, 1]} : vector<12x96xf32> to vector<1x32xf32>
    %cst_82 = arith.constant dense<0.000000e+00> : vector<30xf32>
    %215 = vector.multi_reduction <add>, %212, %cst_82 [1] : vector<30x32xf32> to vector<30xf32>
    %216 = vector.shape_cast %215 : vector<30xf32> to vector<30x1xf32>
    %cst_83 = arith.constant 3.200000e+01 : f32
    %217 = vector.broadcast %cst_83 : f32 to vector<30x1xf32>
    %218 = arith.divf %216, %217 : vector<30x1xf32>
    %219 = vector.broadcast %218 : vector<30x1xf32> to vector<30x32xf32>
    %220 = arith.subf %212, %219 : vector<30x32xf32>
    %221 = arith.mulf %220, %220 : vector<30x32xf32>
    %cst_84 = arith.constant dense<0.000000e+00> : vector<30xf32>
    %222 = vector.multi_reduction <add>, %221, %cst_84 [1] : vector<30x32xf32> to vector<30xf32>
    %223 = vector.shape_cast %222 : vector<30xf32> to vector<30x1xf32>
    %cst_85 = arith.constant 3.200000e+01 : f32
    %224 = vector.broadcast %cst_85 : f32 to vector<30x1xf32>
    %225 = arith.divf %223, %224 : vector<30x1xf32>
    %cst_86 = arith.constant 9.99999974E-6 : f32
    %226 = vector.broadcast %cst_86 : f32 to vector<30x1xf32>
    %227 = arith.addf %225, %226 : vector<30x1xf32>
    %228 = math.rsqrt %227 : vector<30x1xf32>
    %229 = vector.broadcast %228 : vector<30x1xf32> to vector<30x32xf32>
    %230 = arith.mulf %220, %229 : vector<30x32xf32>
    %231 = vector.broadcast %213 : vector<1x32xf32> to vector<30x32xf32>
    %232 = arith.mulf %230, %231 : vector<30x32xf32>
    %233 = vector.broadcast %214 : vector<1x32xf32> to vector<30x32xf32>
    %234 = arith.addf %232, %233 : vector<30x32xf32>
    %c0_87 = arith.constant 0 : index
    %c0_88 = arith.constant 0 : index
    %c0_89 = arith.constant 0 : index
    %235 = vector.load %arg11[%c0_87, %c0_88, %c0_89] : memref<2x32x64xf32, #tpu.memory_space<vmem>>, vector<1x32x64xf32>
    %236 = vector.shape_cast %235 : vector<1x32x64xf32> to vector<32x64xf32>
    %cst_90 = arith.constant dense<0.000000e+00> : vector<30x64xf32>
    %237 = tpu.matmul %234, %236, %cst_90 {dimension_numbers = #tpu.dot_dimension_numbers<[1], [0], [0], [1], [0, 0, 1, 1], [], []>} : vector<30x32xf32>, vector<32x64xf32>, vector<30x64xf32> -> vector<30x64xf32>
    %238 = vector.extract_strided_slice %18 {offsets = [8, 0], sizes = [1, 64], strides = [1, 1]} : vector<12x96xf32> to vector<1x64xf32>
    %239 = vector.broadcast %238 : vector<1x64xf32> to vector<30x64xf32>
    %240 = arith.addf %237, %239 : vector<30x64xf32>
    %cst_91 = arith.constant 0.000000e+00 : f32
    %241 = vector.broadcast %cst_91 : f32 to vector<30x64xf32>
    %242 = arith.maximumf %240, %241 : vector<30x64xf32>
    %c0_92 = arith.constant 0 : index
    %c0_93 = arith.constant 0 : index
    %c0_94 = arith.constant 0 : index
    %243 = vector.load %arg12[%c0_92, %c0_93, %c0_94] : memref<2x64x32xf32, #tpu.memory_space<vmem>>, vector<1x64x32xf32>
    %244 = vector.shape_cast %243 : vector<1x64x32xf32> to vector<64x32xf32>
    %cst_95 = arith.constant dense<0.000000e+00> : vector<30x32xf32>
    %245 = tpu.matmul %242, %244, %cst_95 {dimension_numbers = #tpu.dot_dimension_numbers<[1], [0], [0], [1], [0, 0, 1, 1], [], []>} : vector<30x64xf32>, vector<64x32xf32>, vector<30x32xf32> -> vector<30x32xf32>
    %246 = vector.extract_strided_slice %18 {offsets = [9, 0], sizes = [1, 32], strides = [1, 1]} : vector<12x96xf32> to vector<1x32xf32>
    %247 = vector.broadcast %246 : vector<1x32xf32> to vector<30x32xf32>
    %248 = arith.addf %245, %247 : vector<30x32xf32>
    %249 = arith.addf %234, %248 : vector<30x32xf32>
    %250 = vector.extract_strided_slice %18 {offsets = [10, 0], sizes = [1, 32], strides = [1, 1]} : vector<12x96xf32> to vector<1x32xf32>
    %251 = vector.extract_strided_slice %18 {offsets = [11, 0], sizes = [1, 32], strides = [1, 1]} : vector<12x96xf32> to vector<1x32xf32>
    %cst_96 = arith.constant dense<0.000000e+00> : vector<30xf32>
    %252 = vector.multi_reduction <add>, %249, %cst_96 [1] : vector<30x32xf32> to vector<30xf32>
    %253 = vector.shape_cast %252 : vector<30xf32> to vector<30x1xf32>
    %cst_97 = arith.constant 3.200000e+01 : f32
    %254 = vector.broadcast %cst_97 : f32 to vector<30x1xf32>
    %255 = arith.divf %253, %254 : vector<30x1xf32>
    %256 = vector.broadcast %255 : vector<30x1xf32> to vector<30x32xf32>
    %257 = arith.subf %249, %256 : vector<30x32xf32>
    %258 = arith.mulf %257, %257 : vector<30x32xf32>
    %cst_98 = arith.constant dense<0.000000e+00> : vector<30xf32>
    %259 = vector.multi_reduction <add>, %258, %cst_98 [1] : vector<30x32xf32> to vector<30xf32>
    %260 = vector.shape_cast %259 : vector<30xf32> to vector<30x1xf32>
    %cst_99 = arith.constant 3.200000e+01 : f32
    %261 = vector.broadcast %cst_99 : f32 to vector<30x1xf32>
    %262 = arith.divf %260, %261 : vector<30x1xf32>
    %cst_100 = arith.constant 9.99999974E-6 : f32
    %263 = vector.broadcast %cst_100 : f32 to vector<30x1xf32>
    %264 = arith.addf %262, %263 : vector<30x1xf32>
    %265 = math.rsqrt %264 : vector<30x1xf32>
    %266 = vector.broadcast %265 : vector<30x1xf32> to vector<30x32xf32>
    %267 = arith.mulf %257, %266 : vector<30x32xf32>
    %268 = vector.broadcast %250 : vector<1x32xf32> to vector<30x32xf32>
    %269 = arith.mulf %267, %268 : vector<30x32xf32>
    %270 = vector.broadcast %251 : vector<1x32xf32> to vector<30x32xf32>
    %271 = arith.addf %269, %270 : vector<30x32xf32>
    %c1_101 = arith.constant 1 : index
    %c0_102 = arith.constant 0 : index
    %c0_103 = arith.constant 0 : index
    %272 = vector.load %arg13[%c1_101, %c0_102, %c0_103] : memref<2x12x96xf32, #tpu.memory_space<vmem>>, vector<1x12x96xf32>
    %273 = vector.shape_cast %272 : vector<1x12x96xf32> to vector<12x96xf32>
    %c1_104 = arith.constant 1 : index
    %c0_105 = arith.constant 0 : index
    %c0_106 = arith.constant 0 : index
    %274 = vector.load %arg7[%c1_104, %c0_105, %c0_106] : memref<2x32x96xf32, #tpu.memory_space<vmem>>, vector<1x32x96xf32>
    %275 = vector.shape_cast %274 : vector<1x32x96xf32> to vector<32x96xf32>
    %276 = vector.extract_strided_slice %273 {offsets = [0, 0], sizes = [1, 96], strides = [1, 1]} : vector<12x96xf32> to vector<1x96xf32>
    %c1_107 = arith.constant 1 : index
    %c0_108 = arith.constant 0 : index
    %c0_109 = arith.constant 0 : index
    %277 = vector.load %arg8[%c1_107, %c0_108, %c0_109] : memref<2x32x32xf32, #tpu.memory_space<vmem>>, vector<1x32x32xf32>
    %278 = vector.shape_cast %277 : vector<1x32x32xf32> to vector<32x32xf32>
    %279 = vector.extract_strided_slice %273 {offsets = [1, 0], sizes = [1, 32], strides = [1, 1]} : vector<12x96xf32> to vector<1x32xf32>
    %cst_110 = arith.constant dense<0.000000e+00> : vector<30x96xf32>
    %280 = tpu.matmul %271, %275, %cst_110 {dimension_numbers = #tpu.dot_dimension_numbers<[1], [0], [0], [1], [0, 0, 1, 1], [], []>} : vector<30x32xf32>, vector<32x96xf32>, vector<30x96xf32> -> vector<30x96xf32>
    %281 = vector.broadcast %276 : vector<1x96xf32> to vector<30x96xf32>
    %282 = arith.addf %280, %281 : vector<30x96xf32>
    %283 = vector.extract_strided_slice %282 {offsets = [0, 0], sizes = [30, 8], strides = [1, 1]} : vector<30x96xf32> to vector<30x8xf32>
    %284 = vector.extract_strided_slice %282 {offsets = [0, 32], sizes = [30, 8], strides = [1, 1]} : vector<30x96xf32> to vector<30x8xf32>
    %285 = vector.extract_strided_slice %282 {offsets = [0, 64], sizes = [30, 8], strides = [1, 1]} : vector<30x96xf32> to vector<30x8xf32>
    %cst_111 = arith.constant dense<0.000000e+00> : vector<30x30xf32>
    %286 = tpu.matmul %283, %284, %cst_111 {dimension_numbers = #tpu.dot_dimension_numbers<[1], [1], [0], [0], [0, 0, 1, 0], [], []>} : vector<30x8xf32>, vector<30x8xf32>, vector<30x30xf32> -> vector<30x30xf32>
    %cst_112 = arith.constant 0.353553385 : f32
    %287 = vector.broadcast %cst_112 : f32 to vector<30x30xf32>
    %288 = arith.mulf %286, %287 : vector<30x30xf32>
    %289 = arith.addf %288, %4 : vector<30x30xf32>
    %cst_113 = arith.constant dense<0xFF800000> : vector<30xf32>
    %290 = vector.multi_reduction <maximumf>, %289, %cst_113 [1] : vector<30x30xf32> to vector<30xf32>
    %291 = vector.shape_cast %290 : vector<30xf32> to vector<30x1xf32>
    %cst_114 = arith.constant 0.000000e+00 : f32
    %292 = vector.broadcast %cst_114 : f32 to vector<30x1xf32>
    %293 = arith.maximumf %291, %292 : vector<30x1xf32>
    %294 = vector.broadcast %293 : vector<30x1xf32> to vector<30x30xf32>
    %295 = arith.subf %289, %294 : vector<30x30xf32>
    %296 = math.exp %295 : vector<30x30xf32>
    %cst_115 = arith.constant dense<0.000000e+00> : vector<30xf32>
    %297 = vector.multi_reduction <add>, %296, %cst_115 [1] : vector<30x30xf32> to vector<30xf32>
    %298 = vector.shape_cast %297 : vector<30xf32> to vector<30x1xf32>
    %cst_116 = arith.constant 0.000000e+00 : f32
    %299 = vector.broadcast %cst_116 : f32 to vector<30x1xf32>
    %300 = arith.subf %299, %293 : vector<30x1xf32>
    %301 = math.exp %300 : vector<30x1xf32>
    %302 = arith.addf %298, %301 : vector<30x1xf32>
    %303 = tpu.reciprocal %302 {approx = true} : vector<30x1xf32> -> vector<30x1xf32>
    %304 = vector.broadcast %303 : vector<30x1xf32> to vector<30x30xf32>
    %305 = arith.mulf %296, %304 : vector<30x30xf32>
    %cst_117 = arith.constant dense<0.000000e+00> : vector<30x8xf32>
    %306 = tpu.matmul %305, %285, %cst_117 {dimension_numbers = #tpu.dot_dimension_numbers<[1], [0], [0], [1], [0, 0, 1, 1], [], []>} : vector<30x30xf32>, vector<30x8xf32>, vector<30x8xf32> -> vector<30x8xf32>
    %307 = vector.extract_strided_slice %282 {offsets = [0, 8], sizes = [30, 8], strides = [1, 1]} : vector<30x96xf32> to vector<30x8xf32>
    %308 = vector.extract_strided_slice %282 {offsets = [0, 40], sizes = [30, 8], strides = [1, 1]} : vector<30x96xf32> to vector<30x8xf32>
    %309 = vector.extract_strided_slice %282 {offsets = [0, 72], sizes = [30, 8], strides = [1, 1]} : vector<30x96xf32> to vector<30x8xf32>
    %cst_118 = arith.constant dense<0.000000e+00> : vector<30x30xf32>
    %310 = tpu.matmul %307, %308, %cst_118 {dimension_numbers = #tpu.dot_dimension_numbers<[1], [1], [0], [0], [0, 0, 1, 0], [], []>} : vector<30x8xf32>, vector<30x8xf32>, vector<30x30xf32> -> vector<30x30xf32>
    %cst_119 = arith.constant 0.353553385 : f32
    %311 = vector.broadcast %cst_119 : f32 to vector<30x30xf32>
    %312 = arith.mulf %310, %311 : vector<30x30xf32>
    %313 = arith.addf %312, %4 : vector<30x30xf32>
    %cst_120 = arith.constant dense<0xFF800000> : vector<30xf32>
    %314 = vector.multi_reduction <maximumf>, %313, %cst_120 [1] : vector<30x30xf32> to vector<30xf32>
    %315 = vector.shape_cast %314 : vector<30xf32> to vector<30x1xf32>
    %cst_121 = arith.constant 0.000000e+00 : f32
    %316 = vector.broadcast %cst_121 : f32 to vector<30x1xf32>
    %317 = arith.maximumf %315, %316 : vector<30x1xf32>
    %318 = vector.broadcast %317 : vector<30x1xf32> to vector<30x30xf32>
    %319 = arith.subf %313, %318 : vector<30x30xf32>
    %320 = math.exp %319 : vector<30x30xf32>
    %cst_122 = arith.constant dense<0.000000e+00> : vector<30xf32>
    %321 = vector.multi_reduction <add>, %320, %cst_122 [1] : vector<30x30xf32> to vector<30xf32>
    %322 = vector.shape_cast %321 : vector<30xf32> to vector<30x1xf32>
    %cst_123 = arith.constant 0.000000e+00 : f32
    %323 = vector.broadcast %cst_123 : f32 to vector<30x1xf32>
    %324 = arith.subf %323, %317 : vector<30x1xf32>
    %325 = math.exp %324 : vector<30x1xf32>
    %326 = arith.addf %322, %325 : vector<30x1xf32>
    %327 = tpu.reciprocal %326 {approx = true} : vector<30x1xf32> -> vector<30x1xf32>
    %328 = vector.broadcast %327 : vector<30x1xf32> to vector<30x30xf32>
    %329 = arith.mulf %320, %328 : vector<30x30xf32>
    %cst_124 = arith.constant dense<0.000000e+00> : vector<30x8xf32>
    %330 = tpu.matmul %329, %309, %cst_124 {dimension_numbers = #tpu.dot_dimension_numbers<[1], [0], [0], [1], [0, 0, 1, 1], [], []>} : vector<30x30xf32>, vector<30x8xf32>, vector<30x8xf32> -> vector<30x8xf32>
    %331 = vector.extract_strided_slice %282 {offsets = [0, 16], sizes = [30, 8], strides = [1, 1]} : vector<30x96xf32> to vector<30x8xf32>
    %332 = vector.extract_strided_slice %282 {offsets = [0, 48], sizes = [30, 8], strides = [1, 1]} : vector<30x96xf32> to vector<30x8xf32>
    %333 = vector.extract_strided_slice %282 {offsets = [0, 80], sizes = [30, 8], strides = [1, 1]} : vector<30x96xf32> to vector<30x8xf32>
    %cst_125 = arith.constant dense<0.000000e+00> : vector<30x30xf32>
    %334 = tpu.matmul %331, %332, %cst_125 {dimension_numbers = #tpu.dot_dimension_numbers<[1], [1], [0], [0], [0, 0, 1, 0], [], []>} : vector<30x8xf32>, vector<30x8xf32>, vector<30x30xf32> -> vector<30x30xf32>
    %cst_126 = arith.constant 0.353553385 : f32
    %335 = vector.broadcast %cst_126 : f32 to vector<30x30xf32>
    %336 = arith.mulf %334, %335 : vector<30x30xf32>
    %337 = arith.addf %336, %4 : vector<30x30xf32>
    %cst_127 = arith.constant dense<0xFF800000> : vector<30xf32>
    %338 = vector.multi_reduction <maximumf>, %337, %cst_127 [1] : vector<30x30xf32> to vector<30xf32>
    %339 = vector.shape_cast %338 : vector<30xf32> to vector<30x1xf32>
    %cst_128 = arith.constant 0.000000e+00 : f32
    %340 = vector.broadcast %cst_128 : f32 to vector<30x1xf32>
    %341 = arith.maximumf %339, %340 : vector<30x1xf32>
    %342 = vector.broadcast %341 : vector<30x1xf32> to vector<30x30xf32>
    %343 = arith.subf %337, %342 : vector<30x30xf32>
    %344 = math.exp %343 : vector<30x30xf32>
    %cst_129 = arith.constant dense<0.000000e+00> : vector<30xf32>
    %345 = vector.multi_reduction <add>, %344, %cst_129 [1] : vector<30x30xf32> to vector<30xf32>
    %346 = vector.shape_cast %345 : vector<30xf32> to vector<30x1xf32>
    %cst_130 = arith.constant 0.000000e+00 : f32
    %347 = vector.broadcast %cst_130 : f32 to vector<30x1xf32>
    %348 = arith.subf %347, %341 : vector<30x1xf32>
    %349 = math.exp %348 : vector<30x1xf32>
    %350 = arith.addf %346, %349 : vector<30x1xf32>
    %351 = tpu.reciprocal %350 {approx = true} : vector<30x1xf32> -> vector<30x1xf32>
    %352 = vector.broadcast %351 : vector<30x1xf32> to vector<30x30xf32>
    %353 = arith.mulf %344, %352 : vector<30x30xf32>
    %cst_131 = arith.constant dense<0.000000e+00> : vector<30x8xf32>
    %354 = tpu.matmul %353, %333, %cst_131 {dimension_numbers = #tpu.dot_dimension_numbers<[1], [0], [0], [1], [0, 0, 1, 1], [], []>} : vector<30x30xf32>, vector<30x8xf32>, vector<30x8xf32> -> vector<30x8xf32>
    %355 = vector.extract_strided_slice %282 {offsets = [0, 24], sizes = [30, 8], strides = [1, 1]} : vector<30x96xf32> to vector<30x8xf32>
    %356 = vector.extract_strided_slice %282 {offsets = [0, 56], sizes = [30, 8], strides = [1, 1]} : vector<30x96xf32> to vector<30x8xf32>
    %357 = vector.extract_strided_slice %282 {offsets = [0, 88], sizes = [30, 8], strides = [1, 1]} : vector<30x96xf32> to vector<30x8xf32>
    %cst_132 = arith.constant dense<0.000000e+00> : vector<30x30xf32>
    %358 = tpu.matmul %355, %356, %cst_132 {dimension_numbers = #tpu.dot_dimension_numbers<[1], [1], [0], [0], [0, 0, 1, 0], [], []>} : vector<30x8xf32>, vector<30x8xf32>, vector<30x30xf32> -> vector<30x30xf32>
    %cst_133 = arith.constant 0.353553385 : f32
    %359 = vector.broadcast %cst_133 : f32 to vector<30x30xf32>
    %360 = arith.mulf %358, %359 : vector<30x30xf32>
    %361 = arith.addf %360, %4 : vector<30x30xf32>
    %cst_134 = arith.constant dense<0xFF800000> : vector<30xf32>
    %362 = vector.multi_reduction <maximumf>, %361, %cst_134 [1] : vector<30x30xf32> to vector<30xf32>
    %363 = vector.shape_cast %362 : vector<30xf32> to vector<30x1xf32>
    %cst_135 = arith.constant 0.000000e+00 : f32
    %364 = vector.broadcast %cst_135 : f32 to vector<30x1xf32>
    %365 = arith.maximumf %363, %364 : vector<30x1xf32>
    %366 = vector.broadcast %365 : vector<30x1xf32> to vector<30x30xf32>
    %367 = arith.subf %361, %366 : vector<30x30xf32>
    %368 = math.exp %367 : vector<30x30xf32>
    %cst_136 = arith.constant dense<0.000000e+00> : vector<30xf32>
    %369 = vector.multi_reduction <add>, %368, %cst_136 [1] : vector<30x30xf32> to vector<30xf32>
    %370 = vector.shape_cast %369 : vector<30xf32> to vector<30x1xf32>
    %cst_137 = arith.constant 0.000000e+00 : f32
    %371 = vector.broadcast %cst_137 : f32 to vector<30x1xf32>
    %372 = arith.subf %371, %365 : vector<30x1xf32>
    %373 = math.exp %372 : vector<30x1xf32>
    %374 = arith.addf %370, %373 : vector<30x1xf32>
    %375 = tpu.reciprocal %374 {approx = true} : vector<30x1xf32> -> vector<30x1xf32>
    %376 = vector.broadcast %375 : vector<30x1xf32> to vector<30x30xf32>
    %377 = arith.mulf %368, %376 : vector<30x30xf32>
    %cst_138 = arith.constant dense<0.000000e+00> : vector<30x8xf32>
    %378 = tpu.matmul %377, %357, %cst_138 {dimension_numbers = #tpu.dot_dimension_numbers<[1], [0], [0], [1], [0, 0, 1, 1], [], []>} : vector<30x30xf32>, vector<30x8xf32>, vector<30x8xf32> -> vector<30x8xf32>
    %379 = tpu.concatenate %306, %330, %354, %378 in 1 : vector<30x8xf32>, vector<30x8xf32>, vector<30x8xf32>, vector<30x8xf32> -> vector<30x32xf32>
    %cst_139 = arith.constant dense<0.000000e+00> : vector<30x32xf32>
    %380 = tpu.matmul %379, %278, %cst_139 {dimension_numbers = #tpu.dot_dimension_numbers<[1], [0], [0], [1], [0, 0, 1, 1], [], []>} : vector<30x32xf32>, vector<32x32xf32>, vector<30x32xf32> -> vector<30x32xf32>
    %381 = vector.broadcast %279 : vector<1x32xf32> to vector<30x32xf32>
    %382 = arith.addf %380, %381 : vector<30x32xf32>
    %383 = arith.addf %271, %382 : vector<30x32xf32>
    %384 = vector.extract_strided_slice %273 {offsets = [2, 0], sizes = [1, 32], strides = [1, 1]} : vector<12x96xf32> to vector<1x32xf32>
    %385 = vector.extract_strided_slice %273 {offsets = [3, 0], sizes = [1, 32], strides = [1, 1]} : vector<12x96xf32> to vector<1x32xf32>
    %cst_140 = arith.constant dense<0.000000e+00> : vector<30xf32>
    %386 = vector.multi_reduction <add>, %383, %cst_140 [1] : vector<30x32xf32> to vector<30xf32>
    %387 = vector.shape_cast %386 : vector<30xf32> to vector<30x1xf32>
    %cst_141 = arith.constant 3.200000e+01 : f32
    %388 = vector.broadcast %cst_141 : f32 to vector<30x1xf32>
    %389 = arith.divf %387, %388 : vector<30x1xf32>
    %390 = vector.broadcast %389 : vector<30x1xf32> to vector<30x32xf32>
    %391 = arith.subf %383, %390 : vector<30x32xf32>
    %392 = arith.mulf %391, %391 : vector<30x32xf32>
    %cst_142 = arith.constant dense<0.000000e+00> : vector<30xf32>
    %393 = vector.multi_reduction <add>, %392, %cst_142 [1] : vector<30x32xf32> to vector<30xf32>
    %394 = vector.shape_cast %393 : vector<30xf32> to vector<30x1xf32>
    %cst_143 = arith.constant 3.200000e+01 : f32
    %395 = vector.broadcast %cst_143 : f32 to vector<30x1xf32>
    %396 = arith.divf %394, %395 : vector<30x1xf32>
    %cst_144 = arith.constant 9.99999974E-6 : f32
    %397 = vector.broadcast %cst_144 : f32 to vector<30x1xf32>
    %398 = arith.addf %396, %397 : vector<30x1xf32>
    %399 = math.rsqrt %398 : vector<30x1xf32>
    %400 = vector.broadcast %399 : vector<30x1xf32> to vector<30x32xf32>
    %401 = arith.mulf %391, %400 : vector<30x32xf32>
    %402 = vector.broadcast %384 : vector<1x32xf32> to vector<30x32xf32>
    %403 = arith.mulf %401, %402 : vector<30x32xf32>
    %404 = vector.broadcast %385 : vector<1x32xf32> to vector<30x32xf32>
    %405 = arith.addf %403, %404 : vector<30x32xf32>
    %c1_145 = arith.constant 1 : index
    %c0_146 = arith.constant 0 : index
    %c0_147 = arith.constant 0 : index
    %406 = vector.load %arg9[%c1_145, %c0_146, %c0_147] : memref<2x32x96xf32, #tpu.memory_space<vmem>>, vector<1x32x96xf32>
    %407 = vector.shape_cast %406 : vector<1x32x96xf32> to vector<32x96xf32>
    %408 = vector.extract_strided_slice %273 {offsets = [4, 0], sizes = [1, 96], strides = [1, 1]} : vector<12x96xf32> to vector<1x96xf32>
    %c1_148 = arith.constant 1 : index
    %c0_149 = arith.constant 0 : index
    %c0_150 = arith.constant 0 : index
    %409 = vector.load %arg10[%c1_148, %c0_149, %c0_150] : memref<2x32x32xf32, #tpu.memory_space<vmem>>, vector<1x32x32xf32>
    %410 = vector.shape_cast %409 : vector<1x32x32xf32> to vector<32x32xf32>
    %411 = vector.extract_strided_slice %273 {offsets = [5, 0], sizes = [1, 32], strides = [1, 1]} : vector<12x96xf32> to vector<1x32xf32>
    %cst_151 = arith.constant dense<0.000000e+00> : vector<30x96xf32>
    %412 = tpu.matmul %405, %407, %cst_151 {dimension_numbers = #tpu.dot_dimension_numbers<[1], [0], [0], [1], [0, 0, 1, 1], [], []>} : vector<30x32xf32>, vector<32x96xf32>, vector<30x96xf32> -> vector<30x96xf32>
    %413 = vector.broadcast %408 : vector<1x96xf32> to vector<30x96xf32>
    %414 = arith.addf %412, %413 : vector<30x96xf32>
    %415 = vector.extract_strided_slice %414 {offsets = [0, 0], sizes = [30, 16], strides = [1, 1]} : vector<30x96xf32> to vector<30x16xf32>
    %416 = vector.extract_strided_slice %414 {offsets = [0, 32], sizes = [30, 16], strides = [1, 1]} : vector<30x96xf32> to vector<30x16xf32>
    %417 = vector.extract_strided_slice %414 {offsets = [0, 64], sizes = [30, 16], strides = [1, 1]} : vector<30x96xf32> to vector<30x16xf32>
    %cst_152 = arith.constant dense<0.000000e+00> : vector<30x30xf32>
    %418 = tpu.matmul %415, %416, %cst_152 {dimension_numbers = #tpu.dot_dimension_numbers<[1], [1], [0], [0], [0, 0, 1, 0], [], []>} : vector<30x16xf32>, vector<30x16xf32>, vector<30x30xf32> -> vector<30x30xf32>
    %cst_153 = arith.constant 2.500000e-01 : f32
    %419 = vector.broadcast %cst_153 : f32 to vector<30x30xf32>
    %420 = arith.mulf %418, %419 : vector<30x30xf32>
    %421 = arith.addf %420, %6 : vector<30x30xf32>
    %cst_154 = arith.constant dense<0xFF800000> : vector<30xf32>
    %422 = vector.multi_reduction <maximumf>, %421, %cst_154 [1] : vector<30x30xf32> to vector<30xf32>
    %423 = vector.shape_cast %422 : vector<30xf32> to vector<30x1xf32>
    %cst_155 = arith.constant 0.000000e+00 : f32
    %424 = vector.broadcast %cst_155 : f32 to vector<30x1xf32>
    %425 = arith.maximumf %423, %424 : vector<30x1xf32>
    %426 = vector.broadcast %425 : vector<30x1xf32> to vector<30x30xf32>
    %427 = arith.subf %421, %426 : vector<30x30xf32>
    %428 = math.exp %427 : vector<30x30xf32>
    %cst_156 = arith.constant dense<0.000000e+00> : vector<30xf32>
    %429 = vector.multi_reduction <add>, %428, %cst_156 [1] : vector<30x30xf32> to vector<30xf32>
    %430 = vector.shape_cast %429 : vector<30xf32> to vector<30x1xf32>
    %cst_157 = arith.constant 0.000000e+00 : f32
    %431 = vector.broadcast %cst_157 : f32 to vector<30x1xf32>
    %432 = arith.subf %431, %425 : vector<30x1xf32>
    %433 = math.exp %432 : vector<30x1xf32>
    %434 = arith.addf %430, %433 : vector<30x1xf32>
    %435 = tpu.reciprocal %434 {approx = true} : vector<30x1xf32> -> vector<30x1xf32>
    %436 = vector.broadcast %435 : vector<30x1xf32> to vector<30x30xf32>
    %437 = arith.mulf %428, %436 : vector<30x30xf32>
    %cst_158 = arith.constant dense<0.000000e+00> : vector<30x16xf32>
    %438 = tpu.matmul %437, %417, %cst_158 {dimension_numbers = #tpu.dot_dimension_numbers<[1], [0], [0], [1], [0, 0, 1, 1], [], []>} : vector<30x30xf32>, vector<30x16xf32>, vector<30x16xf32> -> vector<30x16xf32>
    %439 = vector.extract_strided_slice %414 {offsets = [0, 16], sizes = [30, 16], strides = [1, 1]} : vector<30x96xf32> to vector<30x16xf32>
    %440 = vector.extract_strided_slice %414 {offsets = [0, 48], sizes = [30, 16], strides = [1, 1]} : vector<30x96xf32> to vector<30x16xf32>
    %441 = vector.extract_strided_slice %414 {offsets = [0, 80], sizes = [30, 16], strides = [1, 1]} : vector<30x96xf32> to vector<30x16xf32>
    %cst_159 = arith.constant dense<0.000000e+00> : vector<30x30xf32>
    %442 = tpu.matmul %439, %440, %cst_159 {dimension_numbers = #tpu.dot_dimension_numbers<[1], [1], [0], [0], [0, 0, 1, 0], [], []>} : vector<30x16xf32>, vector<30x16xf32>, vector<30x30xf32> -> vector<30x30xf32>
    %cst_160 = arith.constant 2.500000e-01 : f32
    %443 = vector.broadcast %cst_160 : f32 to vector<30x30xf32>
    %444 = arith.mulf %442, %443 : vector<30x30xf32>
    %445 = arith.addf %444, %6 : vector<30x30xf32>
    %cst_161 = arith.constant dense<0xFF800000> : vector<30xf32>
    %446 = vector.multi_reduction <maximumf>, %445, %cst_161 [1] : vector<30x30xf32> to vector<30xf32>
    %447 = vector.shape_cast %446 : vector<30xf32> to vector<30x1xf32>
    %cst_162 = arith.constant 0.000000e+00 : f32
    %448 = vector.broadcast %cst_162 : f32 to vector<30x1xf32>
    %449 = arith.maximumf %447, %448 : vector<30x1xf32>
    %450 = vector.broadcast %449 : vector<30x1xf32> to vector<30x30xf32>
    %451 = arith.subf %445, %450 : vector<30x30xf32>
    %452 = math.exp %451 : vector<30x30xf32>
    %cst_163 = arith.constant dense<0.000000e+00> : vector<30xf32>
    %453 = vector.multi_reduction <add>, %452, %cst_163 [1] : vector<30x30xf32> to vector<30xf32>
    %454 = vector.shape_cast %453 : vector<30xf32> to vector<30x1xf32>
    %cst_164 = arith.constant 0.000000e+00 : f32
    %455 = vector.broadcast %cst_164 : f32 to vector<30x1xf32>
    %456 = arith.subf %455, %449 : vector<30x1xf32>
    %457 = math.exp %456 : vector<30x1xf32>
    %458 = arith.addf %454, %457 : vector<30x1xf32>
    %459 = tpu.reciprocal %458 {approx = true} : vector<30x1xf32> -> vector<30x1xf32>
    %460 = vector.broadcast %459 : vector<30x1xf32> to vector<30x30xf32>
    %461 = arith.mulf %452, %460 : vector<30x30xf32>
    %cst_165 = arith.constant dense<0.000000e+00> : vector<30x16xf32>
    %462 = tpu.matmul %461, %441, %cst_165 {dimension_numbers = #tpu.dot_dimension_numbers<[1], [0], [0], [1], [0, 0, 1, 1], [], []>} : vector<30x30xf32>, vector<30x16xf32>, vector<30x16xf32> -> vector<30x16xf32>
    %463 = tpu.concatenate %438, %462 in 1 : vector<30x16xf32>, vector<30x16xf32> -> vector<30x32xf32>
    %cst_166 = arith.constant dense<0.000000e+00> : vector<30x32xf32>
    %464 = tpu.matmul %463, %410, %cst_166 {dimension_numbers = #tpu.dot_dimension_numbers<[1], [0], [0], [1], [0, 0, 1, 1], [], []>} : vector<30x32xf32>, vector<32x32xf32>, vector<30x32xf32> -> vector<30x32xf32>
    %465 = vector.broadcast %411 : vector<1x32xf32> to vector<30x32xf32>
    %466 = arith.addf %464, %465 : vector<30x32xf32>
    %467 = arith.addf %405, %466 : vector<30x32xf32>
    %468 = vector.extract_strided_slice %273 {offsets = [6, 0], sizes = [1, 32], strides = [1, 1]} : vector<12x96xf32> to vector<1x32xf32>
    %469 = vector.extract_strided_slice %273 {offsets = [7, 0], sizes = [1, 32], strides = [1, 1]} : vector<12x96xf32> to vector<1x32xf32>
    %cst_167 = arith.constant dense<0.000000e+00> : vector<30xf32>
    %470 = vector.multi_reduction <add>, %467, %cst_167 [1] : vector<30x32xf32> to vector<30xf32>
    %471 = vector.shape_cast %470 : vector<30xf32> to vector<30x1xf32>
    %cst_168 = arith.constant 3.200000e+01 : f32
    %472 = vector.broadcast %cst_168 : f32 to vector<30x1xf32>
    %473 = arith.divf %471, %472 : vector<30x1xf32>
    %474 = vector.broadcast %473 : vector<30x1xf32> to vector<30x32xf32>
    %475 = arith.subf %467, %474 : vector<30x32xf32>
    %476 = arith.mulf %475, %475 : vector<30x32xf32>
    %cst_169 = arith.constant dense<0.000000e+00> : vector<30xf32>
    %477 = vector.multi_reduction <add>, %476, %cst_169 [1] : vector<30x32xf32> to vector<30xf32>
    %478 = vector.shape_cast %477 : vector<30xf32> to vector<30x1xf32>
    %cst_170 = arith.constant 3.200000e+01 : f32
    %479 = vector.broadcast %cst_170 : f32 to vector<30x1xf32>
    %480 = arith.divf %478, %479 : vector<30x1xf32>
    %cst_171 = arith.constant 9.99999974E-6 : f32
    %481 = vector.broadcast %cst_171 : f32 to vector<30x1xf32>
    %482 = arith.addf %480, %481 : vector<30x1xf32>
    %483 = math.rsqrt %482 : vector<30x1xf32>
    %484 = vector.broadcast %483 : vector<30x1xf32> to vector<30x32xf32>
    %485 = arith.mulf %475, %484 : vector<30x32xf32>
    %486 = vector.broadcast %468 : vector<1x32xf32> to vector<30x32xf32>
    %487 = arith.mulf %485, %486 : vector<30x32xf32>
    %488 = vector.broadcast %469 : vector<1x32xf32> to vector<30x32xf32>
    %489 = arith.addf %487, %488 : vector<30x32xf32>
    %c1_172 = arith.constant 1 : index
    %c0_173 = arith.constant 0 : index
    %c0_174 = arith.constant 0 : index
    %490 = vector.load %arg11[%c1_172, %c0_173, %c0_174] : memref<2x32x64xf32, #tpu.memory_space<vmem>>, vector<1x32x64xf32>
    %491 = vector.shape_cast %490 : vector<1x32x64xf32> to vector<32x64xf32>
    %cst_175 = arith.constant dense<0.000000e+00> : vector<30x64xf32>
    %492 = tpu.matmul %489, %491, %cst_175 {dimension_numbers = #tpu.dot_dimension_numbers<[1], [0], [0], [1], [0, 0, 1, 1], [], []>} : vector<30x32xf32>, vector<32x64xf32>, vector<30x64xf32> -> vector<30x64xf32>
    %493 = vector.extract_strided_slice %273 {offsets = [8, 0], sizes = [1, 64], strides = [1, 1]} : vector<12x96xf32> to vector<1x64xf32>
    %494 = vector.broadcast %493 : vector<1x64xf32> to vector<30x64xf32>
    %495 = arith.addf %492, %494 : vector<30x64xf32>
    %cst_176 = arith.constant 0.000000e+00 : f32
    %496 = vector.broadcast %cst_176 : f32 to vector<30x64xf32>
    %497 = arith.maximumf %495, %496 : vector<30x64xf32>
    %c1_177 = arith.constant 1 : index
    %c0_178 = arith.constant 0 : index
    %c0_179 = arith.constant 0 : index
    %498 = vector.load %arg12[%c1_177, %c0_178, %c0_179] : memref<2x64x32xf32, #tpu.memory_space<vmem>>, vector<1x64x32xf32>
    %499 = vector.shape_cast %498 : vector<1x64x32xf32> to vector<64x32xf32>
    %cst_180 = arith.constant dense<0.000000e+00> : vector<30x32xf32>
    %500 = tpu.matmul %497, %499, %cst_180 {dimension_numbers = #tpu.dot_dimension_numbers<[1], [0], [0], [1], [0, 0, 1, 1], [], []>} : vector<30x64xf32>, vector<64x32xf32>, vector<30x32xf32> -> vector<30x32xf32>
    %501 = vector.extract_strided_slice %273 {offsets = [9, 0], sizes = [1, 32], strides = [1, 1]} : vector<12x96xf32> to vector<1x32xf32>
    %502 = vector.broadcast %501 : vector<1x32xf32> to vector<30x32xf32>
    %503 = arith.addf %500, %502 : vector<30x32xf32>
    %504 = arith.addf %489, %503 : vector<30x32xf32>
    %505 = vector.extract_strided_slice %273 {offsets = [10, 0], sizes = [1, 32], strides = [1, 1]} : vector<12x96xf32> to vector<1x32xf32>
    %506 = vector.extract_strided_slice %273 {offsets = [11, 0], sizes = [1, 32], strides = [1, 1]} : vector<12x96xf32> to vector<1x32xf32>
    %cst_181 = arith.constant dense<0.000000e+00> : vector<30xf32>
    %507 = vector.multi_reduction <add>, %504, %cst_181 [1] : vector<30x32xf32> to vector<30xf32>
    %508 = vector.shape_cast %507 : vector<30xf32> to vector<30x1xf32>
    %cst_182 = arith.constant 3.200000e+01 : f32
    %509 = vector.broadcast %cst_182 : f32 to vector<30x1xf32>
    %510 = arith.divf %508, %509 : vector<30x1xf32>
    %511 = vector.broadcast %510 : vector<30x1xf32> to vector<30x32xf32>
    %512 = arith.subf %504, %511 : vector<30x32xf32>
    %513 = arith.mulf %512, %512 : vector<30x32xf32>
    %cst_183 = arith.constant dense<0.000000e+00> : vector<30xf32>
    %514 = vector.multi_reduction <add>, %513, %cst_183 [1] : vector<30x32xf32> to vector<30xf32>
    %515 = vector.shape_cast %514 : vector<30xf32> to vector<30x1xf32>
    %cst_184 = arith.constant 3.200000e+01 : f32
    %516 = vector.broadcast %cst_184 : f32 to vector<30x1xf32>
    %517 = arith.divf %515, %516 : vector<30x1xf32>
    %cst_185 = arith.constant 9.99999974E-6 : f32
    %518 = vector.broadcast %cst_185 : f32 to vector<30x1xf32>
    %519 = arith.addf %517, %518 : vector<30x1xf32>
    %520 = math.rsqrt %519 : vector<30x1xf32>
    %521 = vector.broadcast %520 : vector<30x1xf32> to vector<30x32xf32>
    %522 = arith.mulf %512, %521 : vector<30x32xf32>
    %523 = vector.broadcast %505 : vector<1x32xf32> to vector<30x32xf32>
    %524 = arith.mulf %522, %523 : vector<30x32xf32>
    %525 = vector.broadcast %506 : vector<1x32xf32> to vector<30x32xf32>
    %526 = arith.addf %524, %525 : vector<30x32xf32>
    %c0_186 = arith.constant 0 : index
    %c0_187 = arith.constant 0 : index
    %527 = vector.load %arg14[%c0_186, %c0_187] : memref<32x72xf32, #tpu.memory_space<vmem>>, vector<32x72xf32>
    %cst_188 = arith.constant dense<0.000000e+00> : vector<30x72xf32>
    %528 = tpu.matmul %526, %527, %cst_188 {dimension_numbers = #tpu.dot_dimension_numbers<[1], [0], [0], [1], [0, 0, 1, 1], [], []>} : vector<30x32xf32>, vector<32x72xf32>, vector<30x72xf32> -> vector<30x72xf32>
    %529 = vector.broadcast %2 : vector<1x72xf32> to vector<30x72xf32>
    %530 = arith.addf %528, %529 : vector<30x72xf32>
    %531 = tpu.iota {dimensions = array<i32: 0>} : vector<4x4xi32>
    %532 = tpu.iota {dimensions = array<i32: 1>} : vector<4x4xi32>
    %533 = arith.cmpi sge, %531, %532 : vector<4x4xi32>
    %534 = arith.extui %533 : vector<4x4xi1> to vector<4x4xi32>
    %535 = arith.sitofp %534 : vector<4x4xi32> to vector<4x4xf32>
    %536 = vector.extract_strided_slice %530 {offsets = [6, 0], sizes = [4, 72], strides = [1, 1]} : vector<30x72xf32> to vector<4x72xf32>
    %c0_189 = arith.constant 0 : index
    %c5 = arith.constant 5 : index
    %c0_190 = arith.constant 0 : index
    %537 = vector.load %arg1[%c0_189, %c5, %c0_190] : memref<1x30x72xf32, #tpu.memory_space<vmem>>, vector<1x1x72xf32>
    %538 = vector.shape_cast %537 : vector<1x1x72xf32> to vector<1x72xf32>
    %539 = arith.subf %538, %0 : vector<1x72xf32>
    %540 = arith.divf %539, %1 : vector<1x72xf32>
    %cst_191 = arith.constant dense<0.000000e+00> : vector<4x72xf32>
    %541 = tpu.matmul %535, %536, %cst_191 {dimension_numbers = #tpu.dot_dimension_numbers<[1], [0], [0], [1], [0, 0, 1, 1], [], []>} : vector<4x4xf32>, vector<4x72xf32>, vector<4x72xf32> -> vector<4x72xf32>
    %542 = vector.broadcast %540 : vector<1x72xf32> to vector<4x72xf32>
    %543 = arith.addf %542, %541 : vector<4x72xf32>
    %544 = vector.extract_strided_slice %530 {offsets = [16, 0], sizes = [4, 72], strides = [1, 1]} : vector<30x72xf32> to vector<4x72xf32>
    %c0_192 = arith.constant 0 : index
    %c15 = arith.constant 15 : index
    %c0_193 = arith.constant 0 : index
    %545 = vector.load %arg1[%c0_192, %c15, %c0_193] : memref<1x30x72xf32, #tpu.memory_space<vmem>>, vector<1x1x72xf32>
    %546 = vector.shape_cast %545 : vector<1x1x72xf32> to vector<1x72xf32>
    %547 = arith.subf %546, %0 : vector<1x72xf32>
    %548 = arith.divf %547, %1 : vector<1x72xf32>
    %cst_194 = arith.constant dense<0.000000e+00> : vector<4x72xf32>
    %549 = tpu.matmul %535, %544, %cst_194 {dimension_numbers = #tpu.dot_dimension_numbers<[1], [0], [0], [1], [0, 0, 1, 1], [], []>} : vector<4x4xf32>, vector<4x72xf32>, vector<4x72xf32> -> vector<4x72xf32>
    %550 = vector.broadcast %548 : vector<1x72xf32> to vector<4x72xf32>
    %551 = arith.addf %550, %549 : vector<4x72xf32>
    %552 = vector.extract_strided_slice %530 {offsets = [26, 0], sizes = [4, 72], strides = [1, 1]} : vector<30x72xf32> to vector<4x72xf32>
    %c0_195 = arith.constant 0 : index
    %c25 = arith.constant 25 : index
    %c0_196 = arith.constant 0 : index
    %553 = vector.load %arg1[%c0_195, %c25, %c0_196] : memref<1x30x72xf32, #tpu.memory_space<vmem>>, vector<1x1x72xf32>
    %554 = vector.shape_cast %553 : vector<1x1x72xf32> to vector<1x72xf32>
    %555 = arith.subf %554, %0 : vector<1x72xf32>
    %556 = arith.divf %555, %1 : vector<1x72xf32>
    %cst_197 = arith.constant dense<0.000000e+00> : vector<4x72xf32>
    %557 = tpu.matmul %535, %552, %cst_197 {dimension_numbers = #tpu.dot_dimension_numbers<[1], [0], [0], [1], [0, 0, 1, 1], [], []>} : vector<4x4xf32>, vector<4x72xf32>, vector<4x72xf32> -> vector<4x72xf32>
    %558 = vector.broadcast %556 : vector<1x72xf32> to vector<4x72xf32>
    %559 = arith.addf %558, %557 : vector<4x72xf32>
    %560 = tpu.concatenate %543, %551, %559 in 0 : vector<4x72xf32>, vector<4x72xf32>, vector<4x72xf32> -> vector<12x72xf32>
    %561 = vector.broadcast %1 : vector<1x72xf32> to vector<12x72xf32>
    %562 = arith.mulf %560, %561 : vector<12x72xf32>
    %563 = vector.broadcast %0 : vector<1x72xf32> to vector<12x72xf32>
    %564 = arith.addf %562, %563 : vector<12x72xf32>
    %cst_198 = arith.constant 0.000000e+00 : f32
    %565 = vector.broadcast %cst_198 : f32 to vector<12x56xf32>
    %566 = tpu.concatenate %564, %565 in 1 : vector<12x72xf32>, vector<12x56xf32> -> vector<12x128xf32>
    %c0_199 = arith.constant 0 : index
    %c0_200 = arith.constant 0 : index
    %c0_201 = arith.constant 0 : index
    %567 = vector.load %arg15[%c0_199, %c0_200, %c0_201] : memref<1x12x128xf32, #tpu.memory_space<vmem>>, vector<1x12x128xf32>
    %568 = vector.shape_cast %567 : vector<1x12x128xf32> to vector<12x128xf32>
    %569 = vector.shape_cast %566 : vector<12x128xf32> to vector<1x12x128xf32>
    tpu.vector_store %arg15[%c0_199, %c0_200, %c0_201], %569 {strides = array<i32>} : memref<1x12x128xf32, #tpu.memory_space<vmem>>, vector<1x12x128xf32>,
    return
  }
  func.func @transform_0(%arg0: i32) -> (i32, i32, i32) {
    %c0_i32 = arith.constant 0 : i32
    %c0_i32_0 = arith.constant 0 : i32
    %c0_i32_1 = arith.constant 0 : i32
    return %arg0, %c0_i32, %c0_i32_0 : i32, i32, i32
  }
  func.func @transform_1(%arg0: i32) -> (i32, i32, i32) {
    %c0_i32 = arith.constant 0 : i32
    %c0_i32_0 = arith.constant 0 : i32
    %c0_i32_1 = arith.constant 0 : i32
    return %arg0, %c0_i32, %c0_i32_0 : i32, i32, i32
  }
  func.func @transform_2(%arg0: i32) -> (i32, i32, i32) {
    %c0_i32 = arith.constant 0 : i32
    %c0_i32_0 = arith.constant 0 : i32
    %c0_i32_1 = arith.constant 0 : i32
    return %arg0, %c0_i32, %c0_i32_0 : i32, i32, i32
  }
  func.func @transform_3(%arg0: i32) -> (i32, i32) {
    %c0_i32 = arith.constant 0 : i32
    %c0_i32_0 = arith.constant 0 : i32
    %c0_i32_1 = arith.constant 0 : i32
    return %c0_i32, %c0_i32_0 : i32, i32
  }
  func.func @transform_4(%arg0: i32) -> (i32, i32) {
    %c0_i32 = arith.constant 0 : i32
    %c0_i32_0 = arith.constant 0 : i32
    %c0_i32_1 = arith.constant 0 : i32
    return %c0_i32, %c0_i32_0 : i32, i32
  }
  func.func @transform_5(%arg0: i32) -> (i32, i32) {
    %c0_i32 = arith.constant 0 : i32
    %c0_i32_0 = arith.constant 0 : i32
    %c0_i32_1 = arith.constant 0 : i32
    return %c0_i32, %c0_i32_0 : i32, i32
  }
  func.func @transform_6(%arg0: i32) -> (i32, i32, i32) {
    %c0_i32 = arith.constant 0 : i32
    %c0_i32_0 = arith.constant 0 : i32
    %c0_i32_1 = arith.constant 0 : i32
    %c0_i32_2 = arith.constant 0 : i32
    return %c0_i32, %c0_i32_0, %c0_i32_1 : i32, i32, i32
  }
  func.func @transform_7(%arg0: i32) -> (i32, i32, i32) {
    %c0_i32 = arith.constant 0 : i32
    %c0_i32_0 = arith.constant 0 : i32
    %c0_i32_1 = arith.constant 0 : i32
    %c0_i32_2 = arith.constant 0 : i32
    return %c0_i32, %c0_i32_0, %c0_i32_1 : i32, i32, i32
  }
  func.func @transform_8(%arg0: i32) -> (i32, i32, i32) {
    %c0_i32 = arith.constant 0 : i32
    %c0_i32_0 = arith.constant 0 : i32
    %c0_i32_1 = arith.constant 0 : i32
    %c0_i32_2 = arith.constant 0 : i32
    return %c0_i32, %c0_i32_0, %c0_i32_1 : i32, i32, i32
  }
  func.func @transform_9(%arg0: i32) -> (i32, i32, i32) {
    %c0_i32 = arith.constant 0 : i32
    %c0_i32_0 = arith.constant 0 : i32
    %c0_i32_1 = arith.constant 0 : i32
    %c0_i32_2 = arith.constant 0 : i32
    return %c0_i32, %c0_i32_0, %c0_i32_1 : i32, i32, i32
  }
  func.func @transform_10(%arg0: i32) -> (i32, i32, i32) {
    %c0_i32 = arith.constant 0 : i32
    %c0_i32_0 = arith.constant 0 : i32
    %c0_i32_1 = arith.constant 0 : i32
    %c0_i32_2 = arith.constant 0 : i32
    return %c0_i32, %c0_i32_0, %c0_i32_1 : i32, i32, i32
  }
  func.func @transform_11(%arg0: i32) -> (i32, i32, i32) {
    %c0_i32 = arith.constant 0 : i32
    %c0_i32_0 = arith.constant 0 : i32
    %c0_i32_1 = arith.constant 0 : i32
    %c0_i32_2 = arith.constant 0 : i32
    return %c0_i32, %c0_i32_0, %c0_i32_1 : i32, i32, i32
  }
  func.func @transform_12(%arg0: i32) -> (i32, i32, i32) {
    %c0_i32 = arith.constant 0 : i32
    %c0_i32_0 = arith.constant 0 : i32
    %c0_i32_1 = arith.constant 0 : i32
    %c0_i32_2 = arith.constant 0 : i32
    return %c0_i32, %c0_i32_0, %c0_i32_1 : i32, i32, i32
  }
  func.func @transform_13(%arg0: i32) -> (i32, i32) {
    %c0_i32 = arith.constant 0 : i32
    %c0_i32_0 = arith.constant 0 : i32
    %c0_i32_1 = arith.constant 0 : i32
    return %c0_i32, %c0_i32_0 : i32, i32
  }
  func.func @transform_14(%arg0: i32) -> (i32, i32, i32) {
    %c0_i32 = arith.constant 0 : i32
    %c0_i32_0 = arith.constant 0 : i32
    %c0_i32_1 = arith.constant 0 : i32
    return %arg0, %c0_i32, %c0_i32_0 : i32, i32, i32
  }
}

</mosaic_0001>

<llo_original>
// kernel: tile.9
$region0: #{tile.9}
  %s0 = inlined_call_operand.vmem [shape: f32[3,10,32], index: 0, kind: input, shape index: {}]
  %s1 = inlined_call_operand.vmem [shape: f32[30,32], index: 1, kind: output, shape index: {}]
  %v2 = vld [vmem:[%s0] sm:$0xff]
  %vm3 = vcmask 261120
  %4 = vst.msk [vmem:[%s1] sm:$0xff] %vm3, %v2
  %s5 = scalar_lea.vmem %s0, 8
  %v6 = vld [vmem:[%s5] sm:$0x3]
  %vm7 = vcmask 261120
  %s8 = scalar_lea.vmem %s1, 8
  %9 = vst.msk [vmem:[%s8] sm:$0x3] %vm7, %v6
  %s10 = scalar_lea.vmem %s0, 16
  %v11 = vld [vmem:[%s10] sm:$0xff]
  %vm12 = vcmask 261120
  %s13 = scalar_lea.vmem %s1, 10
  %14 = vst.msk [vmem:[%s13] sm:$0xff] %vm12, %v11
  %s15 = scalar_lea.vmem %s0, 24
  %v16 = vld [vmem:[%s15] sm:$0x3]
  %vm17 = vcmask 261120
  %s18 = scalar_lea.vmem %s1, 18
  %19 = vst.msk [vmem:[%s18] sm:$0x3] %vm17, %v16
  %s20 = scalar_lea.vmem %s0, 32
  %v21 = vld [vmem:[%s20] sm:$0xff]
  %vm22 = vcmask 261120
  %s23 = scalar_lea.vmem %s1, 20
  %24 = vst.msk [vmem:[%s23] sm:$0xff] %vm22, %v21
  %s25 = scalar_lea.vmem %s0, 40
  %v26 = vld [vmem:[%s25] sm:$0x3]
  %vm27 = vcmask 261120
  %s28 = scalar_lea.vmem %s1, 28
  %29 = vst.msk [vmem:[%s28] sm:$0x3] %vm27, %v26

// kernel: motion_transformer_forward.1
$region0: #{motion_transformer_forward.1}
  #allocation0 [shape = 'u32[]', space=smem, size = 0x4, offset = 0x4, fixed_abs, tag = 'smem constant byte address 0x4 - core index']
  #allocation1 [shape = 'u32[72,128]{1,0:T(1,128)}', space=vmem, size = 0x9000, scoped, tag = 'internal scratch']
  %s0 = inlined_call_operand.vmem [shape: f32[2,30,72], index: 0, kind: input, shape index: {}]
  %s1 = inlined_call_operand.vmem [shape: f32[2,30,30], index: 1, kind: input, shape index: {}]
  %s2 = inlined_call_operand.vmem [shape: f32[2,30,30], index: 2, kind: input, shape index: {}]
  %s3 = inlined_call_operand.vmem [shape: f32[3,72], index: 3, kind: input, shape index: {}]
  %s4 = inlined_call_operand.vmem [shape: f32[72,32], index: 4, kind: input, shape index: {}]
  %s5 = inlined_call_operand.vmem [shape: f32[30,32], index: 5, kind: input, shape index: {}]
  %s6 = inlined_call_operand.vmem [shape: f32[2,32,96], index: 6, kind: input, shape index: {}]
  %s7 = inlined_call_operand.vmem [shape: f32[2,32,32], index: 7, kind: input, shape index: {}]
  %s8 = inlined_call_operand.vmem [shape: f32[2,32,96], index: 8, kind: input, shape index: {}]
  %s9 = inlined_call_operand.vmem [shape: f32[2,32,32], index: 9, kind: input, shape index: {}]
  %s10 = inlined_call_operand.vmem [shape: f32[2,32,64], index: 10, kind: input, shape index: {}]
  %s11 = inlined_call_operand.vmem [shape: f32[2,64,32], index: 11, kind: input, shape index: {}]
  %s12 = inlined_call_operand.vmem [shape: f32[2,12,96], index: 12, kind: input, shape index: {}]
  %s13 = inlined_call_operand.vmem [shape: f32[32,72], index: 13, kind: input, shape index: {}]
  %s14 = inlined_call_operand.vmem [shape: f32[2,12,128], index: 14, kind: output, shape index: {}]
  %s15 = sld [smem:[#allocation0]]
  $region89: #{motion_transformer_forward.1} parent=0
    _
  %s17 = ssub.s32 1, %s15
  %s18 = scalar_select 0, %s17, %s15
  loop: start=0, step=1, limit=4
  $region2: #{motion_transformer_forward.1} parent=0 // loop_pre_header
    _
  $region3: #{motion_transformer_forward.1} parent=0 // loop_header
    %s20 = sphi 0, %s24
    %p21 = scmp.ge.s32.totalorder %s20, 4
    %s30 = sphi 0, %s32
    %s33 = sphi 0, %s30
    %s34 = sphi 0, %s33
    %s50 = sphi 0, %s34
    %s56 = sphi 0, %s58
    %s59 = sphi 0, %s56
    %s60 = sphi 0, %s59
    %s76 = sphi 0, %s60
    %s82 = sphi 0, %s84
    %s85 = sphi 0, %s82
    %s86 = sphi 0, %s85
    %s102 = sphi 0, %s86
    %s106 = sphi 0, %s106
    %s108 = sphi 0, %s106
    %s109 = sphi 0, %s108
    %s123 = sphi 0, %s109
    %s127 = sphi 0, %s127
    %s129 = sphi 0, %s127
    %s130 = sphi 0, %s129
    %s144 = sphi 0, %s130
    %s148 = sphi 0, %s148
    %s150 = sphi 0, %s148
    %s151 = sphi 0, %s150
    %s165 = sphi 0, %s151
    %s169 = sphi 0, %s169
    %s171 = sphi 0, %s169
    %s172 = sphi 0, %s171
    %s186 = sphi 0, %s172
    %s190 = sphi 0, %s190
    %s192 = sphi 0, %s190
    %s193 = sphi 0, %s192
    %s207 = sphi 0, %s193
    %s211 = sphi 0, %s211
    %s213 = sphi 0, %s211
    %s214 = sphi 0, %s213
    %s228 = sphi 0, %s214
    %s232 = sphi 0, %s232
    %s234 = sphi 0, %s232
    %s235 = sphi 0, %s234
    %s249 = sphi 0, %s235
    %s253 = sphi 0, %s253
    %s255 = sphi 0, %s253
    %s256 = sphi 0, %s255
    %s270 = sphi 0, %s256
    %s274 = sphi 0, %s274
    %s276 = sphi 0, %s274
    %s277 = sphi 0, %s276
    %s291 = sphi 0, %s277
    %s295 = sphi 0, %s295
    %s297 = sphi 0, %s295
    %s298 = sphi 0, %s297
    %s312 = sphi 0, %s298
    %s316 = sphi 0, %s316
    %s318 = sphi 0, %s316
    %s319 = sphi 0, %s318
    %s333 = sphi 0, %s319
    %s339 = sphi 0, %s341
    %s342 = sphi 0, %s339
    %s343 = sphi 0, %s342
    %s359 = sphi 0, %s343
  $region4: #{motion_transformer_forward.1} parent=0 // loop_header_branch
    %23 = sbr.rel (%p21) target = $region8
  $region5: #{motion_transformer_forward.1} parent=0 // loop_body
    %s25 = ssub.s32 %s20, 1
    %s26 = ssub.s32 %s20, 2
    %s27 = sadd.s32 %s20, 1
    %s28 = ssub.s32 %s20, %s27
    %p29 = scmp.eq.s32.totalorder %s28, 0
    %s31 = sadd.s32 %s30, 1
    %s32 = scalar_select %p29, %s30, %s31
    %p35 = pneg %p29
    %p36 = scmp.eq.s32.totalorder %s20, 1
    %p37 = por %p35, %p36
    %p38 = scmp.ne.s32.totalorder %s30, %s33
    %p39 = scmp.eq.s32.totalorder %s20, 0
    %p40 = por %p38, %p39
    %p41 = scmp.ne.s32.totalorder %s30, %s33
    %p42 = scmp.eq.s32.totalorder %s25, 1
    %p43 = por %p41, %p42
    %p44 = scmp.ne.s32.totalorder %s33, %s34
    %p45 = scmp.eq.s32.totalorder %s25, 0
    %p46 = por %p44, %p45
    %p47 = scmp.ne.s32.totalorder %s33, %s34
    %p48 = scmp.eq.s32.totalorder %s26, 1
    %p49 = por %p47, %p48
    %p51 = scmp.ne.s32.totalorder %s34, %s50
    %p52 = scmp.eq.s32.totalorder %s26, 0
    %p53 = por %p51, %p52
    %s54 = ssub.s32 %s20, %s27
    %p55 = scmp.eq.s32.totalorder %s54, 0
    %s57 = sadd.s32 %s56, 1
    %s58 = scalar_select %p55, %s56, %s57
    %p61 = pneg %p55
    %p62 = scmp.eq.s32.totalorder %s20, 1
    %p63 = por %p61, %p62
    %p64 = scmp.ne.s32.totalorder %s56, %s59
    %p65 = scmp.eq.s32.totalorder %s20, 0
    %p66 = por %p64, %p65
    %p67 = scmp.ne.s32.totalorder %s56, %s59
    %p68 = scmp.eq.s32.totalorder %s25, 1
    %p69 = por %p67, %p68
    %p70 = scmp.ne.s32.totalorder %s59, %s60
    %p71 = scmp.eq.s32.totalorder %s25, 0
    %p72 = por %p70, %p71
    %p73 = scmp.ne.s32.totalorder %s59, %s60
    %p74 = scmp.eq.s32.totalorder %s26, 1
    %p75 = por %p73, %p74
    %p77 = scmp.ne.s32.totalorder %s60, %s76
    %p78 = scmp.eq.s32.totalorder %s26, 0
    %p79 = por %p77, %p78
    %s80 = ssub.s32 %s20, %s27
    %p81 = scmp.eq.s32.totalorder %s80, 0
    %s83 = sadd.s32 %s82, 1
    %s84 = scalar_select %p81, %s82, %s83
    %p87 = pneg %p81
    %p88 = scmp.eq.s32.totalorder %s20, 1
    %p89 = por %p87, %p88
    %p90 = scmp.ne.s32.totalorder %s82, %s85
    %p91 = scmp.eq.s32.totalorder %s20, 0
    %p92 = por %p90, %p91
    %p93 = scmp.ne.s32.totalorder %s82, %s85
    %p94 = scmp.eq.s32.totalorder %s25, 1
    %p95 = por %p93, %p94
    %p96 = scmp.ne.s32.totalorder %s85, %s86
    %p97 = scmp.eq.s32.totalorder %s25, 0
    %p98 = por %p96, %p97
    %p99 = scmp.ne.s32.totalorder %s85, %s86
    %p100 = scmp.eq.s32.totalorder %s26, 1
    %p101 = por %p99, %p100
    %p103 = scmp.ne.s32.totalorder %s86, %s102
    %p104 = scmp.eq.s32.totalorder %s26, 0
    %p105 = por %p103, %p104
    %s107 = sadd.s32 %s106, 1
    %p110 = scmp.eq.s32.totalorder %s20, 1
    %p111 = scmp.ne.s32.totalorder %s106, %s108
    %p112 = scmp.eq.s32.totalorder %s20, 0
    %p113 = por %p111, %p112
    %p114 = scmp.ne.s32.totalorder %s106, %s108
    %p115 = scmp.eq.s32.totalorder %s25, 1
    %p116 = por %p114, %p115
    %p117 = scmp.ne.s32.totalorder %s108, %s109
    %p118 = scmp.eq.s32.totalorder %s25, 0
    %p119 = por %p117, %p118
    %p120 = scmp.ne.s32.totalorder %s108, %s109
    %p121 = scmp.eq.s32.totalorder %s26, 1
    %p122 = por %p120, %p121
    %p124 = scmp.ne.s32.totalorder %s109, %s123
    %p125 = scmp.eq.s32.totalorder %s26, 0
    %p126 = por %p124, %p125
    %s128 = sadd.s32 %s127, 1
    %p131 = scmp.eq.s32.totalorder %s20, 1
    %p132 = scmp.ne.s32.totalorder %s127, %s129
    %p133 = scmp.eq.s32.totalorder %s20, 0
    %p134 = por %p132, %p133
    %p135 = scmp.ne.s32.totalorder %s127, %s129
    %p136 = scmp.eq.s32.totalorder %s25, 1
    %p137 = por %p135, %p136
    %p138 = scmp.ne.s32.totalorder %s129, %s130
    %p139 = scmp.eq.s32.totalorder %s25, 0
    %p140 = por %p138, %p139
    %p141 = scmp.ne.s32.totalorder %s129, %s130
    %p142 = scmp.eq.s32.totalorder %s26, 1
    %p143 = por %p141, %p142
    %p145 = scmp.ne.s32.totalorder %s130, %s144
    %p146 = scmp.eq.s32.totalorder %s26, 0
    %p147 = por %p145, %p146
    %s149 = sadd.s32 %s148, 1
    %p152 = scmp.eq.s32.totalorder %s20, 1
    %p153 = scmp.ne.s32.totalorder %s148, %s150
    %p154 = scmp.eq.s32.totalorder %s20, 0
    %p155 = por %p153, %p154
    %p156 = scmp.ne.s32.totalorder %s148, %s150
    %p157 = scmp.eq.s32.totalorder %s25, 1
    %p158 = por %p156, %p157
    %p159 = scmp.ne.s32.totalorder %s150, %s151
    %p160 = scmp.eq.s32.totalorder %s25, 0
    %p161 = por %p159, %p160
    %p162 = scmp.ne.s32.totalorder %s150, %s151
    %p163 = scmp.eq.s32.totalorder %s26, 1
    %p164 = por %p162, %p163
    %p166 = scmp.ne.s32.totalorder %s151, %s165
    %p167 = scmp.eq.s32.totalorder %s26, 0
    %p168 = por %p166, %p167
    %s170 = sadd.s32 %s169, 1
    %p173 = scmp.eq.s32.totalorder %s20, 1
    %p174 = scmp.ne.s32.totalorder %s169, %s171
    %p175 = scmp.eq.s32.totalorder %s20, 0
    %p176 = por %p174, %p175
    %p177 = scmp.ne.s32.totalorder %s169, %s171
    %p178 = scmp.eq.s32.totalorder %s25, 1
    %p179 = por %p177, %p178
    %p180 = scmp.ne.s32.totalorder %s171, %s172
    %p181 = scmp.eq.s32.totalorder %s25, 0
    %p182 = por %p180, %p181
    %p183 = scmp.ne.s32.totalorder %s171, %s172
    %p184 = scmp.eq.s32.totalorder %s26, 1
    %p185 = por %p183, %p184
    %p187 = scmp.ne.s32.totalorder %s172, %s186
    %p188 = scmp.eq.s32.totalorder %s26, 0
    %p189 = por %p187, %p188
    %s191 = sadd.s32 %s190, 1
    %p194 = scmp.eq.s32.totalorder %s20, 1
    %p195 = scmp.ne.s32.totalorder %s190, %s192
    %p196 = scmp.eq.s32.totalorder %s20, 0
    %p197 = por %p195, %p196
    %p198 = scmp.ne.s32.totalorder %s190, %s192
    %p199 = scmp.eq.s32.totalorder %s25, 1
    %p200 = por %p198, %p199
    %p201 = scmp.ne.s32.totalorder %s192, %s193
    %p202 = scmp.eq.s32.totalorder %s25, 0
    %p203 = por %p201, %p202
    %p204 = scmp.ne.s32.totalorder %s192, %s193
    %p205 = scmp.eq.s32.totalorder %s26, 1
    %p206 = por %p204, %p205
    %p208 = scmp.ne.s32.totalorder %s193, %s207
    %p209 = scmp.eq.s32.totalorder %s26, 0
    %p210 = por %p208, %p209
    %s212 = sadd.s32 %s211, 1
    %p215 = scmp.eq.s32.totalorder %s20, 1
    %p216 = scmp.ne.s32.totalorder %s211, %s213
    %p217 = scmp.eq.s32.totalorder %s20, 0
    %p218 = por %p216, %p217
    %p219 = scmp.ne.s32.totalorder %s211, %s213
    %p220 = scmp.eq.s32.totalorder %s25, 1
    %p221 = por %p219, %p220
    %p222 = scmp.ne.s32.totalorder %s213, %s214
    %p223 = scmp.eq.s32.totalorder %s25, 0
    %p224 = por %p222, %p223
    %p225 = scmp.ne.s32.totalorder %s213, %s214
    %p226 = scmp.eq.s32.totalorder %s26, 1
    %p227 = por %p225, %p226
    %p229 = scmp.ne.s32.totalorder %s214, %s228
    %p230 = scmp.eq.s32.totalorder %s26, 0
    %p231 = por %p229, %p230
    %s233 = sadd.s32 %s232, 1
    %p236 = scmp.eq.s32.totalorder %s20, 1
    %p237 = scmp.ne.s32.totalorder %s232, %s234
    %p238 = scmp.eq.s32.totalorder %s20, 0
    %p239 = por %p237, %p238
    %p240 = scmp.ne.s32.totalorder %s232, %s234
    %p241 = scmp.eq.s32.totalorder %s25, 1
    %p242 = por %p240, %p241
    %p243 = scmp.ne.s32.totalorder %s234, %s235
    %p244 = scmp.eq.s32.totalorder %s25, 0
    %p245 = por %p243, %p244
    %p246 = scmp.ne.s32.totalorder %s234, %s235
    %p247 = scmp.eq.s32.totalorder %s26, 1
    %p248 = por %p246, %p247
    %p250 = scmp.ne.s32.totalorder %s235, %s249
    %p251 = scmp.eq.s32.totalorder %s26, 0
    %p252 = por %p250, %p251
    %s254 = sadd.s32 %s253, 1
    %p257 = scmp.eq.s32.totalorder %s20, 1
    %p258 = scmp.ne.s32.totalorder %s253, %s255
    %p259 = scmp.eq.s32.totalorder %s20, 0
    %p260 = por %p258, %p259
    %p261 = scmp.ne.s32.totalorder %s253, %s255
    %p262 = scmp.eq.s32.totalorder %s25, 1
    %p263 = por %p261, %p262
    %p264 = scmp.ne.s32.totalorder %s255, %s256
    %p265 = scmp.eq.s32.totalorder %s25, 0
    %p266 = por %p264, %p265
    %p267 = scmp.ne.s32.totalorder %s255, %s256
    %p268 = scmp.eq.s32.totalorder %s26, 1
    %p269 = por %p267, %p268
    %p271 = scmp.ne.s32.totalorder %s256, %s270
    %p272 = scmp.eq.s32.totalorder %s26, 0
    %p273 = por %p271, %p272
    %s275 = sadd.s32 %s274, 1
    %p278 = scmp.eq.s32.totalorder %s20, 1
    %p279 = scmp.ne.s32.totalorder %s274, %s276
    %p280 = scmp.eq.s32.totalorder %s20, 0
    %p281 = por %p279, %p280
    %p282 = scmp.ne.s32.totalorder %s274, %s276
    %p283 = scmp.eq.s32.totalorder %s25, 1
    %p284 = por %p282, %p283
    %p285 = scmp.ne.s32.totalorder %s276, %s277
    %p286 = scmp.eq.s32.totalorder %s25, 0
    %p287 = por %p285, %p286
    %p288 = scmp.ne.s32.totalorder %s276, %s277
    %p289 = scmp.eq.s32.totalorder %s26, 1
    %p290 = por %p288, %p289
    %p292 = scmp.ne.s32.totalorder %s277, %s291
    %p293 = scmp.eq.s32.totalorder %s26, 0
    %p294 = por %p292, %p293
    %s296 = sadd.s32 %s295, 1
    %p299 = scmp.eq.s32.totalorder %s20, 1
    %p300 = scmp.ne.s32.totalorder %s295, %s297
    %p301 = scmp.eq.s32.totalorder %s20, 0
    %p302 = por %p300, %p301
    %p303 = scmp.ne.s32.totalorder %s295, %s297
    %p304 = scmp.eq.s32.totalorder %s25, 1
    %p305 = por %p303, %p304
    %p306 = scmp.ne.s32.totalorder %s297, %s298
    %p307 = scmp.eq.s32.totalorder %s25, 0
    %p308 = por %p306, %p307
    %p309 = scmp.ne.s32.totalorder %s297, %s298
    %p310 = scmp.eq.s32.totalorder %s26, 1
    %p311 = por %p309, %p310
    %p313 = scmp.ne.s32.totalorder %s298, %s312
    %p314 = scmp.eq.s32.totalorder %s26, 0
    %p315 = por %p313, %p314
    %s317 = sadd.s32 %s316, 1
    %p320 = scmp.eq.s32.totalorder %s20, 1
    %p321 = scmp.ne.s32.totalorder %s316, %s318
    %p322 = scmp.eq.s32.totalorder %s20, 0
    %p323 = por %p321, %p322
    %p324 = scmp.ne.s32.totalorder %s316, %s318
    %p325 = scmp.eq.s32.totalorder %s25, 1
    %p326 = por %p324, %p325
    %p327 = scmp.ne.s32.totalorder %s318, %s319
    %p328 = scmp.eq.s32.totalorder %s25, 0
    %p329 = por %p327, %p328
    %p330 = scmp.ne.s32.totalorder %s318, %s319
    %p331 = scmp.eq.s32.totalorder %s26, 1
    %p332 = por %p330, %p331
    %p334 = scmp.ne.s32.totalorder %s319, %s333
    %p335 = scmp.eq.s32.totalorder %s26, 0
    %p336 = por %p334, %p335
    %s337 = ssub.s32 %s20, %s27
    %p338 = scmp.eq.s32.totalorder %s337, 0
    %s340 = sadd.s32 %s339, 1
    %s341 = scalar_select %p338, %s339, %s340
    %p344 = pneg %p338
    %p345 = scmp.eq.s32.totalorder %s20, 1
    %p346 = por %p344, %p345
    %p347 = scmp.ne.s32.totalorder %s339, %s342
    %p348 = scmp.eq.s32.totalorder %s20, 0
    %p349 = por %p347, %p348
    %p350 = scmp.ne.s32.totalorder %s339, %s342
    %p351 = scmp.eq.s32.totalorder %s25, 1
    %p352 = por %p350, %p351
    %p353 = scmp.ne.s32.totalorder %s342, %s343
    %p354 = scmp.eq.s32.totalorder %s25, 0
    %p355 = por %p353, %p354
    %p356 = scmp.ne.s32.totalorder %s342, %s343
    %p357 = scmp.eq.s32.totalorder %s26, 1
    %p358 = por %p356, %p357
    %p360 = scmp.ne.s32.totalorder %s343, %s359
    %p361 = scmp.eq.s32.totalorder %s26, 0
    %p362 = por %p360, %p361
    %p363 = scmp.le.s32.totalorder 1, %s20
    %p364 = scmp.lt.s32.totalorder %s20, 3
    %p365 = pnand %p363, %p364
    %p366 = pneg %p365
    // Predicated region
    $region9: #{motion_transformer_forward.1} parent=5 // pred_check
      _
    $region10: #{motion_transformer_forward.1} parent=5 // pred_check_branch
      %368 = sbr.rel (%p365) target = $region12
    $region11: #{motion_transformer_forward.1} parent=5 // pred_region
      %s369 = ssub.s32 %s20, 1
      // Predicated region
      $region13: #{motion_transformer_forward.1} parent=11 // pred_check
        %p370 = pneg %p119
      $region14: #{motion_transformer_forward.1} parent=11 // pred_check_branch
        %372 = sbr.rel (%p370) target = $region16
      $region15: #{motion_transformer_forward.1} parent=11 // pred_region
        _
      $region16: #{motion_transformer_forward.1} parent=11 // pred_fallthru
        _
      // Predicated region
      $region17: #{motion_transformer_forward.1} parent=11 // pred_check
        %p373 = pneg %p140
      $region18: #{motion_transformer_forward.1} parent=11 // pred_check_branch
        %375 = sbr.rel (%p373) target = $region20
      $region19: #{motion_transformer_forward.1} parent=11 // pred_region
        _
      $region20: #{motion_transformer_forward.1} parent=11 // pred_fallthru
        _
      // Predicated region
      $region21: #{motion_transformer_forward.1} parent=11 // pred_check
        %p376 = pneg %p161
      $region22: #{motion_transformer_forward.1} parent=11 // pred_check_branch
        %378 = sbr.rel (%p376) target = $region24
      $region23: #{motion_transformer_forward.1} parent=11 // pred_region
        _
      $region24: #{motion_transformer_forward.1} parent=11 // pred_fallthru
        _
      // Predicated region
      $region25: #{motion_transformer_forward.1} parent=11 // pred_check
        %p379 = pneg %p182
      $region26: #{motion_transformer_forward.1} parent=11 // pred_check_branch
        %381 = sbr.rel (%p379) target = $region28
      $region27: #{motion_transformer_forward.1} parent=11 // pred_region
        _
      $region28: #{motion_transformer_forward.1} parent=11 // pred_fallthru
        _
      // Predicated region
      $region29: #{motion_transformer_forward.1} parent=11 // pred_check
        %p382 = pneg %p203
      $region30: #{motion_transformer_forward.1} parent=11 // pred_check_branch
        %384 = sbr.rel (%p382) target = $region32
      $region31: #{motion_transformer_forward.1} parent=11 // pred_region
        _
      $region32: #{motion_transformer_forward.1} parent=11 // pred_fallthru
        _
      // Predicated region
      $region33: #{motion_transformer_forward.1} parent=11 // pred_check
        %p385 = pneg %p224
      $region34: #{motion_transformer_forward.1} parent=11 // pred_check_branch
        %387 = sbr.rel (%p385) target = $region36
      $region35: #{motion_transformer_forward.1} parent=11 // pred_region
        _
      $region36: #{motion_transformer_forward.1} parent=11 // pred_fallthru
        _
      // Predicated region
      $region37: #{motion_transformer_forward.1} parent=11 // pred_check
        %p388 = pneg %p245
      $region38: #{motion_transformer_forward.1} parent=11 // pred_check_branch
        %390 = sbr.rel (%p388) target = $region40
      $region39: #{motion_transformer_forward.1} parent=11 // pred_region
        _
      $region40: #{motion_transformer_forward.1} parent=11 // pred_fallthru
        _
      // Predicated region
      $region41: #{motion_transformer_forward.1} parent=11 // pred_check
        %p391 = pneg %p266
      $region42: #{motion_transformer_forward.1} parent=11 // pred_check_branch
        %393 = sbr.rel (%p391) target = $region44
      $region43: #{motion_transformer_forward.1} parent=11 // pred_region
        _
      $region44: #{motion_transformer_forward.1} parent=11 // pred_fallthru
        _
      // Predicated region
      $region45: #{motion_transformer_forward.1} parent=11 // pred_check
        %p394 = pneg %p287
      $region46: #{motion_transformer_forward.1} parent=11 // pred_check_branch
        %396 = sbr.rel (%p394) target = $region48
      $region47: #{motion_transformer_forward.1} parent=11 // pred_region
        _
      $region48: #{motion_transformer_forward.1} parent=11 // pred_fallthru
        _
      // Predicated region
      $region49: #{motion_transformer_forward.1} parent=11 // pred_check
        %p397 = pneg %p308
      $region50: #{motion_transformer_forward.1} parent=11 // pred_check_branch
        %399 = sbr.rel (%p397) target = $region52
      $region51: #{motion_transformer_forward.1} parent=11 // pred_region
        _
      $region52: #{motion_transformer_forward.1} parent=11 // pred_fallthru
        _
      // Predicated region
      $region53: #{motion_transformer_forward.1} parent=11 // pred_check
        %p400 = pneg %p329
      $region54: #{motion_transformer_forward.1} parent=11 // pred_check_branch
        %402 = sbr.rel (%p400) target = $region56
      $region55: #{motion_transformer_forward.1} parent=11 // pred_region
        _
      $region56: #{motion_transformer_forward.1} parent=11 // pred_fallthru
        _
    $region12: #{motion_transformer_forward.1} parent=5 // pred_fallthru
      _
    %p403 = scmp.lt.s32.totalorder %s20, 2
    // Predicated region
    $region57: #{motion_transformer_forward.1} parent=5 // pred_check
      %p404 = pneg %p403
    $region58: #{motion_transformer_forward.1} parent=5 // pred_check_branch
      %406 = sbr.rel (%p404) target = $region60
    $region59: #{motion_transformer_forward.1} parent=5 // pred_region
      // Predicated region
      $region61: #{motion_transformer_forward.1} parent=59 // pred_check
        %p407 = pneg %p40
      $region62: #{motion_transformer_forward.1} parent=59 // pred_check_branch
        %409 = sbr.rel (%p407) target = $region64
      $region63: #{motion_transformer_forward.1} parent=59 // pred_region
        %p410 = scmp.lt.s32.totalorder %s20, 1
        %s411 = scalar_select %p410, %s20, 1
        %s412 = smul.addr %s411, 4
        %s413 = smul.addr %s412, 8
        %s414 = scalar_lea.vmem %s0, %s413
      $region64: #{motion_transformer_forward.1} parent=59 // pred_fallthru
        _
      // Predicated region
      $region65: #{motion_transformer_forward.1} parent=59 // pred_check
        %p415 = pneg %p66
      $region66: #{motion_transformer_forward.1} parent=59 // pred_check_branch
        %417 = sbr.rel (%p415) target = $region68
      $region67: #{motion_transformer_forward.1} parent=59 // pred_region
        %p418 = scmp.lt.s32.totalorder %s20, 1
        %s419 = scalar_select %p418, %s20, 1
        %s420 = smul.addr %s419, 4
        %s421 = smul.addr %s420, 8
        %s422 = scalar_lea.vmem %s1, %s421
      $region68: #{motion_transformer_forward.1} parent=59 // pred_fallthru
        _
      // Predicated region
      $region69: #{motion_transformer_forward.1} parent=59 // pred_check
        %p423 = pneg %p92
      $region70: #{motion_transformer_forward.1} parent=59 // pred_check_branch
        %425 = sbr.rel (%p423) target = $region72
      $region71: #{motion_transformer_forward.1} parent=59 // pred_region
        %p426 = scmp.lt.s32.totalorder %s20, 1
        %s427 = scalar_select %p426, %s20, 1
        %s428 = smul.addr %s427, 4
        %s429 = smul.addr %s428, 8
        %s430 = scalar_lea.vmem %s2, %s429
      $region72: #{motion_transformer_forward.1} parent=59 // pred_fallthru
        _
    $region60: #{motion_transformer_forward.1} parent=5 // pred_fallthru
      _
    %p431 = scmp.le.s32.totalorder 1, %s20
    %p432 = scmp.lt.s32.totalorder %s20, 3
    %p433 = pnand %p431, %p432
    %p434 = pneg %p433
    // Predicated region
    $region73: #{motion_transformer_forward.1} parent=5 // pred_check
      _
    $region74: #{motion_transformer_forward.1} parent=5 // pred_check_branch
      %436 = sbr.rel (%p433) target = $region76
    $region75: #{motion_transformer_forward.1} parent=5 // pred_region
      %s437 = ssub.s32 %s20, 1
      %p438 = scmp.lt.s32.totalorder %s25, 1
      %s439 = scalar_select %p438, %s25, 1
      %s440 = smul.addr %s439, 4
      %s441 = smul.addr %s440, 8
      %s442 = scalar_lea.vmem %s0, %s441
      %p443 = pneg %p46
      %p444 = pneg %p43
      %p445 = scmp.lt.s32.totalorder %s25, 1
      %s446 = scalar_select %p445, %s25, 1
      %s447 = smul.addr %s446, 4
      %s448 = smul.addr %s447, 8
      %s449 = scalar_lea.vmem %s1, %s448
      %p450 = pneg %p72
      %p451 = pneg %p69
      %p452 = scmp.lt.s32.totalorder %s25, 1
      %s453 = scalar_select %p452, %s25, 1
      %s454 = smul.addr %s453, 4
      %s455 = smul.addr %s454, 8
      %s456 = scalar_lea.vmem %s2, %s455
      %p457 = pneg %p98
      %p458 = pneg %p95
      %p459 = pneg %p119
      %p460 = pneg %p116
      %p461 = pneg %p140
      %p462 = pneg %p137
      %p463 = pneg %p161
      %p464 = pneg %p158
      %p465 = pneg %p182
      %p466 = pneg %p179
      %p467 = pneg %p203
      %p468 = pneg %p200
      %p469 = pneg %p224
      %p470 = pneg %p221
      %p471 = pneg %p245
      %p472 = pneg %p242
      %p473 = pneg %p266
      %p474 = pneg %p263
      %p475 = pneg %p287
      %p476 = pneg %p284
      %p477 = pneg %p308
      %p478 = pneg %p305
      %p479 = pneg %p329
      %p480 = pneg %p326
      %p481 = pneg %p355
      %p482 = pneg %p352
      %p483 = scmp.lt.s32.totalorder %s25, 1
      %s484 = scalar_select %p483, %s25, 1
      %s485 = smul.addr %s484, 2
      %s486 = smul.addr %s485, 8
      %s487 = scalar_lea.vmem %s14, %s486
      %p488 = scmp.lt.s32.totalorder %s25, 1
      %s489 = scalar_select %p488, %s25, 1
      %s490 = smul.addr %s489, 4
      %s491 = smul.addr %s490, 8
      %s492 = scalar_lea.vmem %s0, %s491
      %p493 = scmp.lt.s32.totalorder %s25, 1
      %s494 = scalar_select %p493, %s25, 1
      %s495 = smul.addr %s494, 4
      %s496 = smul.addr %s495, 8
      %s497 = scalar_lea.vmem %s1, %s496
      %p498 = scmp.lt.s32.totalorder %s25, 1
      %s499 = scalar_select %p498, %s25, 1
      %s500 = smul.addr %s499, 4
      %s501 = smul.addr %s500, 8
      %s502 = scalar_lea.vmem %s2, %s501
      %p503 = scmp.lt.s32.totalorder %s25, 1
      %s504 = scalar_select %p503, %s25, 1
      %s505 = smul.addr %s504, 2
      %s506 = smul.addr %s505, 8
      %s507 = scalar_lea.vmem %s14, %s506
      %v508 = vld [vmem:[%s3] sm:$0x1]
      %v509 = vld [vmem:[%s3 + $0x1] sm:$0x1]
      %v510 = vld [vmem:[%s3 + $0x2] sm:$0x1]
      %v511 = vld [vmem:[%s497] sm:$0xff]
      %v512 = vld [vmem:[%s497 + $0x8] sm:$0xff]
      %v513 = vld [vmem:[%s497 + $0x10] sm:$0xff]
      %v514 = vld [vmem:[%s497 + $0x18] sm:$0x3f]
      %v515 = vld [vmem:[%s502] sm:$0xff]
      %v516 = vld [vmem:[%s502 + $0x8] sm:$0xff]
      %v517 = vld [vmem:[%s502 + $0x10] sm:$0xff]
      %v518 = vld [vmem:[%s502 + $0x18] sm:$0x3f]
      %v519 = vld [vmem:[%s492] sm:$0xff]
      %v520 = vld [vmem:[%s492 + $0x8] sm:$0xff]
      %v521 = vld [vmem:[%s492 + $0x10] sm:$0xff]
      %v522 = vld [vmem:[%s492 + $0x18] sm:$0x3f]
      %v523 = vperm.slane %v508, 0
      %v524 = vsub.f32 %v519, %v523
      %v525 = vsub.f32 %v520, %v523
      %v526 = vsub.f32 %v521, %v523
      %v527 = vsub.f32 %v522, %v523
      %v528 = vperm.slane %v509, 0
      %v529 = vrcp.pop %v528
      %v530 = vmul.f32 %v528, %v529
      %v531 = vsub.f32 1.0, %v530
      %v532 = vmul.f32 %v529, %v531
      %v533 = vadd.f32 %v529, %v532
      %vm534 = vweird.f32 %v528
      %vm535 = vweird.f32 %v529
      %vm536 = vmor %vm534, %vm535
      %v537 = vsel %vm536, %v529, %v533
      %v538 = vand.u32 2147483647, %v528
      %vm539 = vcmp.eq.f32.partialorder %v538, 8.507059e+37
      %v540 = vand.u32 %v528, 2147483648
      %v541 = vor.u32 1.1754944e-38, %v540
      %v542 = vsel %vm539, %v541, %v537
      %v543 = vmul.f32 %v524, %v542
      %v544 = vmul.f32 %v525, %v542
      %v545 = vmul.f32 %v526, %v542
      %v546 = vmul.f32 %v527, %v542
      %v547 = vld [vmem:[%s4] sm:$0xff]
      %v548 = vld [vmem:[%s4 + $0x8] sm:$0xff]
      %v549 = vld [vmem:[%s4 + $0x10] sm:$0xff]
      %v550 = vld [vmem:[%s4 + $0x18] sm:$0xff]
      %v551 = vld [vmem:[%s4 + $0x20] sm:$0xff]
      %v552 = vld [vmem:[%s4 + $0x28] sm:$0xff]
      %v553 = vld [vmem:[%s4 + $0x30] sm:$0xff]
      %v554 = vld [vmem:[%s4 + $0x38] sm:$0xff]
      %v555 = vld [vmem:[%s4 + $0x40] sm:$0xff]
      %v556 = vld [vmem:[%s5] sm:$0xff]
      %v557 = vld [vmem:[%s5 + $0x8] sm:$0xff]
      %v558 = vld [vmem:[%s5 + $0x10] sm:$0xff]
      %v559 = vld [vmem:[%s5 + $0x18] sm:$0x3f]
      %vm560 = vcmask 588800
      %v562 = vsel %vm560, %v543, 0
      %v565 = vsel %vm560, %v544, 0
      %v568 = vsel %vm560, %v545, 0
      %v571 = vsel %vm560, %v546, 0
      %573 = vmatpush.msra.mxu0 0.0
      %574 = vmatpush.msra.mxu0 0.0
      %575 = vmatpush.msra.mxu0 0.0
      %576 = vmatpush.msra.mxu0 0.0
      %577 = vmatpush.msra.mxu0 0.0
      %578 = vmatpush.msra.mxu0 0.0
      %579 = vmatpush.msra.mxu0 0.0
      %580 = vmatpush.msra.mxu0 %v555
      %581 = vmatpush.msra.mxu0 %v554
      %582 = vmatpush.msra.mxu0 %v553
      %583 = vmatpush.msra.mxu0 %v552
      %584 = vmatpush.msra.mxu0 %v551
      %585 = vmatpush.msra.mxu0 %v550
      %586 = vmatpush.msra.mxu0 %v549
      %587 = vmatpush.msra.mxu0 %v548
      %588 = vmatpush.msra.mxu0 %v547
      %589 = vmatmul.f32.gmra.mxu0 %v562
      %v590 = vpop.f32.mrf.mxu0
      %v591 = vadd.f32 %v556, %v590
      %592 = vmatmul.f32.gmra.mxu0 %v565
      %v593 = vpop.f32.mrf.mxu0
      %v594 = vadd.f32 %v557, %v593
      %595 = vmatmul.f32.gmra.mxu0 %v568
      %v596 = vpop.f32.mrf.mxu0
      %v597 = vadd.f32 %v558, %v596
      %598 = vmatmul.f32.gmra.mxu0 %v571
      %v599 = vpop.f32.mrf.mxu0
      %v600 = vadd.f32 %v559, %v599
      %601 = vdwg.mxu0
      %v602 = vld [vmem:[%s12] sm:$0xff]
      %v603 = vld [vmem:[%s12 + $0x8] sm:$0xf]
      %v604 = vld [vmem:[%s6] sm:$0xff]
      %v605 = vld [vmem:[%s6 + $0x8] sm:$0xff]
      %v606 = vld [vmem:[%s6 + $0x10] sm:$0xff]
      %v607 = vld [vmem:[%s6 + $0x18] sm:$0xff]
      %v608 = vld [vmem:[%s7] sm:$0xff]
      %v609 = vld [vmem:[%s7 + $0x8] sm:$0xff]
      %v610 = vld [vmem:[%s7 + $0x10] sm:$0xff]
      %v611 = vld [vmem:[%s7 + $0x18] sm:$0xff]
      %v612 = vperm.slane %v602, 0
      %vm613 = vcmask 261120
      %v615 = vsel %vm613, %v591, 0
      %v618 = vsel %vm613, %v594, 0
      %v621 = vsel %vm613, %v597, 0
      %v624 = vsel %vm613, %v600, 0
      %626 = vmatpush.msra.mxu0 0.0
      %627 = vmatpush.msra.mxu0 0.0
      %628 = vmatpush.msra.mxu0 0.0
      %629 = vmatpush.msra.mxu0 0.0
      %630 = vmatpush.msra.mxu0 0.0
      %631 = vmatpush.msra.mxu0 0.0
      %632 = vmatpush.msra.mxu0 0.0
      %633 = vmatpush.msra.mxu0 0.0
      %634 = vmatpush.msra.mxu0 0.0
      %635 = vmatpush.msra.mxu0 0.0
      %636 = vmatpush.msra.mxu0 0.0
      %637 = vmatpush.msra.mxu0 0.0
      %638 = vmatpush.msra.mxu0 %v607
      %639 = vmatpush.msra.mxu0 %v606
      %640 = vmatpush.msra.mxu0 %v605
      %641 = vmatpush.msra.mxu0 %v604
      %642 = vmatmul.f32.gmra.mxu0 %v615
      %v643 = vpop.f32.mrf.mxu0
      %v644 = vadd.f32 %v612, %v643
      %645 = vmatmul.f32.gmra.mxu0 %v618
      %v646 = vpop.f32.mrf.mxu0
      %v647 = vadd.f32 %v612, %v646
      %648 = vmatmul.f32.gmra.mxu0 %v621
      %v649 = vpop.f32.mrf.mxu0
      %v650 = vadd.f32 %v612, %v649
      %651 = vmatmul.f32.gmra.mxu0 %v624
      %v652 = vpop.f32.mrf.mxu0
      %v653 = vadd.f32 %v612, %v652
      %654 = vdwg.mxu0
      %659 = vrot.lane.b32.xlu0 %v644, 96
      %v660 = vpop.permute.xlu0 %659
      %661 = vrot.lane.b32.xlu0 %v647, 96
      %v662 = vpop.permute.xlu0 %661
      %663 = vrot.lane.b32.xlu0 %v650, 96
      %v664 = vpop.permute.xlu0 %663
      %665 = vrot.lane.b32.xlu0 %v653, 96
      %v666 = vpop.permute.xlu0 %665
      %vm667 = vcmask 64512
      %v668 = vsel %vm667, %v644, 0
      %v670 = vsel %vm667, %v647, 0
      %v672 = vsel %vm667, %v650, 0
      %v674 = vsel %vm667, %v653, 0
      %v676 = vsel %vm667, %v660, 0
      %v678 = vsel %vm667, %v662, 0
      %v680 = vsel %vm667, %v664, 0
      %v682 = vsel %vm667, %v666, 0
      %684 = vmatpush.xpose.msra.mxu0 0.0
      %685 = vmatpush.xpose.msra.mxu0 0.0
      %686 = vmatpush.xpose.msra.mxu0 0.0
      %687 = vmatpush.xpose.msra.mxu0 0.0
      %688 = vmatpush.xpose.msra.mxu0 0.0
      %689 = vmatpush.xpose.msra.mxu0 0.0
      %690 = vmatpush.xpose.msra.mxu0 0.0
      %691 = vmatpush.xpose.msra.mxu0 0.0
      %692 = vmatpush.xpose.msra.mxu0 0.0
      %693 = vmatpush.xpose.msra.mxu0 0.0
      %694 = vmatpush.xpose.msra.mxu0 0.0
      %695 = vmatpush.xpose.msra.mxu0 0.0
      %696 = vmatpush.xpose.msra.mxu0 %v682
      %697 = vmatpush.xpose.msra.mxu0 %v680
      %698 = vmatpush.xpose.msra.mxu0 %v678
      %699 = vmatpush.xpose.msra.mxu0 %v676
      %700 = vmatmul.f32.gmra.mxu0 %v668
      %v701 = vpop.f32.mrf.mxu0
      %v702 = vadd.f32 0.0, %v701
      %703 = vmatmul.f32.gmra.mxu0 %v670
      %v704 = vpop.f32.mrf.mxu0
      %v705 = vadd.f32 0.0, %v704
      %706 = vmatmul.f32.gmra.mxu0 %v672
      %v707 = vpop.f32.mrf.mxu0
      %v708 = vadd.f32 0.0, %v707
      %709 = vmatmul.f32.gmra.mxu0 %v674
      %v710 = vpop.f32.mrf.mxu0
      %v711 = vadd.f32 0.0, %v710
      %712 = vdwg.mxu0
      %v713 = vmul.f32 %v702, 0.35355338
      %v714 = vmul.f32 %v705, 0.35355338
      %v715 = vmul.f32 %v708, 0.35355338
      %v716 = vmul.f32 %v711, 0.35355338
      %v717 = vadd.f32 %v713, %v511
      %v718 = vadd.f32 %v714, %v512
      %v719 = vadd.f32 %v715, %v513
      %v720 = vadd.f32 %v716, %v514
      %vm721 = vcmask 244736
      %v722 = vsel %vm721, %v717, -inf
      %723 = vmax.xlane.f32.xlu0 %v722
      %v724 = vpop.xlane.xlu0 %723
      %v725 = vsel %vm721, %v718, -inf
      %726 = vmax.xlane.f32.xlu0 %v725
      %v727 = vpop.xlane.xlu0 %726
      %v728 = vsel %vm721, %v719, -inf
      %729 = vmax.xlane.f32.xlu0 %v728
      %v730 = vpop.xlane.xlu0 %729
      %vm731 = vcmask 242688
      %v732 = vsel %vm731, %v720, -inf
      %733 = vmax.xlane.f32.xlu0 %v732
      %v734 = vpop.xlane.xlu0 %733
      %v735 = vmax.f32 %v724, 0.0
      %v736 = vmax.f32 %v727, 0.0
      %v737 = vmax.f32 %v730, 0.0
      %v738 = vmax.f32 %v734, 0.0
      %v739 = vsub.f32 %v717, %v735
      %v740 = vsub.f32 %v718, %v736
      %v741 = vsub.f32 %v719, %v737
      %v742 = vsub.f32 %v720, %v738
      %v743 = vmul.f32 %v739, 1.442695
      %v744 = vpow.pop %v743
      %v745 = vmul.f32 %v740, 1.442695
      %v746 = vpow.pop %v745
      %v747 = vmul.f32 %v741, 1.442695
      %v748 = vpow.pop %v747
      %v749 = vmul.f32 %v742, 1.442695
      %v750 = vpow.pop %v749
      %v751 = vsel %vm721, %v744, 0.0
      %752 = vadd.xlane.f32.xlu0 %v751
      %v753 = vpop.xlane.xlu0 %752
      %v754 = vsel %vm721, %v746, 0.0
      %755 = vadd.xlane.f32.xlu0 %v754
      %v756 = vpop.xlane.xlu0 %755
      %v757 = vsel %vm721, %v748, 0.0
      %758 = vadd.xlane.f32.xlu0 %v757
      %v759 = vpop.xlane.xlu0 %758
      %v760 = vsel %vm731, %v750, 0.0
      %761 = vadd.xlane.f32.xlu0 %v760
      %v762 = vpop.xlane.xlu0 %761
      %v763 = vsub.f32 0.0, %v735
      %v764 = vsub.f32 0.0, %v736
      %v765 = vsub.f32 0.0, %v737
      %v766 = vsub.f32 0.0, %v738
      %v767 = vmul.f32 %v763, 1.442695
      %v768 = vpow.pop %v767
      %v769 = vmul.f32 %v764, 1.442695
      %v770 = vpow.pop %v769
      %v771 = vmul.f32 %v765, 1.442695
      %v772 = vpow.pop %v771
      %v773 = vmul.f32 %v766, 1.442695
      %v774 = vpow.pop %v773
      %v775 = vadd.f32 %v753, %v768
      %v776 = vadd.f32 %v756, %v770
      %v777 = vadd.f32 %v759, %v772
      %v778 = vadd.f32 %v762, %v774
      %v779 = vrcp.pop %v775
      %v780 = vrcp.pop %v776
      %v781 = vrcp.pop %v777
      %v782 = vrcp.pop %v778
      %v783 = vmul.f32 %v744, %v779
      %v784 = vmul.f32 %v746, %v780
      %v785 = vmul.f32 %v748, %v781
      %v786 = vmul.f32 %v750, %v782
      %787 = vrot.lane.b32.xlu0 %v644, 64
      %v788 = vpop.permute.xlu0 %787
      %789 = vrot.lane.b32.xlu0 %v647, 64
      %v790 = vpop.permute.xlu0 %789
      %791 = vrot.lane.b32.xlu0 %v650, 64
      %v792 = vpop.permute.xlu0 %791
      %793 = vrot.lane.b32.xlu0 %v653, 64
      %v794 = vpop.permute.xlu0 %793
      %v799 = vsel %vm721, %v783, 0
      %v802 = vsel %vm721, %v784, 0
      %v805 = vsel %vm721, %v785, 0
      %v808 = vsel %vm721, %v786, 0
      %vm810 = vcmask 1045504
      %v811 = vsel %vm810, %v794, 0
      %813 = vmatpush.msra.mxu0 0.0
      %814 = vmatpush.msra.mxu0 0.0
      %815 = vmatpush.msra.mxu0 0.0
      %816 = vmatpush.msra.mxu0 0.0
      %817 = vmatpush.msra.mxu0 0.0
      %818 = vmatpush.msra.mxu0 0.0
      %819 = vmatpush.msra.mxu0 0.0
      %820 = vmatpush.msra.mxu0 0.0
      %821 = vmatpush.msra.mxu0 0.0
      %822 = vmatpush.msra.mxu0 0.0
      %823 = vmatpush.msra.mxu0 0.0
      %824 = vmatpush.msra.mxu0 0.0
      %825 = vmatpush.msra.mxu0 %v811
      %826 = vmatpush.msra.mxu0 %v792
      %827 = vmatpush.msra.mxu0 %v790
      %828 = vmatpush.msra.mxu0 %v788
      %829 = vmatmul.f32.gmra.mxu0 %v799
      %v830 = vpop.f32.mrf.mxu0
      %v831 = vadd.f32 0.0, %v830
      %832 = vmatmul.f32.gmra.mxu0 %v802
      %v833 = vpop.f32.mrf.mxu0
      %v834 = vadd.f32 0.0, %v833
      %835 = vmatmul.f32.gmra.mxu0 %v805
      %v836 = vpop.f32.mrf.mxu0
      %v837 = vadd.f32 0.0, %v836
      %838 = vmatmul.f32.gmra.mxu0 %v808
      %v839 = vpop.f32.mrf.mxu0
      %v840 = vadd.f32 0.0, %v839
      %841 = vdwg.mxu0
      %842 = vrot.lane.b32.xlu0 %v644, 120
      %v843 = vpop.permute.xlu0 %842
      %844 = vrot.lane.b32.xlu0 %v647, 120
      %v845 = vpop.permute.xlu0 %844
      %846 = vrot.lane.b32.xlu0 %v650, 120
      %v847 = vpop.permute.xlu0 %846
      %848 = vrot.lane.b32.xlu0 %v653, 120
      %v849 = vpop.permute.xlu0 %848
      %850 = vrot.lane.b32.xlu0 %v644, 88
      %v851 = vpop.permute.xlu0 %850
      %852 = vrot.lane.b32.xlu0 %v647, 88
      %v853 = vpop.permute.xlu0 %852
      %854 = vrot.lane.b32.xlu0 %v650, 88
      %v855 = vpop.permute.xlu0 %854
      %856 = vrot.lane.b32.xlu0 %v653, 88
      %v857 = vpop.permute.xlu0 %856
      %v858 = vsel %vm667, %v843, 0
      %v860 = vsel %vm667, %v845, 0
      %v862 = vsel %vm667, %v847, 0
      %v864 = vsel %vm667, %v849, 0
      %v866 = vsel %vm667, %v851, 0
      %v868 = vsel %vm667, %v853, 0
      %v870 = vsel %vm667, %v855, 0
      %v872 = vsel %vm667, %v857, 0
      %874 = vmatpush.xpose.msra.mxu0 0.0
      %875 = vmatpush.xpose.msra.mxu0 0.0
      %876 = vmatpush.xpose.msra.mxu0 0.0
      %877 = vmatpush.xpose.msra.mxu0 0.0
      %878 = vmatpush.xpose.msra.mxu0 0.0
      %879 = vmatpush.xpose.msra.mxu0 0.0
      %880 = vmatpush.xpose.msra.mxu0 0.0
      %881 = vmatpush.xpose.msra.mxu0 0.0
      %882 = vmatpush.xpose.msra.mxu0 0.0
      %883 = vmatpush.xpose.msra.mxu0 0.0
      %884 = vmatpush.xpose.msra.mxu0 0.0
      %885 = vmatpush.xpose.msra.mxu0 0.0
      %886 = vmatpush.xpose.msra.mxu0 %v872
      %887 = vmatpush.xpose.msra.mxu0 %v870
      %888 = vmatpush.xpose.msra.mxu0 %v868
      %889 = vmatpush.xpose.msra.mxu0 %v866
      %890 = vmatmul.f32.gmra.mxu0 %v858
      %v891 = vpop.f32.mrf.mxu0
      %v892 = vadd.f32 0.0, %v891
      %893 = vmatmul.f32.gmra.mxu0 %v860
      %v894 = vpop.f32.mrf.mxu0
      %v895 = vadd.f32 0.0, %v894
      %896 = vmatmul.f32.gmra.mxu0 %v862
      %v897 = vpop.f32.mrf.mxu0
      %v898 = vadd.f32 0.0, %v897
      %899 = vmatmul.f32.gmra.mxu0 %v864
      %v900 = vpop.f32.mrf.mxu0
      %v901 = vadd.f32 0.0, %v900
      %902 = vdwg.mxu0
      %v903 = vmul.f32 %v892, 0.35355338
      %v904 = vmul.f32 %v895, 0.35355338
      %v905 = vmul.f32 %v898, 0.35355338
      %v906 = vmul.f32 %v901, 0.35355338
      %v907 = vadd.f32 %v903, %v511
      %v908 = vadd.f32 %v904, %v512
      %v909 = vadd.f32 %v905, %v513
      %v910 = vadd.f32 %v906, %v514
      %v911 = vsel %vm721, %v907, -inf
      %912 = vmax.xlane.f32.xlu0 %v911
      %v913 = vpop.xlane.xlu0 %912
      %v914 = vsel %vm721, %v908, -inf
      %915 = vmax.xlane.f32.xlu0 %v914
      %v916 = vpop.xlane.xlu0 %915
      %v917 = vsel %vm721, %v909, -inf
      %918 = vmax.xlane.f32.xlu0 %v917
      %v919 = vpop.xlane.xlu0 %918
      %v920 = vsel %vm731, %v910, -inf
      %921 = vmax.xlane.f32.xlu0 %v920
      %v922 = vpop.xlane.xlu0 %921
      %v923 = vmax.f32 %v913, 0.0
      %v924 = vmax.f32 %v916, 0.0
      %v925 = vmax.f32 %v919, 0.0
      %v926 = vmax.f32 %v922, 0.0
      %v927 = vsub.f32 %v907, %v923
      %v928 = vsub.f32 %v908, %v924
      %v929 = vsub.f32 %v909, %v925
      %v930 = vsub.f32 %v910, %v926
      %v931 = vmul.f32 %v927, 1.442695
      %v932 = vpow.pop %v931
      %v933 = vmul.f32 %v928, 1.442695
      %v934 = vpow.pop %v933
      %v935 = vmul.f32 %v929, 1.442695
      %v936 = vpow.pop %v935
      %v937 = vmul.f32 %v930, 1.442695
      %v938 = vpow.pop %v937
      %v939 = vsel %vm721, %v932, 0.0
      %940 = vadd.xlane.f32.xlu0 %v939
      %v941 = vpop.xlane.xlu0 %940
      %v942 = vsel %vm721, %v934, 0.0
      %943 = vadd.xlane.f32.xlu0 %v942
      %v944 = vpop.xlane.xlu0 %943
      %v945 = vsel %vm721, %v936, 0.0
      %946 = vadd.xlane.f32.xlu0 %v945
      %v947 = vpop.xlane.xlu0 %946
      %v948 = vsel %vm731, %v938, 0.0
      %949 = vadd.xlane.f32.xlu0 %v948
      %v950 = vpop.xlane.xlu0 %949
      %v951 = vsub.f32 0.0, %v923
      %v952 = vsub.f32 0.0, %v924
      %v953 = vsub.f32 0.0, %v925
      %v954 = vsub.f32 0.0, %v926
      %v955 = vmul.f32 %v951, 1.442695
      %v956 = vpow.pop %v955
      %v957 = vmul.f32 %v952, 1.442695
      %v958 = vpow.pop %v957
      %v959 = vmul.f32 %v953, 1.442695
      %v960 = vpow.pop %v959
      %v961 = vmul.f32 %v954, 1.442695
      %v962 = vpow.pop %v961
      %v963 = vadd.f32 %v941, %v956
      %v964 = vadd.f32 %v944, %v958
      %v965 = vadd.f32 %v947, %v960
      %v966 = vadd.f32 %v950, %v962
      %v967 = vrcp.pop %v963
      %v968 = vrcp.pop %v964
      %v969 = vrcp.pop %v965
      %v970 = vrcp.pop %v966
      %v971 = vmul.f32 %v932, %v967
      %v972 = vmul.f32 %v934, %v968
      %v973 = vmul.f32 %v936, %v969
      %v974 = vmul.f32 %v938, %v970
      %975 = vrot.lane.b32.xlu0 %v644, 56
      %v976 = vpop.permute.xlu0 %975
      %977 = vrot.lane.b32.xlu0 %v647, 56
      %v978 = vpop.permute.xlu0 %977
      %979 = vrot.lane.b32.xlu0 %v650, 56
      %v980 = vpop.permute.xlu0 %979
      %981 = vrot.lane.b32.xlu0 %v653, 56
      %v982 = vpop.permute.xlu0 %981
      %v987 = vsel %vm721, %v971, 0
      %v990 = vsel %vm721, %v972, 0
      %v993 = vsel %vm721, %v973, 0
      %v996 = vsel %vm721, %v974, 0
      %v998 = vsel %vm810, %v982, 0
      %1000 = vmatpush.msra.mxu0 0.0
      %1001 = vmatpush.msra.mxu0 0.0
      %1002 = vmatpush.msra.mxu0 0.0
      %1003 = vmatpush.msra.mxu0 0.0
      %1004 = vmatpush.msra.mxu0 0.0
      %1005 = vmatpush.msra.mxu0 0.0
      %1006 = vmatpush.msra.mxu0 0.0
      %1007 = vmatpush.msra.mxu0 0.0
      %1008 = vmatpush.msra.mxu0 0.0
      %1009 = vmatpush.msra.mxu0 0.0
      %1010 = vmatpush.msra.mxu0 0.0
      %1011 = vmatpush.msra.mxu0 0.0
      %1012 = vmatpush.msra.mxu0 %v998
      %1013 = vmatpush.msra.mxu0 %v980
      %1014 = vmatpush.msra.mxu0 %v978
      %1015 = vmatpush.msra.mxu0 %v976
      %1016 = vmatmul.f32.gmra.mxu0 %v987
      %v1017 = vpop.f32.mrf.mxu0
      %v1018 = vadd.f32 0.0, %v1017
      %1019 = vmatmul.f32.gmra.mxu0 %v990
      %v1020 = vpop.f32.mrf.mxu0
      %v1021 = vadd.f32 0.0, %v1020
      %1022 = vmatmul.f32.gmra.mxu0 %v993
      %v1023 = vpop.f32.mrf.mxu0
      %v1024 = vadd.f32 0.0, %v1023
      %1025 = vmatmul.f32.gmra.mxu0 %v996
      %v1026 = vpop.f32.mrf.mxu0
      %v1027 = vadd.f32 0.0, %v1026
      %1028 = vdwg.mxu0
      %1029 = vrot.lane.b32.xlu0 %v644, 112
      %v1030 = vpop.permute.xlu0 %1029
      %1031 = vrot.lane.b32.xlu0 %v647, 112
      %v1032 = vpop.permute.xlu0 %1031
      %1033 = vrot.lane.b32.xlu0 %v650, 112
      %v1034 = vpop.permute.xlu0 %1033
      %1035 = vrot.lane.b32.xlu0 %v653, 112
      %v1036 = vpop.permute.xlu0 %1035
      %1037 = vrot.lane.b32.xlu0 %v644, 80
      %v1038 = vpop.permute.xlu0 %1037
      %1039 = vrot.lane.b32.xlu0 %v647, 80
      %v1040 = vpop.permute.xlu0 %1039
      %1041 = vrot.lane.b32.xlu0 %v650, 80
      %v1042 = vpop.permute.xlu0 %1041
      %1043 = vrot.lane.b32.xlu0 %v653, 80
      %v1044 = vpop.permute.xlu0 %1043
      %v1045 = vsel %vm667, %v1030, 0
      %v1047 = vsel %vm667, %v1032, 0
      %v1049 = vsel %vm667, %v1034, 0
      %v1051 = vsel %vm667, %v1036, 0
      %v1053 = vsel %vm667, %v1038, 0
      %v1055 = vsel %vm667, %v1040, 0
      %v1057 = vsel %vm667, %v1042, 0
      %v1059 = vsel %vm667, %v1044, 0
      %1061 = vmatpush.xpose.msra.mxu0 0.0
      %1062 = vmatpush.xpose.msra.mxu0 0.0
      %1063 = vmatpush.xpose.msra.mxu0 0.0
      %1064 = vmatpush.xpose.msra.mxu0 0.0
      %1065 = vmatpush.xpose.msra.mxu0 0.0
      %1066 = vmatpush.xpose.msra.mxu0 0.0
      %1067 = vmatpush.xpose.msra.mxu0 0.0
      %1068 = vmatpush.xpose.msra.mxu0 0.0
      %1069 = vmatpush.xpose.msra.mxu0 0.0
      %1070 = vmatpush.xpose.msra.mxu0 0.0
      %1071 = vmatpush.xpose.msra.mxu0 0.0
      %1072 = vmatpush.xpose.msra.mxu0 0.0
      %1073 = vmatpush.xpose.msra.mxu0 %v1059
      %1074 = vmatpush.xpose.msra.mxu0 %v1057
      %1075 = vmatpush.xpose.msra.mxu0 %v1055
      %1076 = vmatpush.xpose.msra.mxu0 %v1053
      %1077 = vmatmul.f32.gmra.mxu0 %v1045
      %v1078 = vpop.f32.mrf.mxu0
      %v1079 = vadd.f32 0.0, %v1078
      %1080 = vmatmul.f32.gmra.mxu0 %v1047
      %v1081 = vpop.f32.mrf.mxu0
      %v1082 = vadd.f32 0.0, %v1081
      %1083 = vmatmul.f32.gmra.mxu0 %v1049
      %v1084 = vpop.f32.mrf.mxu0
      %v1085 = vadd.f32 0.0, %v1084
      %1086 = vmatmul.f32.gmra.mxu0 %v1051
      %v1087 = vpop.f32.mrf.mxu0
      %v1088 = vadd.f32 0.0, %v1087
      %1089 = vdwg.mxu0
      %v1090 = vmul.f32 %v1079, 0.35355338
      %v1091 = vmul.f32 %v1082, 0.35355338
      %v1092 = vmul.f32 %v1085, 0.35355338
      %v1093 = vmul.f32 %v1088, 0.35355338
      %v1094 = vadd.f32 %v1090, %v511
      %v1095 = vadd.f32 %v1091, %v512
      %v1096 = vadd.f32 %v1092, %v513
      %v1097 = vadd.f32 %v1093, %v514
      %v1098 = vsel %vm721, %v1094, -inf
      %1099 = vmax.xlane.f32.xlu0 %v1098
      %v1100 = vpop.xlane.xlu0 %1099
      %v1101 = vsel %vm721, %v1095, -inf
      %1102 = vmax.xlane.f32.xlu0 %v1101
      %v1103 = vpop.xlane.xlu0 %1102
      %v1104 = vsel %vm721, %v1096, -inf
      %1105 = vmax.xlane.f32.xlu0 %v1104
      %v1106 = vpop.xlane.xlu0 %1105
      %v1107 = vsel %vm731, %v1097, -inf
      %1108 = vmax.xlane.f32.xlu0 %v1107
      %v1109 = vpop.xlane.xlu0 %1108
      %v1110 = vmax.f32 %v1100, 0.0
      %v1111 = vmax.f32 %v1103, 0.0
      %v1112 = vmax.f32 %v1106, 0.0
      %v1113 = vmax.f32 %v1109, 0.0
      %v1114 = vsub.f32 %v1094, %v1110
      %v1115 = vsub.f32 %v1095, %v1111
      %v1116 = vsub.f32 %v1096, %v1112
      %v1117 = vsub.f32 %v1097, %v1113
      %v1118 = vmul.f32 %v1114, 1.442695
      %v1119 = vpow.pop %v1118
      %v1120 = vmul.f32 %v1115, 1.442695
      %v1121 = vpow.pop %v1120
      %v1122 = vmul.f32 %v1116, 1.442695
      %v1123 = vpow.pop %v1122
      %v1124 = vmul.f32 %v1117, 1.442695
      %v1125 = vpow.pop %v1124
      %v1126 = vsel %vm721, %v1119, 0.0
      %1127 = vadd.xlane.f32.xlu0 %v1126
      %v1128 = vpop.xlane.xlu0 %1127
      %v1129 = vsel %vm721, %v1121, 0.0
      %1130 = vadd.xlane.f32.xlu0 %v1129
      %v1131 = vpop.xlane.xlu0 %1130
      %v1132 = vsel %vm721, %v1123, 0.0
      %1133 = vadd.xlane.f32.xlu0 %v1132
      %v1134 = vpop.xlane.xlu0 %1133
      %v1135 = vsel %vm731, %v1125, 0.0
      %1136 = vadd.xlane.f32.xlu0 %v1135
      %v1137 = vpop.xlane.xlu0 %1136
      %v1138 = vsub.f32 0.0, %v1110
      %v1139 = vsub.f32 0.0, %v1111
      %v1140 = vsub.f32 0.0, %v1112
      %v1141 = vsub.f32 0.0, %v1113
      %v1142 = vmul.f32 %v1138, 1.442695
      %v1143 = vpow.pop %v1142
      %v1144 = vmul.f32 %v1139, 1.442695
      %v1145 = vpow.pop %v1144
      %v1146 = vmul.f32 %v1140, 1.442695
      %v1147 = vpow.pop %v1146
      %v1148 = vmul.f32 %v1141, 1.442695
      %v1149 = vpow.pop %v1148
      %v1150 = vadd.f32 %v1128, %v1143
      %v1151 = vadd.f32 %v1131, %v1145
      %v1152 = vadd.f32 %v1134, %v1147
      %v1153 = vadd.f32 %v1137, %v1149
      %v1154 = vrcp.pop %v1150
      %v1155 = vrcp.pop %v1151
      %v1156 = vrcp.pop %v1152
      %v1157 = vrcp.pop %v1153
      %v1158 = vmul.f32 %v1119, %v1154
      %v1159 = vmul.f32 %v1121, %v1155
      %v1160 = vmul.f32 %v1123, %v1156
      %v1161 = vmul.f32 %v1125, %v1157
      %1162 = vrot.lane.b32.xlu0 %v644, 48
      %v1163 = vpop.permute.xlu0 %1162
      %1164 = vrot.lane.b32.xlu0 %v647, 48
      %v1165 = vpop.permute.xlu0 %1164
      %1166 = vrot.lane.b32.xlu0 %v650, 48
      %v1167 = vpop.permute.xlu0 %1166
      %1168 = vrot.lane.b32.xlu0 %v653, 48
      %v1169 = vpop.permute.xlu0 %1168
      %v1174 = vsel %vm721, %v1158, 0
      %v1177 = vsel %vm721, %v1159, 0
      %v1180 = vsel %vm721, %v1160, 0
      %v1183 = vsel %vm721, %v1161, 0
      %v1185 = vsel %vm810, %v1169, 0
      %1187 = vmatpush.msra.mxu0 0.0
      %1188 = vmatpush.msra.mxu0 0.0
      %1189 = vmatpush.msra.mxu0 0.0
      %1190 = vmatpush.msra.mxu0 0.0
      %1191 = vmatpush.msra.mxu0 0.0
      %1192 = vmatpush.msra.mxu0 0.0
      %1193 = vmatpush.msra.mxu0 0.0
      %1194 = vmatpush.msra.mxu0 0.0
      %1195 = vmatpush.msra.mxu0 0.0
      %1196 = vmatpush.msra.mxu0 0.0
      %1197 = vmatpush.msra.mxu0 0.0
      %1198 = vmatpush.msra.mxu0 0.0
      %1199 = vmatpush.msra.mxu0 %v1185
      %1200 = vmatpush.msra.mxu0 %v1167
      %1201 = vmatpush.msra.mxu0 %v1165
      %1202 = vmatpush.msra.mxu0 %v1163
      %1203 = vmatmul.f32.gmra.mxu0 %v1174
      %v1204 = vpop.f32.mrf.mxu0
      %v1205 = vadd.f32 0.0, %v1204
      %1206 = vmatmul.f32.gmra.mxu0 %v1177
      %v1207 = vpop.f32.mrf.mxu0
      %v1208 = vadd.f32 0.0, %v1207
      %1209 = vmatmul.f32.gmra.mxu0 %v1180
      %v1210 = vpop.f32.mrf.mxu0
      %v1211 = vadd.f32 0.0, %v1210
      %1212 = vmatmul.f32.gmra.mxu0 %v1183
      %v1213 = vpop.f32.mrf.mxu0
      %v1214 = vadd.f32 0.0, %v1213
      %1215 = vdwg.mxu0
      %1216 = vrot.lane.b32.xlu0 %v644, 104
      %v1217 = vpop.permute.xlu0 %1216
      %1218 = vrot.lane.b32.xlu0 %v647, 104
      %v1219 = vpop.permute.xlu0 %1218
      %1220 = vrot.lane.b32.xlu0 %v650, 104
      %v1221 = vpop.permute.xlu0 %1220
      %1222 = vrot.lane.b32.xlu0 %v653, 104
      %v1223 = vpop.permute.xlu0 %1222
      %1224 = vrot.lane.b32.xlu0 %v644, 72
      %v1225 = vpop.permute.xlu0 %1224
      %1226 = vrot.lane.b32.xlu0 %v647, 72
      %v1227 = vpop.permute.xlu0 %1226
      %1228 = vrot.lane.b32.xlu0 %v650, 72
      %v1229 = vpop.permute.xlu0 %1228
      %1230 = vrot.lane.b32.xlu0 %v653, 72
      %v1231 = vpop.permute.xlu0 %1230
      %v1232 = vsel %vm667, %v1217, 0
      %v1234 = vsel %vm667, %v1219, 0
      %v1236 = vsel %vm667, %v1221, 0
      %v1238 = vsel %vm667, %v1223, 0
      %v1240 = vsel %vm667, %v1225, 0
      %v1242 = vsel %vm667, %v1227, 0
      %v1244 = vsel %vm667, %v1229, 0
      %v1246 = vsel %vm667, %v1231, 0
      %1248 = vmatpush.xpose.msra.mxu0 0.0
      %1249 = vmatpush.xpose.msra.mxu0 0.0
      %1250 = vmatpush.xpose.msra.mxu0 0.0
      %1251 = vmatpush.xpose.msra.mxu0 0.0
      %1252 = vmatpush.xpose.msra.mxu0 0.0
      %1253 = vmatpush.xpose.msra.mxu0 0.0
      %1254 = vmatpush.xpose.msra.mxu0 0.0
      %1255 = vmatpush.xpose.msra.mxu0 0.0
      %1256 = vmatpush.xpose.msra.mxu0 0.0
      %1257 = vmatpush.xpose.msra.mxu0 0.0
      %1258 = vmatpush.xpose.msra.mxu0 0.0
      %1259 = vmatpush.xpose.msra.mxu0 0.0
      %1260 = vmatpush.xpose.msra.mxu0 %v1246
      %1261 = vmatpush.xpose.msra.mxu0 %v1244
      %1262 = vmatpush.xpose.msra.mxu0 %v1242
      %1263 = vmatpush.xpose.msra.mxu0 %v1240
      %1264 = vmatmul.f32.gmra.mxu0 %v1232
      %v1265 = vpop.f32.mrf.mxu0
      %v1266 = vadd.f32 0.0, %v1265
      %1267 = vmatmul.f32.gmra.mxu0 %v1234
      %v1268 = vpop.f32.mrf.mxu0
      %v1269 = vadd.f32 0.0, %v1268
      %1270 = vmatmul.f32.gmra.mxu0 %v1236
      %v1271 = vpop.f32.mrf.mxu0
      %v1272 = vadd.f32 0.0, %v1271
      %1273 = vmatmul.f32.gmra.mxu0 %v1238
      %v1274 = vpop.f32.mrf.mxu0
      %v1275 = vadd.f32 0.0, %v1274
      %1276 = vdwg.mxu0
      %v1277 = vmul.f32 %v1266, 0.35355338
      %v1278 = vmul.f32 %v1269, 0.35355338
      %v1279 = vmul.f32 %v1272, 0.35355338
      %v1280 = vmul.f32 %v1275, 0.35355338
      %v1281 = vadd.f32 %v1277, %v511
      %v1282 = vadd.f32 %v1278, %v512
      %v1283 = vadd.f32 %v1279, %v513
      %v1284 = vadd.f32 %v1280, %v514
      %v1285 = vsel %vm721, %v1281, -inf
      %1286 = vmax.xlane.f32.xlu0 %v1285
      %v1287 = vpop.xlane.xlu0 %1286
      %v1288 = vsel %vm721, %v1282, -inf
      %1289 = vmax.xlane.f32.xlu0 %v1288
      %v1290 = vpop.xlane.xlu0 %1289
      %v1291 = vsel %vm721, %v1283, -inf
      %1292 = vmax.xlane.f32.xlu0 %v1291
      %v1293 = vpop.xlane.xlu0 %1292
      %v1294 = vsel %vm731, %v1284, -inf
      %1295 = vmax.xlane.f32.xlu0 %v1294
      %v1296 = vpop.xlane.xlu0 %1295
      %v1297 = vmax.f32 %v1287, 0.0
      %v1298 = vmax.f32 %v1290, 0.0
      %v1299 = vmax.f32 %v1293, 0.0
      %v1300 = vmax.f32 %v1296, 0.0
      %v1301 = vsub.f32 %v1281, %v1297
      %v1302 = vsub.f32 %v1282, %v1298
      %v1303 = vsub.f32 %v1283, %v1299
      %v1304 = vsub.f32 %v1284, %v1300
      %v1305 = vmul.f32 %v1301, 1.442695
      %v1306 = vpow.pop %v1305
      %v1307 = vmul.f32 %v1302, 1.442695
      %v1308 = vpow.pop %v1307
      %v1309 = vmul.f32 %v1303, 1.442695
      %v1310 = vpow.pop %v1309
      %v1311 = vmul.f32 %v1304, 1.442695
      %v1312 = vpow.pop %v1311
      %v1313 = vsel %vm721, %v1306, 0.0
      %1314 = vadd.xlane.f32.xlu0 %v1313
      %v1315 = vpop.xlane.xlu0 %1314
      %v1316 = vsel %vm721, %v1308, 0.0
      %1317 = vadd.xlane.f32.xlu0 %v1316
      %v1318 = vpop.xlane.xlu0 %1317
      %v1319 = vsel %vm721, %v1310, 0.0
      %1320 = vadd.xlane.f32.xlu0 %v1319
      %v1321 = vpop.xlane.xlu0 %1320
      %v1322 = vsel %vm731, %v1312, 0.0
      %1323 = vadd.xlane.f32.xlu0 %v1322
      %v1324 = vpop.xlane.xlu0 %1323
      %v1325 = vsub.f32 0.0, %v1297
      %v1326 = vsub.f32 0.0, %v1298
      %v1327 = vsub.f32 0.0, %v1299
      %v1328 = vsub.f32 0.0, %v1300
      %v1329 = vmul.f32 %v1325, 1.442695
      %v1330 = vpow.pop %v1329
      %v1331 = vmul.f32 %v1326, 1.442695
      %v1332 = vpow.pop %v1331
      %v1333 = vmul.f32 %v1327, 1.442695
      %v1334 = vpow.pop %v1333
      %v1335 = vmul.f32 %v1328, 1.442695
      %v1336 = vpow.pop %v1335
      %v1337 = vadd.f32 %v1315, %v1330
      %v1338 = vadd.f32 %v1318, %v1332
      %v1339 = vadd.f32 %v1321, %v1334
      %v1340 = vadd.f32 %v1324, %v1336
      %v1341 = vrcp.pop %v1337
      %v1342 = vrcp.pop %v1338
      %v1343 = vrcp.pop %v1339
      %v1344 = vrcp.pop %v1340
      %v1345 = vmul.f32 %v1306, %v1341
      %v1346 = vmul.f32 %v1308, %v1342
      %v1347 = vmul.f32 %v1310, %v1343
      %v1348 = vmul.f32 %v1312, %v1344
      %1349 = vrot.lane.b32.xlu0 %v644, 40
      %v1350 = vpop.permute.xlu0 %1349
      %1351 = vrot.lane.b32.xlu0 %v647, 40
      %v1352 = vpop.permute.xlu0 %1351
      %1353 = vrot.lane.b32.xlu0 %v650, 40
      %v1354 = vpop.permute.xlu0 %1353
      %1355 = vrot.lane.b32.xlu0 %v653, 40
      %v1356 = vpop.permute.xlu0 %1355
      %v1361 = vsel %vm721, %v1345, 0
      %v1364 = vsel %vm721, %v1346, 0
      %v1367 = vsel %vm721, %v1347, 0
      %v1370 = vsel %vm721, %v1348, 0
      %v1372 = vsel %vm810, %v1356, 0
      %1374 = vmatpush.msra.mxu0 0.0
      %1375 = vmatpush.msra.mxu0 0.0
      %1376 = vmatpush.msra.mxu0 0.0
      %1377 = vmatpush.msra.mxu0 0.0
      %1378 = vmatpush.msra.mxu0 0.0
      %1379 = vmatpush.msra.mxu0 0.0
      %1380 = vmatpush.msra.mxu0 0.0
      %1381 = vmatpush.msra.mxu0 0.0
      %1382 = vmatpush.msra.mxu0 0.0
      %1383 = vmatpush.msra.mxu0 0.0
      %1384 = vmatpush.msra.mxu0 0.0
      %1385 = vmatpush.msra.mxu0 0.0
      %1386 = vmatpush.msra.mxu0 %v1372
      %1387 = vmatpush.msra.mxu0 %v1354
      %1388 = vmatpush.msra.mxu0 %v1352
      %1389 = vmatpush.msra.mxu0 %v1350
      %1390 = vmatmul.f32.gmra.mxu0 %v1361
      %v1391 = vpop.f32.mrf.mxu0
      %v1392 = vadd.f32 0.0, %v1391
      %1393 = vmatmul.f32.gmra.mxu0 %v1364
      %v1394 = vpop.f32.mrf.mxu0
      %v1395 = vadd.f32 0.0, %v1394
      %1396 = vmatmul.f32.gmra.mxu0 %v1367
      %v1397 = vpop.f32.mrf.mxu0
      %v1398 = vadd.f32 0.0, %v1397
      %1399 = vmatmul.f32.gmra.mxu0 %v1370
      %v1400 = vpop.f32.mrf.mxu0
      %v1401 = vadd.f32 0.0, %v1400
      %1402 = vdwg.mxu0
      %1407 = vrot.lane.b32.xlu0 %v1018, 8
      %v1408 = vpop.permute.xlu0 %1407
      %1409 = vrot.lane.b32.xlu0 %v1021, 8
      %v1410 = vpop.permute.xlu0 %1409
      %1411 = vrot.lane.b32.xlu0 %v1024, 8
      %v1412 = vpop.permute.xlu0 %1411
      %1413 = vrot.lane.b32.xlu0 %v1027, 8
      %v1414 = vpop.permute.xlu0 %1413
      %1423 = vrot.lane.b32.xlu0 %v1205, 16
      %v1424 = vpop.permute.xlu0 %1423
      %1425 = vrot.lane.b32.xlu0 %v1208, 16
      %v1426 = vpop.permute.xlu0 %1425
      %1427 = vrot.lane.b32.xlu0 %v1211, 16
      %v1428 = vpop.permute.xlu0 %1427
      %1429 = vrot.lane.b32.xlu0 %v1214, 16
      %v1430 = vpop.permute.xlu0 %1429
      %1439 = vrot.lane.b32.xlu0 %v1392, 24
      %v1440 = vpop.permute.xlu0 %1439
      %1441 = vrot.lane.b32.xlu0 %v1395, 24
      %v1442 = vpop.permute.xlu0 %1441
      %1443 = vrot.lane.b32.xlu0 %v1398, 24
      %v1444 = vpop.permute.xlu0 %1443
      %1445 = vrot.lane.b32.xlu0 %v1401, 24
      %v1446 = vpop.permute.xlu0 %1445
      %v1451 = vsel %vm667, %v831, %v1408
      %v1452 = vsel %vm667, %v834, %v1410
      %v1453 = vsel %vm667, %v837, %v1412
      %v1454 = vsel %vm667, %v840, %v1414
      %vm1455 = vcmask 130048
      %v1456 = vsel %vm1455, %v1451, %v1424
      %v1457 = vsel %vm1455, %v1452, %v1426
      %v1458 = vsel %vm1455, %v1453, %v1428
      %v1459 = vsel %vm1455, %v1454, %v1430
      %vm1460 = vcmask 195584
      %v1461 = vsel %vm1460, %v1456, %v1440
      %v1462 = vsel %vm1460, %v1457, %v1442
      %v1463 = vsel %vm1460, %v1458, %v1444
      %v1464 = vsel %vm1460, %v1459, %v1446
      %v1465 = vperm.slane %v602, 1
      %v1467 = vsel %vm613, %v1461, 0
      %v1470 = vsel %vm613, %v1462, 0
      %v1473 = vsel %vm613, %v1463, 0
      %v1476 = vsel %vm613, %v1464, 0
      %1478 = vmatpush.msra.mxu0 0.0
      %1479 = vmatpush.msra.mxu0 0.0
      %1480 = vmatpush.msra.mxu0 0.0
      %1481 = vmatpush.msra.mxu0 0.0
      %1482 = vmatpush.msra.mxu0 0.0
      %1483 = vmatpush.msra.mxu0 0.0
      %1484 = vmatpush.msra.mxu0 0.0
      %1485 = vmatpush.msra.mxu0 0.0
      %1486 = vmatpush.msra.mxu0 0.0
      %1487 = vmatpush.msra.mxu0 0.0
      %1488 = vmatpush.msra.mxu0 0.0
      %1489 = vmatpush.msra.mxu0 0.0
      %1490 = vmatpush.msra.mxu0 %v611
      %1491 = vmatpush.msra.mxu0 %v610
      %1492 = vmatpush.msra.mxu0 %v609
      %1493 = vmatpush.msra.mxu0 %v608
      %1494 = vmatmul.f32.gmra.mxu0 %v1467
      %v1495 = vpop.f32.mrf.mxu0
      %v1496 = vadd.f32 %v1465, %v1495
      %1497 = vmatmul.f32.gmra.mxu0 %v1470
      %v1498 = vpop.f32.mrf.mxu0
      %v1499 = vadd.f32 %v1465, %v1498
      %1500 = vmatmul.f32.gmra.mxu0 %v1473
      %v1501 = vpop.f32.mrf.mxu0
      %v1502 = vadd.f32 %v1465, %v1501
      %1503 = vmatmul.f32.gmra.mxu0 %v1476
      %v1504 = vpop.f32.mrf.mxu0
      %v1505 = vadd.f32 %v1465, %v1504
      %1506 = vdwg.mxu0
      %v1507 = vadd.f32 %v591, %v1496
      %v1508 = vadd.f32 %v594, %v1499
      %v1509 = vadd.f32 %v597, %v1502
      %v1510 = vadd.f32 %v600, %v1505
      %v1511 = vsel %vm613, %v1507, 0.0
      %1512 = vadd.xlane.f32.xlu0 %v1511
      %v1513 = vpop.xlane.xlu0 %1512
      %v1514 = vsel %vm613, %v1508, 0.0
      %1515 = vadd.xlane.f32.xlu0 %v1514
      %v1516 = vpop.xlane.xlu0 %1515
      %v1517 = vsel %vm613, %v1509, 0.0
      %1518 = vadd.xlane.f32.xlu0 %v1517
      %v1519 = vpop.xlane.xlu0 %1518
      %vm1520 = vcmask 259072
      %v1521 = vsel %vm1520, %v1510, 0.0
      %1522 = vadd.xlane.f32.xlu0 %v1521
      %v1523 = vpop.xlane.xlu0 %1522
      %v1524 = vrcp.pop 32.0
      %v1525 = vmul.f32 32.0, %v1524
      %v1526 = vsub.f32 1.0, %v1525
      %v1527 = vmul.f32 %v1524, %v1526
      %v1528 = vadd.f32 %v1524, %v1527
      %vm1529 = vweird.f32 %v1524
      %v1530 = vsel %vm1529, %v1524, %v1528
      %v1531 = vmul.f32 %v1513, %v1530
      %v1532 = vmul.f32 %v1516, %v1530
      %v1533 = vmul.f32 %v1519, %v1530
      %v1534 = vmul.f32 %v1523, %v1530
      %v1535 = vsub.f32 %v1507, %v1531
      %v1536 = vsub.f32 %v1508, %v1532
      %v1537 = vsub.f32 %v1509, %v1533
      %v1538 = vsub.f32 %v1510, %v1534
      %v1539 = vmul.f32 %v1535, %v1535
      %v1540 = vmul.f32 %v1536, %v1536
      %v1541 = vmul.f32 %v1537, %v1537
      %v1542 = vmul.f32 %v1538, %v1538
      %v1543 = vsel %vm613, %v1539, 0.0
      %1544 = vadd.xlane.f32.xlu0 %v1543
      %v1545 = vpop.xlane.xlu0 %1544
      %v1546 = vsel %vm613, %v1540, 0.0
      %1547 = vadd.xlane.f32.xlu0 %v1546
      %v1548 = vpop.xlane.xlu0 %1547
      %v1549 = vsel %vm613, %v1541, 0.0
      %1550 = vadd.xlane.f32.xlu0 %v1549
      %v1551 = vpop.xlane.xlu0 %1550
      %v1552 = vsel %vm1520, %v1542, 0.0
      %1553 = vadd.xlane.f32.xlu0 %v1552
      %v1554 = vpop.xlane.xlu0 %1553
      %v1555 = vmul.f32 %v1545, %v1530
      %v1556 = vmul.f32 %v1548, %v1530
      %v1557 = vmul.f32 %v1551, %v1530
      %v1558 = vmul.f32 %v1554, %v1530
      %v1559 = vadd.f32 %v1555, 1e-05
      %v1560 = vadd.f32 %v1556, 1e-05
      %v1561 = vadd.f32 %v1557, 1e-05
      %v1562 = vadd.f32 %v1558, 1e-05
      %v1563 = vrsqrt.pop %v1559
      %v1564 = vmul.f32 %v1563, %v1559
      %v1565 = vmul.f32 %v1564, %v1563
      %v1566 = vmul.f32 0.5, %v1565
      %v1567 = vsub.f32 1.5, %v1566
      %v1568 = vmul.f32 %v1563, %v1567
      %vm1569 = vweird.f32 %v1559
      %vm1570 = vweird.f32 %v1563
      %vm1571 = vmor %vm1569, %vm1570
      %v1572 = vsel %vm1571, %v1563, %v1568
      %v1573 = vrsqrt.pop %v1560
      %v1574 = vmul.f32 %v1573, %v1560
      %v1575 = vmul.f32 %v1574, %v1573
      %v1576 = vmul.f32 0.5, %v1575
      %v1577 = vsub.f32 1.5, %v1576
      %v1578 = vmul.f32 %v1573, %v1577
      %vm1579 = vweird.f32 %v1560
      %vm1580 = vweird.f32 %v1573
      %vm1581 = vmor %vm1579, %vm1580
      %v1582 = vsel %vm1581, %v1573, %v1578
      %v1583 = vrsqrt.pop %v1561
      %v1584 = vmul.f32 %v1583, %v1561
      %v1585 = vmul.f32 %v1584, %v1583
      %v1586 = vmul.f32 0.5, %v1585
      %v1587 = vsub.f32 1.5, %v1586
      %v1588 = vmul.f32 %v1583, %v1587
      %vm1589 = vweird.f32 %v1561
      %vm1590 = vweird.f32 %v1583
      %vm1591 = vmor %vm1589, %vm1590
      %v1592 = vsel %vm1591, %v1583, %v1588
      %v1593 = vrsqrt.pop %v1562
      %v1594 = vmul.f32 %v1593, %v1562
      %v1595 = vmul.f32 %v1594, %v1593
      %v1596 = vmul.f32 0.5, %v1595
      %v1597 = vsub.f32 1.5, %v1596
      %v1598 = vmul.f32 %v1593, %v1597
      %vm1599 = vweird.f32 %v1562
      %vm1600 = vweird.f32 %v1593
      %vm1601 = vmor %vm1599, %vm1600
      %v1602 = vsel %vm1601, %v1593, %v1598
      %v1603 = vmul.f32 %v1535, %v1572
      %v1604 = vmul.f32 %v1536, %v1582
      %v1605 = vmul.f32 %v1537, %v1592
      %v1606 = vmul.f32 %v1538, %v1602
      %v1607 = vperm.slane %v602, 2
      %v1608 = vmul.f32 %v1603, %v1607
      %v1609 = vmul.f32 %v1604, %v1607
      %v1610 = vmul.f32 %v1605, %v1607
      %v1611 = vmul.f32 %v1606, %v1607
      %v1612 = vperm.slane %v602, 3
      %v1613 = vadd.f32 %v1608, %v1612
      %v1614 = vadd.f32 %v1609, %v1612
      %v1615 = vadd.f32 %v1610, %v1612
      %v1616 = vadd.f32 %v1611, %v1612
      %v1617 = vld [vmem:[%s8] sm:$0xff]
      %v1618 = vld [vmem:[%s8 + $0x8] sm:$0xff]
      %v1619 = vld [vmem:[%s8 + $0x10] sm:$0xff]
      %v1620 = vld [vmem:[%s8 + $0x18] sm:$0xff]
      %v1621 = vld [vmem:[%s9] sm:$0xff]
      %v1622 = vld [vmem:[%s9 + $0x8] sm:$0xff]
      %v1623 = vld [vmem:[%s9 + $0x10] sm:$0xff]
      %v1624 = vld [vmem:[%s9 + $0x18] sm:$0xff]
      %v1625 = vperm.slane %v602, 4
      %v1627 = vsel %vm613, %v1613, 0
      %v1630 = vsel %vm613, %v1614, 0
      %v1633 = vsel %vm613, %v1615, 0
      %v1636 = vsel %vm613, %v1616, 0
      %1638 = vmatpush.msra.mxu0 0.0
      %1639 = vmatpush.msra.mxu0 0.0
      %1640 = vmatpush.msra.mxu0 0.0
      %1641 = vmatpush.msra.mxu0 0.0
      %1642 = vmatpush.msra.mxu0 0.0
      %1643 = vmatpush.msra.mxu0 0.0
      %1644 = vmatpush.msra.mxu0 0.0
      %1645 = vmatpush.msra.mxu0 0.0
      %1646 = vmatpush.msra.mxu0 0.0
      %1647 = vmatpush.msra.mxu0 0.0
      %1648 = vmatpush.msra.mxu0 0.0
      %1649 = vmatpush.msra.mxu0 0.0
      %1650 = vmatpush.msra.mxu0 %v1620
      %1651 = vmatpush.msra.mxu0 %v1619
      %1652 = vmatpush.msra.mxu0 %v1618
      %1653 = vmatpush.msra.mxu0 %v1617
      %1654 = vmatmul.f32.gmra.mxu0 %v1627
      %v1655 = vpop.f32.mrf.mxu0
      %v1656 = vadd.f32 %v1625, %v1655
      %1657 = vmatmul.f32.gmra.mxu0 %v1630
      %v1658 = vpop.f32.mrf.mxu0
      %v1659 = vadd.f32 %v1625, %v1658
      %1660 = vmatmul.f32.gmra.mxu0 %v1633
      %v1661 = vpop.f32.mrf.mxu0
      %v1662 = vadd.f32 %v1625, %v1661
      %1663 = vmatmul.f32.gmra.mxu0 %v1636
      %v1664 = vpop.f32.mrf.mxu0
      %v1665 = vadd.f32 %v1625, %v1664
      %1666 = vdwg.mxu0
      %1671 = vrot.lane.b32.xlu0 %v1656, 96
      %v1672 = vpop.permute.xlu0 %1671
      %1673 = vrot.lane.b32.xlu0 %v1659, 96
      %v1674 = vpop.permute.xlu0 %1673
      %1675 = vrot.lane.b32.xlu0 %v1662, 96
      %v1676 = vpop.permute.xlu0 %1675
      %1677 = vrot.lane.b32.xlu0 %v1665, 96
      %v1678 = vpop.permute.xlu0 %1677
      %v1679 = vsel %vm1455, %v1656, 0
      %v1681 = vsel %vm1455, %v1659, 0
      %v1683 = vsel %vm1455, %v1662, 0
      %v1685 = vsel %vm1455, %v1665, 0
      %v1687 = vsel %vm1455, %v1672, 0
      %v1689 = vsel %vm1455, %v1674, 0
      %v1691 = vsel %vm1455, %v1676, 0
      %v1693 = vsel %vm1455, %v1678, 0
      %1695 = vmatpush.xpose.msra.mxu0 0.0
      %1696 = vmatpush.xpose.msra.mxu0 0.0
      %1697 = vmatpush.xpose.msra.mxu0 0.0
      %1698 = vmatpush.xpose.msra.mxu0 0.0
      %1699 = vmatpush.xpose.msra.mxu0 0.0
      %1700 = vmatpush.xpose.msra.mxu0 0.0
      %1701 = vmatpush.xpose.msra.mxu0 0.0
      %1702 = vmatpush.xpose.msra.mxu0 0.0
      %1703 = vmatpush.xpose.msra.mxu0 0.0
      %1704 = vmatpush.xpose.msra.mxu0 0.0
      %1705 = vmatpush.xpose.msra.mxu0 0.0
      %1706 = vmatpush.xpose.msra.mxu0 0.0
      %1707 = vmatpush.xpose.msra.mxu0 %v1693
      %1708 = vmatpush.xpose.msra.mxu0 %v1691
      %1709 = vmatpush.xpose.msra.mxu0 %v1689
      %1710 = vmatpush.xpose.msra.mxu0 %v1687
      %1711 = vmatmul.f32.gmra.mxu0 %v1679
      %v1712 = vpop.f32.mrf.mxu0
      %v1713 = vadd.f32 0.0, %v1712
      %1714 = vmatmul.f32.gmra.mxu0 %v1681
      %v1715 = vpop.f32.mrf.mxu0
      %v1716 = vadd.f32 0.0, %v1715
      %1717 = vmatmul.f32.gmra.mxu0 %v1683
      %v1718 = vpop.f32.mrf.mxu0
      %v1719 = vadd.f32 0.0, %v1718
      %1720 = vmatmul.f32.gmra.mxu0 %v1685
      %v1721 = vpop.f32.mrf.mxu0
      %v1722 = vadd.f32 0.0, %v1721
      %1723 = vdwg.mxu0
      %v1724 = vmul.f32 %v1713, 0.25
      %v1725 = vmul.f32 %v1716, 0.25
      %v1726 = vmul.f32 %v1719, 0.25
      %v1727 = vmul.f32 %v1722, 0.25
      %v1728 = vadd.f32 %v1724, %v515
      %v1729 = vadd.f32 %v1725, %v516
      %v1730 = vadd.f32 %v1726, %v517
      %v1731 = vadd.f32 %v1727, %v518
      %v1732 = vsel %vm721, %v1728, -inf
      %1733 = vmax.xlane.f32.xlu0 %v1732
      %v1734 = vpop.xlane.xlu0 %1733
      %v1735 = vsel %vm721, %v1729, -inf
      %1736 = vmax.xlane.f32.xlu0 %v1735
      %v1737 = vpop.xlane.xlu0 %1736
      %v1738 = vsel %vm721, %v1730, -inf
      %1739 = vmax.xlane.f32.xlu0 %v1738
      %v1740 = vpop.xlane.xlu0 %1739
      %v1741 = vsel %vm731, %v1731, -inf
      %1742 = vmax.xlane.f32.xlu0 %v1741
      %v1743 = vpop.xlane.xlu0 %1742
      %v1744 = vmax.f32 %v1734, 0.0
      %v1745 = vmax.f32 %v1737, 0.0
      %v1746 = vmax.f32 %v1740, 0.0
      %v1747 = vmax.f32 %v1743, 0.0
      %v1748 = vsub.f32 %v1728, %v1744
      %v1749 = vsub.f32 %v1729, %v1745
      %v1750 = vsub.f32 %v1730, %v1746
      %v1751 = vsub.f32 %v1731, %v1747
      %v1752 = vmul.f32 %v1748, 1.442695
      %v1753 = vpow.pop %v1752
      %v1754 = vmul.f32 %v1749, 1.442695
      %v1755 = vpow.pop %v1754
      %v1756 = vmul.f32 %v1750, 1.442695
      %v1757 = vpow.pop %v1756
      %v1758 = vmul.f32 %v1751, 1.442695
      %v1759 = vpow.pop %v1758
      %v1760 = vsel %vm721, %v1753, 0.0
      %1761 = vadd.xlane.f32.xlu0 %v1760
      %v1762 = vpop.xlane.xlu0 %1761
      %v1763 = vsel %vm721, %v1755, 0.0
      %1764 = vadd.xlane.f32.xlu0 %v1763
      %v1765 = vpop.xlane.xlu0 %1764
      %v1766 = vsel %vm721, %v1757, 0.0
      %1767 = vadd.xlane.f32.xlu0 %v1766
      %v1768 = vpop.xlane.xlu0 %1767
      %v1769 = vsel %vm731, %v1759, 0.0
      %1770 = vadd.xlane.f32.xlu0 %v1769
      %v1771 = vpop.xlane.xlu0 %1770
      %v1772 = vsub.f32 0.0, %v1744
      %v1773 = vsub.f32 0.0, %v1745
      %v1774 = vsub.f32 0.0, %v1746
      %v1775 = vsub.f32 0.0, %v1747
      %v1776 = vmul.f32 %v1772, 1.442695
      %v1777 = vpow.pop %v1776
      %v1778 = vmul.f32 %v1773, 1.442695
      %v1779 = vpow.pop %v1778
      %v1780 = vmul.f32 %v1774, 1.442695
      %v1781 = vpow.pop %v1780
      %v1782 = vmul.f32 %v1775, 1.442695
      %v1783 = vpow.pop %v1782
      %v1784 = vadd.f32 %v1762, %v1777
      %v1785 = vadd.f32 %v1765, %v1779
      %v1786 = vadd.f32 %v1768, %v1781
      %v1787 = vadd.f32 %v1771, %v1783
      %v1788 = vrcp.pop %v1784
      %v1789 = vrcp.pop %v1785
      %v1790 = vrcp.pop %v1786
      %v1791 = vrcp.pop %v1787
      %v1792 = vmul.f32 %v1753, %v1788
      %v1793 = vmul.f32 %v1755, %v1789
      %v1794 = vmul.f32 %v1757, %v1790
      %v1795 = vmul.f32 %v1759, %v1791
      %1796 = vrot.lane.b32.xlu0 %v1656, 64
      %v1797 = vpop.permute.xlu0 %1796
      %1798 = vrot.lane.b32.xlu0 %v1659, 64
      %v1799 = vpop.permute.xlu0 %1798
      %1800 = vrot.lane.b32.xlu0 %v1662, 64
      %v1801 = vpop.permute.xlu0 %1800
      %1802 = vrot.lane.b32.xlu0 %v1665, 64
      %v1803 = vpop.permute.xlu0 %1802
      %v1808 = vsel %vm721, %v1792, 0
      %v1811 = vsel %vm721, %v1793, 0
      %v1814 = vsel %vm721, %v1794, 0
      %v1817 = vsel %vm721, %v1795, 0
      %v1819 = vsel %vm810, %v1803, 0
      %1821 = vmatpush.msra.mxu0 0.0
      %1822 = vmatpush.msra.mxu0 0.0
      %1823 = vmatpush.msra.mxu0 0.0
      %1824 = vmatpush.msra.mxu0 0.0
      %1825 = vmatpush.msra.mxu0 0.0
      %1826 = vmatpush.msra.mxu0 0.0
      %1827 = vmatpush.msra.mxu0 0.0
      %1828 = vmatpush.msra.mxu0 0.0
      %1829 = vmatpush.msra.mxu0 0.0
      %1830 = vmatpush.msra.mxu0 0.0
      %1831 = vmatpush.msra.mxu0 0.0
      %1832 = vmatpush.msra.mxu0 0.0
      %1833 = vmatpush.msra.mxu0 %v1819
      %1834 = vmatpush.msra.mxu0 %v1801
      %1835 = vmatpush.msra.mxu0 %v1799
      %1836 = vmatpush.msra.mxu0 %v1797
      %1837 = vmatmul.f32.gmra.mxu0 %v1808
      %v1838 = vpop.f32.mrf.mxu0
      %v1839 = vadd.f32 0.0, %v1838
      %1840 = vmatmul.f32.gmra.mxu0 %v1811
      %v1841 = vpop.f32.mrf.mxu0
      %v1842 = vadd.f32 0.0, %v1841
      %1843 = vmatmul.f32.gmra.mxu0 %v1814
      %v1844 = vpop.f32.mrf.mxu0
      %v1845 = vadd.f32 0.0, %v1844
      %1846 = vmatmul.f32.gmra.mxu0 %v1817
      %v1847 = vpop.f32.mrf.mxu0
      %v1848 = vadd.f32 0.0, %v1847
      %1849 = vdwg.mxu0
      %1850 = vrot.lane.b32.xlu0 %v1656, 112
      %v1851 = vpop.permute.xlu0 %1850
      %1852 = vrot.lane.b32.xlu0 %v1659, 112
      %v1853 = vpop.permute.xlu0 %1852
      %1854 = vrot.lane.b32.xlu0 %v1662, 112
      %v1855 = vpop.permute.xlu0 %1854
      %1856 = vrot.lane.b32.xlu0 %v1665, 112
      %v1857 = vpop.permute.xlu0 %1856
      %1858 = vrot.lane.b32.xlu0 %v1656, 80
      %v1859 = vpop.permute.xlu0 %1858
      %1860 = vrot.lane.b32.xlu0 %v1659, 80
      %v1861 = vpop.permute.xlu0 %1860
      %1862 = vrot.lane.b32.xlu0 %v1662, 80
      %v1863 = vpop.permute.xlu0 %1862
      %1864 = vrot.lane.b32.xlu0 %v1665, 80
      %v1865 = vpop.permute.xlu0 %1864
      %v1866 = vsel %vm1455, %v1851, 0
      %v1868 = vsel %vm1455, %v1853, 0
      %v1870 = vsel %vm1455, %v1855, 0
      %v1872 = vsel %vm1455, %v1857, 0
      %v1874 = vsel %vm1455, %v1859, 0
      %v1876 = vsel %vm1455, %v1861, 0
      %v1878 = vsel %vm1455, %v1863, 0
      %v1880 = vsel %vm1455, %v1865, 0
      %1882 = vmatpush.xpose.msra.mxu0 0.0
      %1883 = vmatpush.xpose.msra.mxu0 0.0
      %1884 = vmatpush.xpose.msra.mxu0 0.0
      %1885 = vmatpush.xpose.msra.mxu0 0.0
      %1886 = vmatpush.xpose.msra.mxu0 0.0
      %1887 = vmatpush.xpose.msra.mxu0 0.0
      %1888 = vmatpush.xpose.msra.mxu0 0.0
      %1889 = vmatpush.xpose.msra.mxu0 0.0
      %1890 = vmatpush.xpose.msra.mxu0 0.0
      %1891 = vmatpush.xpose.msra.mxu0 0.0
      %1892 = vmatpush.xpose.msra.mxu0 0.0
      %1893 = vmatpush.xpose.msra.mxu0 0.0
      %1894 = vmatpush.xpose.msra.mxu0 %v1880
      %1895 = vmatpush.xpose.msra.mxu0 %v1878
      %1896 = vmatpush.xpose.msra.mxu0 %v1876
      %1897 = vmatpush.xpose.msra.mxu0 %v1874
      %1898 = vmatmul.f32.gmra.mxu0 %v1866
      %v1899 = vpop.f32.mrf.mxu0
      %v1900 = vadd.f32 0.0, %v1899
      %1901 = vmatmul.f32.gmra.mxu0 %v1868
      %v1902 = vpop.f32.mrf.mxu0
      %v1903 = vadd.f32 0.0, %v1902
      %1904 = vmatmul.f32.gmra.mxu0 %v1870
      %v1905 = vpop.f32.mrf.mxu0
      %v1906 = vadd.f32 0.0, %v1905
      %1907 = vmatmul.f32.gmra.mxu0 %v1872
      %v1908 = vpop.f32.mrf.mxu0
      %v1909 = vadd.f32 0.0, %v1908
      %1910 = vdwg.mxu0
      %v1911 = vmul.f32 %v1900, 0.25
      %v1912 = vmul.f32 %v1903, 0.25
      %v1913 = vmul.f32 %v1906, 0.25
      %v1914 = vmul.f32 %v1909, 0.25
      %v1915 = vadd.f32 %v1911, %v515
      %v1916 = vadd.f32 %v1912, %v516
      %v1917 = vadd.f32 %v1913, %v517
      %v1918 = vadd.f32 %v1914, %v518
      %v1919 = vsel %vm721, %v1915, -inf
      %1920 = vmax.xlane.f32.xlu0 %v1919
      %v1921 = vpop.xlane.xlu0 %1920
      %v1922 = vsel %vm721, %v1916, -inf
      %1923 = vmax.xlane.f32.xlu0 %v1922
      %v1924 = vpop.xlane.xlu0 %1923
      %v1925 = vsel %vm721, %v1917, -inf
      %1926 = vmax.xlane.f32.xlu0 %v1925
      %v1927 = vpop.xlane.xlu0 %1926
      %v1928 = vsel %vm731, %v1918, -inf
      %1929 = vmax.xlane.f32.xlu0 %v1928
      %v1930 = vpop.xlane.xlu0 %1929
      %v1931 = vmax.f32 %v1921, 0.0
      %v1932 = vmax.f32 %v1924, 0.0
      %v1933 = vmax.f32 %v1927, 0.0
      %v1934 = vmax.f32 %v1930, 0.0
      %v1935 = vsub.f32 %v1915, %v1931
      %v1936 = vsub.f32 %v1916, %v1932
      %v1937 = vsub.f32 %v1917, %v1933
      %v1938 = vsub.f32 %v1918, %v1934
      %v1939 = vmul.f32 %v1935, 1.442695
      %v1940 = vpow.pop %v1939
      %v1941 = vmul.f32 %v1936, 1.442695
      %v1942 = vpow.pop %v1941
      %v1943 = vmul.f32 %v1937, 1.442695
      %v1944 = vpow.pop %v1943
      %v1945 = vmul.f32 %v1938, 1.442695
      %v1946 = vpow.pop %v1945
      %v1947 = vsel %vm721, %v1940, 0.0
      %1948 = vadd.xlane.f32.xlu0 %v1947
      %v1949 = vpop.xlane.xlu0 %1948
      %v1950 = vsel %vm721, %v1942, 0.0
      %1951 = vadd.xlane.f32.xlu0 %v1950
      %v1952 = vpop.xlane.xlu0 %1951
      %v1953 = vsel %vm721, %v1944, 0.0
      %1954 = vadd.xlane.f32.xlu0 %v1953
      %v1955 = vpop.xlane.xlu0 %1954
      %v1956 = vsel %vm731, %v1946, 0.0
      %1957 = vadd.xlane.f32.xlu0 %v1956
      %v1958 = vpop.xlane.xlu0 %1957
      %v1959 = vsub.f32 0.0, %v1931
      %v1960 = vsub.f32 0.0, %v1932
      %v1961 = vsub.f32 0.0, %v1933
      %v1962 = vsub.f32 0.0, %v1934
      %v1963 = vmul.f32 %v1959, 1.442695
      %v1964 = vpow.pop %v1963
      %v1965 = vmul.f32 %v1960, 1.442695
      %v1966 = vpow.pop %v1965
      %v1967 = vmul.f32 %v1961, 1.442695
      %v1968 = vpow.pop %v1967
      %v1969 = vmul.f32 %v1962, 1.442695
      %v1970 = vpow.pop %v1969
      %v1971 = vadd.f32 %v1949, %v1964
      %v1972 = vadd.f32 %v1952, %v1966
      %v1973 = vadd.f32 %v1955, %v1968
      %v1974 = vadd.f32 %v1958, %v1970
      %v1975 = vrcp.pop %v1971
      %v1976 = vrcp.pop %v1972
      %v1977 = vrcp.pop %v1973
      %v1978 = vrcp.pop %v1974
      %v1979 = vmul.f32 %v1940, %v1975
      %v1980 = vmul.f32 %v1942, %v1976
      %v1981 = vmul.f32 %v1944, %v1977
      %v1982 = vmul.f32 %v1946, %v1978
      %1983 = vrot.lane.b32.xlu0 %v1656, 48
      %v1984 = vpop.permute.xlu0 %1983
      %1985 = vrot.lane.b32.xlu0 %v1659, 48
      %v1986 = vpop.permute.xlu0 %1985
      %1987 = vrot.lane.b32.xlu0 %v1662, 48
      %v1988 = vpop.permute.xlu0 %1987
      %1989 = vrot.lane.b32.xlu0 %v1665, 48
      %v1990 = vpop.permute.xlu0 %1989
      %v1995 = vsel %vm721, %v1979, 0
      %v1998 = vsel %vm721, %v1980, 0
      %v2001 = vsel %vm721, %v1981, 0
      %v2004 = vsel %vm721, %v1982, 0
      %v2006 = vsel %vm810, %v1990, 0
      %2008 = vmatpush.msra.mxu0 0.0
      %2009 = vmatpush.msra.mxu0 0.0
      %2010 = vmatpush.msra.mxu0 0.0
      %2011 = vmatpush.msra.mxu0 0.0
      %2012 = vmatpush.msra.mxu0 0.0
      %2013 = vmatpush.msra.mxu0 0.0
      %2014 = vmatpush.msra.mxu0 0.0
      %2015 = vmatpush.msra.mxu0 0.0
      %2016 = vmatpush.msra.mxu0 0.0
      %2017 = vmatpush.msra.mxu0 0.0
      %2018 = vmatpush.msra.mxu0 0.0
      %2019 = vmatpush.msra.mxu0 0.0
      %2020 = vmatpush.msra.mxu0 %v2006
      %2021 = vmatpush.msra.mxu0 %v1988
      %2022 = vmatpush.msra.mxu0 %v1986
      %2023 = vmatpush.msra.mxu0 %v1984
      %2024 = vmatmul.f32.gmra.mxu0 %v1995
      %v2025 = vpop.f32.mrf.mxu0
      %v2026 = vadd.f32 0.0, %v2025
      %2027 = vmatmul.f32.gmra.mxu0 %v1998
      %v2028 = vpop.f32.mrf.mxu0
      %v2029 = vadd.f32 0.0, %v2028
      %2030 = vmatmul.f32.gmra.mxu0 %v2001
      %v2031 = vpop.f32.mrf.mxu0
      %v2032 = vadd.f32 0.0, %v2031
      %2033 = vmatmul.f32.gmra.mxu0 %v2004
      %v2034 = vpop.f32.mrf.mxu0
      %v2035 = vadd.f32 0.0, %v2034
      %2036 = vdwg.mxu0
      %2041 = vrot.lane.b32.xlu0 %v2026, 16
      %v2042 = vpop.permute.xlu0 %2041
      %2043 = vrot.lane.b32.xlu0 %v2029, 16
      %v2044 = vpop.permute.xlu0 %2043
      %2045 = vrot.lane.b32.xlu0 %v2032, 16
      %v2046 = vpop.permute.xlu0 %2045
      %2047 = vrot.lane.b32.xlu0 %v2035, 16
      %v2048 = vpop.permute.xlu0 %2047
      %v2053 = vsel %vm1455, %v1839, %v2042
      %v2054 = vsel %vm1455, %v1842, %v2044
      %v2055 = vsel %vm1455, %v1845, %v2046
      %v2056 = vsel %vm1455, %v1848, %v2048
      %v2057 = vperm.slane %v602, 5
      %v2059 = vsel %vm613, %v2053, 0
      %v2062 = vsel %vm613, %v2054, 0
      %v2065 = vsel %vm613, %v2055, 0
      %v2068 = vsel %vm613, %v2056, 0
      %2070 = vmatpush.msra.mxu0 0.0
      %2071 = vmatpush.msra.mxu0 0.0
      %2072 = vmatpush.msra.mxu0 0.0
      %2073 = vmatpush.msra.mxu0 0.0
      %2074 = vmatpush.msra.mxu0 0.0
      %2075 = vmatpush.msra.mxu0 0.0
      %2076 = vmatpush.msra.mxu0 0.0
      %2077 = vmatpush.msra.mxu0 0.0
      %2078 = vmatpush.msra.mxu0 0.0
      %2079 = vmatpush.msra.mxu0 0.0
      %2080 = vmatpush.msra.mxu0 0.0
      %2081 = vmatpush.msra.mxu0 0.0
      %2082 = vmatpush.msra.mxu0 %v1624
      %2083 = vmatpush.msra.mxu0 %v1623
      %2084 = vmatpush.msra.mxu0 %v1622
      %2085 = vmatpush.msra.mxu0 %v1621
      %2086 = vmatmul.f32.gmra.mxu0 %v2059
      %v2087 = vpop.f32.mrf.mxu0
      %v2088 = vadd.f32 %v2057, %v2087
      %2089 = vmatmul.f32.gmra.mxu0 %v2062
      %v2090 = vpop.f32.mrf.mxu0
      %v2091 = vadd.f32 %v2057, %v2090
      %2092 = vmatmul.f32.gmra.mxu0 %v2065
      %v2093 = vpop.f32.mrf.mxu0
      %v2094 = vadd.f32 %v2057, %v2093
      %2095 = vmatmul.f32.gmra.mxu0 %v2068
      %v2096 = vpop.f32.mrf.mxu0
      %v2097 = vadd.f32 %v2057, %v2096
      %2098 = vdwg.mxu0
      %v2099 = vadd.f32 %v1613, %v2088
      %v2100 = vadd.f32 %v1614, %v2091
      %v2101 = vadd.f32 %v1615, %v2094
      %v2102 = vadd.f32 %v1616, %v2097
      %v2103 = vsel %vm613, %v2099, 0.0
      %2104 = vadd.xlane.f32.xlu0 %v2103
      %v2105 = vpop.xlane.xlu0 %2104
      %v2106 = vsel %vm613, %v2100, 0.0
      %2107 = vadd.xlane.f32.xlu0 %v2106
      %v2108 = vpop.xlane.xlu0 %2107
      %v2109 = vsel %vm613, %v2101, 0.0
      %2110 = vadd.xlane.f32.xlu0 %v2109
      %v2111 = vpop.xlane.xlu0 %2110
      %v2112 = vsel %vm1520, %v2102, 0.0
      %2113 = vadd.xlane.f32.xlu0 %v2112
      %v2114 = vpop.xlane.xlu0 %2113
      %v2115 = vmul.f32 %v2105, %v1530
      %v2116 = vmul.f32 %v2108, %v1530
      %v2117 = vmul.f32 %v2111, %v1530
      %v2118 = vmul.f32 %v2114, %v1530
      %v2119 = vsub.f32 %v2099, %v2115
      %v2120 = vsub.f32 %v2100, %v2116
      %v2121 = vsub.f32 %v2101, %v2117
      %v2122 = vsub.f32 %v2102, %v2118
      %v2123 = vmul.f32 %v2119, %v2119
      %v2124 = vmul.f32 %v2120, %v2120
      %v2125 = vmul.f32 %v2121, %v2121
      %v2126 = vmul.f32 %v2122, %v2122
      %v2127 = vsel %vm613, %v2123, 0.0
      %2128 = vadd.xlane.f32.xlu0 %v2127
      %v2129 = vpop.xlane.xlu0 %2128
      %v2130 = vsel %vm613, %v2124, 0.0
      %2131 = vadd.xlane.f32.xlu0 %v2130
      %v2132 = vpop.xlane.xlu0 %2131
      %v2133 = vsel %vm613, %v2125, 0.0
      %2134 = vadd.xlane.f32.xlu0 %v2133
      %v2135 = vpop.xlane.xlu0 %2134
      %v2136 = vsel %vm1520, %v2126, 0.0
      %2137 = vadd.xlane.f32.xlu0 %v2136
      %v2138 = vpop.xlane.xlu0 %2137
      %v2139 = vmul.f32 %v2129, %v1530
      %v2140 = vmul.f32 %v2132, %v1530
      %v2141 = vmul.f32 %v2135, %v1530
      %v2142 = vmul.f32 %v2138, %v1530
      %v2143 = vadd.f32 %v2139, 1e-05
      %v2144 = vadd.f32 %v2140, 1e-05
      %v2145 = vadd.f32 %v2141, 1e-05
      %v2146 = vadd.f32 %v2142, 1e-05
      %v2147 = vrsqrt.pop %v2143
      %v2148 = vmul.f32 %v2147, %v2143
      %v2149 = vmul.f32 %v2148, %v2147
      %v2150 = vmul.f32 0.5, %v2149
      %v2151 = vsub.f32 1.5, %v2150
      %v2152 = vmul.f32 %v2147, %v2151
      %vm2153 = vweird.f32 %v2143
      %vm2154 = vweird.f32 %v2147
      %vm2155 = vmor %vm2153, %vm2154
      %v2156 = vsel %vm2155, %v2147, %v2152
      %v2157 = vrsqrt.pop %v2144
      %v2158 = vmul.f32 %v2157, %v2144
      %v2159 = vmul.f32 %v2158, %v2157
      %v2160 = vmul.f32 0.5, %v2159
      %v2161 = vsub.f32 1.5, %v2160
      %v2162 = vmul.f32 %v2157, %v2161
      %vm2163 = vweird.f32 %v2144
      %vm2164 = vweird.f32 %v2157
      %vm2165 = vmor %vm2163, %vm2164
      %v2166 = vsel %vm2165, %v2157, %v2162
      %v2167 = vrsqrt.pop %v2145
      %v2168 = vmul.f32 %v2167, %v2145
      %v2169 = vmul.f32 %v2168, %v2167
      %v2170 = vmul.f32 0.5, %v2169
      %v2171 = vsub.f32 1.5, %v2170
      %v2172 = vmul.f32 %v2167, %v2171
      %vm2173 = vweird.f32 %v2145
      %vm2174 = vweird.f32 %v2167
      %vm2175 = vmor %vm2173, %vm2174
      %v2176 = vsel %vm2175, %v2167, %v2172
      %v2177 = vrsqrt.pop %v2146
      %v2178 = vmul.f32 %v2177, %v2146
      %v2179 = vmul.f32 %v2178, %v2177
      %v2180 = vmul.f32 0.5, %v2179
      %v2181 = vsub.f32 1.5, %v2180
      %v2182 = vmul.f32 %v2177, %v2181
      %vm2183 = vweird.f32 %v2146
      %vm2184 = vweird.f32 %v2177
      %vm2185 = vmor %vm2183, %vm2184
      %v2186 = vsel %vm2185, %v2177, %v2182
      %v2187 = vmul.f32 %v2119, %v2156
      %v2188 = vmul.f32 %v2120, %v2166
      %v2189 = vmul.f32 %v2121, %v2176
      %v2190 = vmul.f32 %v2122, %v2186
      %v2191 = vperm.slane %v602, 6
      %v2192 = vmul.f32 %v2187, %v2191
      %v2193 = vmul.f32 %v2188, %v2191
      %v2194 = vmul.f32 %v2189, %v2191
      %v2195 = vmul.f32 %v2190, %v2191
      %v2196 = vperm.slane %v602, 7
      %v2197 = vadd.f32 %v2192, %v2196
      %v2198 = vadd.f32 %v2193, %v2196
      %v2199 = vadd.f32 %v2194, %v2196
      %v2200 = vadd.f32 %v2195, %v2196
      %v2201 = vld [vmem:[%s10] sm:$0xff]
      %v2202 = vld [vmem:[%s10 + $0x8] sm:$0xff]
      %v2203 = vld [vmem:[%s10 + $0x10] sm:$0xff]
      %v2204 = vld [vmem:[%s10 + $0x18] sm:$0xff]
      %v2205 = vperm.slane %v603, 0
      %v2207 = vsel %vm613, %v2197, 0
      %v2210 = vsel %vm613, %v2198, 0
      %v2213 = vsel %vm613, %v2199, 0
      %v2216 = vsel %vm613, %v2200, 0
      %2218 = vmatpush.msra.mxu0 0.0
      %2219 = vmatpush.msra.mxu0 0.0
      %2220 = vmatpush.msra.mxu0 0.0
      %2221 = vmatpush.msra.mxu0 0.0
      %2222 = vmatpush.msra.mxu0 0.0
      %2223 = vmatpush.msra.mxu0 0.0
      %2224 = vmatpush.msra.mxu0 0.0
      %2225 = vmatpush.msra.mxu0 0.0
      %2226 = vmatpush.msra.mxu0 0.0
      %2227 = vmatpush.msra.mxu0 0.0
      %2228 = vmatpush.msra.mxu0 0.0
      %2229 = vmatpush.msra.mxu0 0.0
      %2230 = vmatpush.msra.mxu0 %v2204
      %2231 = vmatpush.msra.mxu0 %v2203
      %2232 = vmatpush.msra.mxu0 %v2202
      %2233 = vmatpush.msra.mxu0 %v2201
      %2234 = vmatmul.f32.gmra.mxu0 %v2207
      %v2235 = vpop.f32.mrf.mxu0
      %v2236 = vadd.f32 %v2205, %v2235
      %2237 = vmatmul.f32.gmra.mxu0 %v2210
      %v2238 = vpop.f32.mrf.mxu0
      %v2239 = vadd.f32 %v2205, %v2238
      %2240 = vmatmul.f32.gmra.mxu0 %v2213
      %v2241 = vpop.f32.mrf.mxu0
      %v2242 = vadd.f32 %v2205, %v2241
      %2243 = vmatmul.f32.gmra.mxu0 %v2216
      %v2244 = vpop.f32.mrf.mxu0
      %v2245 = vadd.f32 %v2205, %v2244
      %2246 = vdwg.mxu0
      %v2247 = vmax.f32 %v2236, 0.0
      %v2248 = vmax.f32 %v2239, 0.0
      %v2249 = vmax.f32 %v2242, 0.0
      %v2250 = vmax.f32 %v2245, 0.0
      %v2251 = vld [vmem:[%s11] sm:$0xff]
      %v2252 = vld [vmem:[%s11 + $0x8] sm:$0xff]
      %v2253 = vld [vmem:[%s11 + $0x10] sm:$0xff]
      %v2254 = vld [vmem:[%s11 + $0x18] sm:$0xff]
      %v2255 = vld [vmem:[%s11 + $0x20] sm:$0xff]
      %v2256 = vld [vmem:[%s11 + $0x28] sm:$0xff]
      %v2257 = vld [vmem:[%s11 + $0x30] sm:$0xff]
      %v2258 = vld [vmem:[%s11 + $0x38] sm:$0xff]
      %v2259 = vperm.slane %v603, 1
      %vm2260 = vcmask 523264
      %v2262 = vsel %vm2260, %v2247, 0
      %v2265 = vsel %vm2260, %v2248, 0
      %v2268 = vsel %vm2260, %v2249, 0
      %v2271 = vsel %vm2260, %v2250, 0
      %2273 = vmatpush.msra.mxu0 0.0
      %2274 = vmatpush.msra.mxu0 0.0
      %2275 = vmatpush.msra.mxu0 0.0
      %2276 = vmatpush.msra.mxu0 0.0
      %2277 = vmatpush.msra.mxu0 0.0
      %2278 = vmatpush.msra.mxu0 0.0
      %2279 = vmatpush.msra.mxu0 0.0
      %2280 = vmatpush.msra.mxu0 0.0
      %2281 = vmatpush.msra.mxu0 %v2258
      %2282 = vmatpush.msra.mxu0 %v2257
      %2283 = vmatpush.msra.mxu0 %v2256
      %2284 = vmatpush.msra.mxu0 %v2255
      %2285 = vmatpush.msra.mxu0 %v2254
      %2286 = vmatpush.msra.mxu0 %v2253
      %2287 = vmatpush.msra.mxu0 %v2252
      %2288 = vmatpush.msra.mxu0 %v2251
      %2289 = vmatmul.f32.gmra.mxu0 %v2262
      %v2290 = vpop.f32.mrf.mxu0
      %v2291 = vadd.f32 %v2259, %v2290
      %2292 = vmatmul.f32.gmra.mxu0 %v2265
      %v2293 = vpop.f32.mrf.mxu0
      %v2294 = vadd.f32 %v2259, %v2293
      %2295 = vmatmul.f32.gmra.mxu0 %v2268
      %v2296 = vpop.f32.mrf.mxu0
      %v2297 = vadd.f32 %v2259, %v2296
      %2298 = vmatmul.f32.gmra.mxu0 %v2271
      %v2299 = vpop.f32.mrf.mxu0
      %v2300 = vadd.f32 %v2259, %v2299
      %2301 = vdwg.mxu0
      %v2302 = vadd.f32 %v2197, %v2291
      %v2303 = vadd.f32 %v2198, %v2294
      %v2304 = vadd.f32 %v2199, %v2297
      %v2305 = vadd.f32 %v2200, %v2300
      %v2306 = vsel %vm613, %v2302, 0.0
      %2307 = vadd.xlane.f32.xlu0 %v2306
      %v2308 = vpop.xlane.xlu0 %2307
      %v2309 = vsel %vm613, %v2303, 0.0
      %2310 = vadd.xlane.f32.xlu0 %v2309
      %v2311 = vpop.xlane.xlu0 %2310
      %v2312 = vsel %vm613, %v2304, 0.0
      %2313 = vadd.xlane.f32.xlu0 %v2312
      %v2314 = vpop.xlane.xlu0 %2313
      %v2315 = vsel %vm1520, %v2305, 0.0
      %2316 = vadd.xlane.f32.xlu0 %v2315
      %v2317 = vpop.xlane.xlu0 %2316
      %v2318 = vmul.f32 %v2308, %v1530
      %v2319 = vmul.f32 %v2311, %v1530
      %v2320 = vmul.f32 %v2314, %v1530
      %v2321 = vmul.f32 %v2317, %v1530
      %v2322 = vsub.f32 %v2302, %v2318
      %v2323 = vsub.f32 %v2303, %v2319
      %v2324 = vsub.f32 %v2304, %v2320
      %v2325 = vsub.f32 %v2305, %v2321
      %v2326 = vmul.f32 %v2322, %v2322
      %v2327 = vmul.f32 %v2323, %v2323
      %v2328 = vmul.f32 %v2324, %v2324
      %v2329 = vmul.f32 %v2325, %v2325
      %v2330 = vsel %vm613, %v2326, 0.0
      %2331 = vadd.xlane.f32.xlu0 %v2330
      %v2332 = vpop.xlane.xlu0 %2331
      %v2333 = vsel %vm613, %v2327, 0.0
      %2334 = vadd.xlane.f32.xlu0 %v2333
      %v2335 = vpop.xlane.xlu0 %2334
      %v2336 = vsel %vm613, %v2328, 0.0
      %2337 = vadd.xlane.f32.xlu0 %v2336
      %v2338 = vpop.xlane.xlu0 %2337
      %v2339 = vsel %vm1520, %v2329, 0.0
      %2340 = vadd.xlane.f32.xlu0 %v2339
      %v2341 = vpop.xlane.xlu0 %2340
      %v2342 = vmul.f32 %v2332, %v1530
      %v2343 = vmul.f32 %v2335, %v1530
      %v2344 = vmul.f32 %v2338, %v1530
      %v2345 = vmul.f32 %v2341, %v1530
      %v2346 = vadd.f32 %v2342, 1e-05
      %v2347 = vadd.f32 %v2343, 1e-05
      %v2348 = vadd.f32 %v2344, 1e-05
      %v2349 = vadd.f32 %v2345, 1e-05
      %v2350 = vrsqrt.pop %v2346
      %v2351 = vmul.f32 %v2350, %v2346
      %v2352 = vmul.f32 %v2351, %v2350
      %v2353 = vmul.f32 0.5, %v2352
      %v2354 = vsub.f32 1.5, %v2353
      %v2355 = vmul.f32 %v2350, %v2354
      %vm2356 = vweird.f32 %v2346
      %vm2357 = vweird.f32 %v2350
      %vm2358 = vmor %vm2356, %vm2357
      %v2359 = vsel %vm2358, %v2350, %v2355
      %v2360 = vrsqrt.pop %v2347
      %v2361 = vmul.f32 %v2360, %v2347
      %v2362 = vmul.f32 %v2361, %v2360
      %v2363 = vmul.f32 0.5, %v2362
      %v2364 = vsub.f32 1.5, %v2363
      %v2365 = vmul.f32 %v2360, %v2364
      %vm2366 = vweird.f32 %v2347
      %vm2367 = vweird.f32 %v2360
      %vm2368 = vmor %vm2366, %vm2367
      %v2369 = vsel %vm2368, %v2360, %v2365
      %v2370 = vrsqrt.pop %v2348
      %v2371 = vmul.f32 %v2370, %v2348
      %v2372 = vmul.f32 %v2371, %v2370
      %v2373 = vmul.f32 0.5, %v2372
      %v2374 = vsub.f32 1.5, %v2373
      %v2375 = vmul.f32 %v2370, %v2374
      %vm2376 = vweird.f32 %v2348
      %vm2377 = vweird.f32 %v2370
      %vm2378 = vmor %vm2376, %vm2377
      %v2379 = vsel %vm2378, %v2370, %v2375
      %v2380 = vrsqrt.pop %v2349
      %v2381 = vmul.f32 %v2380, %v2349
      %v2382 = vmul.f32 %v2381, %v2380
      %v2383 = vmul.f32 0.5, %v2382
      %v2384 = vsub.f32 1.5, %v2383
      %v2385 = vmul.f32 %v2380, %v2384
      %vm2386 = vweird.f32 %v2349
      %vm2387 = vweird.f32 %v2380
      %vm2388 = vmor %vm2386, %vm2387
      %v2389 = vsel %vm2388, %v2380, %v2385
      %v2390 = vmul.f32 %v2322, %v2359
      %v2391 = vmul.f32 %v2323, %v2369
      %v2392 = vmul.f32 %v2324, %v2379
      %v2393 = vmul.f32 %v2325, %v2389
      %v2394 = vperm.slane %v603, 2
      %v2395 = vmul.f32 %v2390, %v2394
      %v2396 = vmul.f32 %v2391, %v2394
      %v2397 = vmul.f32 %v2392, %v2394
      %v2398 = vmul.f32 %v2393, %v2394
      %v2399 = vperm.slane %v603, 3
      %v2400 = vadd.f32 %v2395, %v2399
      %v2401 = vadd.f32 %v2396, %v2399
      %v2402 = vadd.f32 %v2397, %v2399
      %v2403 = vadd.f32 %v2398, %v2399
      %s2404 = scalar_lea.vmem %s12, 16
      %v2405 = vld [vmem:[%s2404] sm:$0xff]
      %v2406 = vld [vmem:[%s2404 + $0x8] sm:$0xf]
      %s2407 = scalar_lea.vmem %s6, 32
      %v2408 = vld [vmem:[%s2407] sm:$0xff]
      %v2409 = vld [vmem:[%s2407 + $0x8] sm:$0xff]
      %v2410 = vld [vmem:[%s2407 + $0x10] sm:$0xff]
      %v2411 = vld [vmem:[%s2407 + $0x18] sm:$0xff]
      %s2412 = scalar_lea.vmem %s7, 32
      %v2413 = vld [vmem:[%s2412] sm:$0xff]
      %v2414 = vld [vmem:[%s2412 + $0x8] sm:$0xff]
      %v2415 = vld [vmem:[%s2412 + $0x10] sm:$0xff]
      %v2416 = vld [vmem:[%s2412 + $0x18] sm:$0xff]
      %v2417 = vperm.slane %v2405, 0
      %v2419 = vsel %vm613, %v2400, 0
      %v2422 = vsel %vm613, %v2401, 0
      %v2425 = vsel %vm613, %v2402, 0
      %v2428 = vsel %vm613, %v2403, 0
      %2430 = vmatpush.msra.mxu0 0.0
      %2431 = vmatpush.msra.mxu0 0.0
      %2432 = vmatpush.msra.mxu0 0.0
      %2433 = vmatpush.msra.mxu0 0.0
      %2434 = vmatpush.msra.mxu0 0.0
      %2435 = vmatpush.msra.mxu0 0.0
      %2436 = vmatpush.msra.mxu0 0.0
      %2437 = vmatpush.msra.mxu0 0.0
      %2438 = vmatpush.msra.mxu0 0.0
      %2439 = vmatpush.msra.mxu0 0.0
      %2440 = vmatpush.msra.mxu0 0.0
      %2441 = vmatpush.msra.mxu0 0.0
      %2442 = vmatpush.msra.mxu0 %v2411
      %2443 = vmatpush.msra.mxu0 %v2410
      %2444 = vmatpush.msra.mxu0 %v2409
      %2445 = vmatpush.msra.mxu0 %v2408
      %2446 = vmatmul.f32.gmra.mxu0 %v2419
      %v2447 = vpop.f32.mrf.mxu0
      %v2448 = vadd.f32 %v2417, %v2447
      %2449 = vmatmul.f32.gmra.mxu0 %v2422
      %v2450 = vpop.f32.mrf.mxu0
      %v2451 = vadd.f32 %v2417, %v2450
      %2452 = vmatmul.f32.gmra.mxu0 %v2425
      %v2453 = vpop.f32.mrf.mxu0
      %v2454 = vadd.f32 %v2417, %v2453
      %2455 = vmatmul.f32.gmra.mxu0 %v2428
      %v2456 = vpop.f32.mrf.mxu0
      %v2457 = vadd.f32 %v2417, %v2456
      %2458 = vdwg.mxu0
      %2463 = vrot.lane.b32.xlu0 %v2448, 96
      %v2464 = vpop.permute.xlu0 %2463
      %2465 = vrot.lane.b32.xlu0 %v2451, 96
      %v2466 = vpop.permute.xlu0 %2465
      %2467 = vrot.lane.b32.xlu0 %v2454, 96
      %v2468 = vpop.permute.xlu0 %2467
      %2469 = vrot.lane.b32.xlu0 %v2457, 96
      %v2470 = vpop.permute.xlu0 %2469
      %v2471 = vsel %vm667, %v2448, 0
      %v2473 = vsel %vm667, %v2451, 0
      %v2475 = vsel %vm667, %v2454, 0
      %v2477 = vsel %vm667, %v2457, 0
      %v2479 = vsel %vm667, %v2464, 0
      %v2481 = vsel %vm667, %v2466, 0
      %v2483 = vsel %vm667, %v2468, 0
      %v2485 = vsel %vm667, %v2470, 0
      %2487 = vmatpush.xpose.msra.mxu0 0.0
      %2488 = vmatpush.xpose.msra.mxu0 0.0
      %2489 = vmatpush.xpose.msra.mxu0 0.0
      %2490 = vmatpush.xpose.msra.mxu0 0.0
      %2491 = vmatpush.xpose.msra.mxu0 0.0
      %2492 = vmatpush.xpose.msra.mxu0 0.0
      %2493 = vmatpush.xpose.msra.mxu0 0.0
      %2494 = vmatpush.xpose.msra.mxu0 0.0
      %2495 = vmatpush.xpose.msra.mxu0 0.0
      %2496 = vmatpush.xpose.msra.mxu0 0.0
      %2497 = vmatpush.xpose.msra.mxu0 0.0
      %2498 = vmatpush.xpose.msra.mxu0 0.0
      %2499 = vmatpush.xpose.msra.mxu0 %v2485
      %2500 = vmatpush.xpose.msra.mxu0 %v2483
      %2501 = vmatpush.xpose.msra.mxu0 %v2481
      %2502 = vmatpush.xpose.msra.mxu0 %v2479
      %2503 = vmatmul.f32.gmra.mxu0 %v2471
      %v2504 = vpop.f32.mrf.mxu0
      %v2505 = vadd.f32 0.0, %v2504
      %2506 = vmatmul.f32.gmra.mxu0 %v2473
      %v2507 = vpop.f32.mrf.mxu0
      %v2508 = vadd.f32 0.0, %v2507
      %2509 = vmatmul.f32.gmra.mxu0 %v2475
      %v2510 = vpop.f32.mrf.mxu0
      %v2511 = vadd.f32 0.0, %v2510
      %2512 = vmatmul.f32.gmra.mxu0 %v2477
      %v2513 = vpop.f32.mrf.mxu0
      %v2514 = vadd.f32 0.0, %v2513
      %2515 = vdwg.mxu0
      %v2516 = vmul.f32 %v2505, 0.35355338
      %v2517 = vmul.f32 %v2508, 0.35355338
      %v2518 = vmul.f32 %v2511, 0.35355338
      %v2519 = vmul.f32 %v2514, 0.35355338
      %v2520 = vadd.f32 %v2516, %v511
      %v2521 = vadd.f32 %v2517, %v512
      %v2522 = vadd.f32 %v2518, %v513
      %v2523 = vadd.f32 %v2519, %v514
      %v2524 = vsel %vm721, %v2520, -inf
      %2525 = vmax.xlane.f32.xlu0 %v2524
      %v2526 = vpop.xlane.xlu0 %2525
      %v2527 = vsel %vm721, %v2521, -inf
      %2528 = vmax.xlane.f32.xlu0 %v2527
      %v2529 = vpop.xlane.xlu0 %2528
      %v2530 = vsel %vm721, %v2522, -inf
      %2531 = vmax.xlane.f32.xlu0 %v2530
      %v2532 = vpop.xlane.xlu0 %2531
      %v2533 = vsel %vm731, %v2523, -inf
      %2534 = vmax.xlane.f32.xlu0 %v2533
      %v2535 = vpop.xlane.xlu0 %2534
      %v2536 = vmax.f32 %v2526, 0.0
      %v2537 = vmax.f32 %v2529, 0.0
      %v2538 = vmax.f32 %v2532, 0.0
      %v2539 = vmax.f32 %v2535, 0.0
      %v2540 = vsub.f32 %v2520, %v2536
      %v2541 = vsub.f32 %v2521, %v2537
      %v2542 = vsub.f32 %v2522, %v2538
      %v2543 = vsub.f32 %v2523, %v2539
      %v2544 = vmul.f32 %v2540, 1.442695
      %v2545 = vpow.pop %v2544
      %v2546 = vmul.f32 %v2541, 1.442695
      %v2547 = vpow.pop %v2546
      %v2548 = vmul.f32 %v2542, 1.442695
      %v2549 = vpow.pop %v2548
      %v2550 = vmul.f32 %v2543, 1.442695
      %v2551 = vpow.pop %v2550
      %v2552 = vsel %vm721, %v2545, 0.0
      %2553 = vadd.xlane.f32.xlu0 %v2552
      %v2554 = vpop.xlane.xlu0 %2553
      %v2555 = vsel %vm721, %v2547, 0.0
      %2556 = vadd.xlane.f32.xlu0 %v2555
      %v2557 = vpop.xlane.xlu0 %2556
      %v2558 = vsel %vm721, %v2549, 0.0
      %2559 = vadd.xlane.f32.xlu0 %v2558
      %v2560 = vpop.xlane.xlu0 %2559
      %v2561 = vsel %vm731, %v2551, 0.0
      %2562 = vadd.xlane.f32.xlu0 %v2561
      %v2563 = vpop.xlane.xlu0 %2562
      %v2564 = vsub.f32 0.0, %v2536
      %v2565 = vsub.f32 0.0, %v2537
      %v2566 = vsub.f32 0.0, %v2538
      %v2567 = vsub.f32 0.0, %v2539
      %v2568 = vmul.f32 %v2564, 1.442695
      %v2569 = vpow.pop %v2568
      %v2570 = vmul.f32 %v2565, 1.442695
      %v2571 = vpow.pop %v2570
      %v2572 = vmul.f32 %v2566, 1.442695
      %v2573 = vpow.pop %v2572
      %v2574 = vmul.f32 %v2567, 1.442695
      %v2575 = vpow.pop %v2574
      %v2576 = vadd.f32 %v2554, %v2569
      %v2577 = vadd.f32 %v2557, %v2571
      %v2578 = vadd.f32 %v2560, %v2573
      %v2579 = vadd.f32 %v2563, %v2575
      %v2580 = vrcp.pop %v2576
      %v2581 = vrcp.pop %v2577
      %v2582 = vrcp.pop %v2578
      %v2583 = vrcp.pop %v2579
      %v2584 = vmul.f32 %v2545, %v2580
      %v2585 = vmul.f32 %v2547, %v2581
      %v2586 = vmul.f32 %v2549, %v2582
      %v2587 = vmul.f32 %v2551, %v2583
      %2588 = vrot.lane.b32.xlu0 %v2448, 64
      %v2589 = vpop.permute.xlu0 %2588
      %2590 = vrot.lane.b32.xlu0 %v2451, 64
      %v2591 = vpop.permute.xlu0 %2590
      %2592 = vrot.lane.b32.xlu0 %v2454, 64
      %v2593 = vpop.permute.xlu0 %2592
      %2594 = vrot.lane.b32.xlu0 %v2457, 64
      %v2595 = vpop.permute.xlu0 %2594
      %v2600 = vsel %vm721, %v2584, 0
      %v2603 = vsel %vm721, %v2585, 0
      %v2606 = vsel %vm721, %v2586, 0
      %v2609 = vsel %vm721, %v2587, 0
      %v2611 = vsel %vm810, %v2595, 0
      %2613 = vmatpush.msra.mxu0 0.0
      %2614 = vmatpush.msra.mxu0 0.0
      %2615 = vmatpush.msra.mxu0 0.0
      %2616 = vmatpush.msra.mxu0 0.0
      %2617 = vmatpush.msra.mxu0 0.0
      %2618 = vmatpush.msra.mxu0 0.0
      %2619 = vmatpush.msra.mxu0 0.0
      %2620 = vmatpush.msra.mxu0 0.0
      %2621 = vmatpush.msra.mxu0 0.0
      %2622 = vmatpush.msra.mxu0 0.0
      %2623 = vmatpush.msra.mxu0 0.0
      %2624 = vmatpush.msra.mxu0 0.0
      %2625 = vmatpush.msra.mxu0 %v2611
      %2626 = vmatpush.msra.mxu0 %v2593
      %2627 = vmatpush.msra.mxu0 %v2591
      %2628 = vmatpush.msra.mxu0 %v2589
      %2629 = vmatmul.f32.gmra.mxu0 %v2600
      %v2630 = vpop.f32.mrf.mxu0
      %v2631 = vadd.f32 0.0, %v2630
      %2632 = vmatmul.f32.gmra.mxu0 %v2603
      %v2633 = vpop.f32.mrf.mxu0
      %v2634 = vadd.f32 0.0, %v2633
      %2635 = vmatmul.f32.gmra.mxu0 %v2606
      %v2636 = vpop.f32.mrf.mxu0
      %v2637 = vadd.f32 0.0, %v2636
      %2638 = vmatmul.f32.gmra.mxu0 %v2609
      %v2639 = vpop.f32.mrf.mxu0
      %v2640 = vadd.f32 0.0, %v2639
      %2641 = vdwg.mxu0
      %2642 = vrot.lane.b32.xlu0 %v2448, 120
      %v2643 = vpop.permute.xlu0 %2642
      %2644 = vrot.lane.b32.xlu0 %v2451, 120
      %v2645 = vpop.permute.xlu0 %2644
      %2646 = vrot.lane.b32.xlu0 %v2454, 120
      %v2647 = vpop.permute.xlu0 %2646
      %2648 = vrot.lane.b32.xlu0 %v2457, 120
      %v2649 = vpop.permute.xlu0 %2648
      %2650 = vrot.lane.b32.xlu0 %v2448, 88
      %v2651 = vpop.permute.xlu0 %2650
      %2652 = vrot.lane.b32.xlu0 %v2451, 88
      %v2653 = vpop.permute.xlu0 %2652
      %2654 = vrot.lane.b32.xlu0 %v2454, 88
      %v2655 = vpop.permute.xlu0 %2654
      %2656 = vrot.lane.b32.xlu0 %v2457, 88
      %v2657 = vpop.permute.xlu0 %2656
      %v2658 = vsel %vm667, %v2643, 0
      %v2660 = vsel %vm667, %v2645, 0
      %v2662 = vsel %vm667, %v2647, 0
      %v2664 = vsel %vm667, %v2649, 0
      %v2666 = vsel %vm667, %v2651, 0
      %v2668 = vsel %vm667, %v2653, 0
      %v2670 = vsel %vm667, %v2655, 0
      %v2672 = vsel %vm667, %v2657, 0
      %2674 = vmatpush.xpose.msra.mxu0 0.0
      %2675 = vmatpush.xpose.msra.mxu0 0.0
      %2676 = vmatpush.xpose.msra.mxu0 0.0
      %2677 = vmatpush.xpose.msra.mxu0 0.0
      %2678 = vmatpush.xpose.msra.mxu0 0.0
      %2679 = vmatpush.xpose.msra.mxu0 0.0
      %2680 = vmatpush.xpose.msra.mxu0 0.0
      %2681 = vmatpush.xpose.msra.mxu0 0.0
      %2682 = vmatpush.xpose.msra.mxu0 0.0
      %2683 = vmatpush.xpose.msra.mxu0 0.0
      %2684 = vmatpush.xpose.msra.mxu0 0.0
      %2685 = vmatpush.xpose.msra.mxu0 0.0
      %2686 = vmatpush.xpose.msra.mxu0 %v2672
      %2687 = vmatpush.xpose.msra.mxu0 %v2670
      %2688 = vmatpush.xpose.msra.mxu0 %v2668
      %2689 = vmatpush.xpose.msra.mxu0 %v2666
      %2690 = vmatmul.f32.gmra.mxu0 %v2658
      %v2691 = vpop.f32.mrf.mxu0
      %v2692 = vadd.f32 0.0, %v2691
      %2693 = vmatmul.f32.gmra.mxu0 %v2660
      %v2694 = vpop.f32.mrf.mxu0
      %v2695 = vadd.f32 0.0, %v2694
      %2696 = vmatmul.f32.gmra.mxu0 %v2662
      %v2697 = vpop.f32.mrf.mxu0
      %v2698 = vadd.f32 0.0, %v2697
      %2699 = vmatmul.f32.gmra.mxu0 %v2664
      %v2700 = vpop.f32.mrf.mxu0
      %v2701 = vadd.f32 0.0, %v2700
      %2702 = vdwg.mxu0
      %v2703 = vmul.f32 %v2692, 0.35355338
      %v2704 = vmul.f32 %v2695, 0.35355338
      %v2705 = vmul.f32 %v2698, 0.35355338
      %v2706 = vmul.f32 %v2701, 0.35355338
      %v2707 = vadd.f32 %v2703, %v511
      %v2708 = vadd.f32 %v2704, %v512
      %v2709 = vadd.f32 %v2705, %v513
      %v2710 = vadd.f32 %v2706, %v514
      %v2711 = vsel %vm721, %v2707, -inf
      %2712 = vmax.xlane.f32.xlu0 %v2711
      %v2713 = vpop.xlane.xlu0 %2712
      %v2714 = vsel %vm721, %v2708, -inf
      %2715 = vmax.xlane.f32.xlu0 %v2714
      %v2716 = vpop.xlane.xlu0 %2715
      %v2717 = vsel %vm721, %v2709, -inf
      %2718 = vmax.xlane.f32.xlu0 %v2717
      %v2719 = vpop.xlane.xlu0 %2718
      %v2720 = vsel %vm731, %v2710, -inf
      %2721 = vmax.xlane.f32.xlu0 %v2720
      %v2722 = vpop.xlane.xlu0 %2721
      %v2723 = vmax.f32 %v2713, 0.0
      %v2724 = vmax.f32 %v2716, 0.0
      %v2725 = vmax.f32 %v2719, 0.0
      %v2726 = vmax.f32 %v2722, 0.0
      %v2727 = vsub.f32 %v2707, %v2723
      %v2728 = vsub.f32 %v2708, %v2724
      %v2729 = vsub.f32 %v2709, %v2725
      %v2730 = vsub.f32 %v2710, %v2726
      %v2731 = vmul.f32 %v2727, 1.442695
      %v2732 = vpow.pop %v2731
      %v2733 = vmul.f32 %v2728, 1.442695
      %v2734 = vpow.pop %v2733
      %v2735 = vmul.f32 %v2729, 1.442695
      %v2736 = vpow.pop %v2735
      %v2737 = vmul.f32 %v2730, 1.442695
      %v2738 = vpow.pop %v2737
      %v2739 = vsel %vm721, %v2732, 0.0
      %2740 = vadd.xlane.f32.xlu0 %v2739
      %v2741 = vpop.xlane.xlu0 %2740
      %v2742 = vsel %vm721, %v2734, 0.0
      %2743 = vadd.xlane.f32.xlu0 %v2742
      %v2744 = vpop.xlane.xlu0 %2743
      %v2745 = vsel %vm721, %v2736, 0.0
      %2746 = vadd.xlane.f32.xlu0 %v2745
      %v2747 = vpop.xlane.xlu0 %2746
      %v2748 = vsel %vm731, %v2738, 0.0
      %2749 = vadd.xlane.f32.xlu0 %v2748
      %v2750 = vpop.xlane.xlu0 %2749
      %v2751 = vsub.f32 0.0, %v2723
      %v2752 = vsub.f32 0.0, %v2724
      %v2753 = vsub.f32 0.0, %v2725
      %v2754 = vsub.f32 0.0, %v2726
      %v2755 = vmul.f32 %v2751, 1.442695
      %v2756 = vpow.pop %v2755
      %v2757 = vmul.f32 %v2752, 1.442695
      %v2758 = vpow.pop %v2757
      %v2759 = vmul.f32 %v2753, 1.442695
      %v2760 = vpow.pop %v2759
      %v2761 = vmul.f32 %v2754, 1.442695
      %v2762 = vpow.pop %v2761
      %v2763 = vadd.f32 %v2741, %v2756
      %v2764 = vadd.f32 %v2744, %v2758
      %v2765 = vadd.f32 %v2747, %v2760
      %v2766 = vadd.f32 %v2750, %v2762
      %v2767 = vrcp.pop %v2763
      %v2768 = vrcp.pop %v2764
      %v2769 = vrcp.pop %v2765
      %v2770 = vrcp.pop %v2766
      %v2771 = vmul.f32 %v2732, %v2767
      %v2772 = vmul.f32 %v2734, %v2768
      %v2773 = vmul.f32 %v2736, %v2769
      %v2774 = vmul.f32 %v2738, %v2770
      %2775 = vrot.lane.b32.xlu0 %v2448, 56
      %v2776 = vpop.permute.xlu0 %2775
      %2777 = vrot.lane.b32.xlu0 %v2451, 56
      %v2778 = vpop.permute.xlu0 %2777
      %2779 = vrot.lane.b32.xlu0 %v2454, 56
      %v2780 = vpop.permute.xlu0 %2779
      %2781 = vrot.lane.b32.xlu0 %v2457, 56
      %v2782 = vpop.permute.xlu0 %2781
      %v2787 = vsel %vm721, %v2771, 0
      %v2790 = vsel %vm721, %v2772, 0
      %v2793 = vsel %vm721, %v2773, 0
      %v2796 = vsel %vm721, %v2774, 0
      %v2798 = vsel %vm810, %v2782, 0
      %2800 = vmatpush.msra.mxu0 0.0
      %2801 = vmatpush.msra.mxu0 0.0
      %2802 = vmatpush.msra.mxu0 0.0
      %2803 = vmatpush.msra.mxu0 0.0
      %2804 = vmatpush.msra.mxu0 0.0
      %2805 = vmatpush.msra.mxu0 0.0
      %2806 = vmatpush.msra.mxu0 0.0
      %2807 = vmatpush.msra.mxu0 0.0
      %2808 = vmatpush.msra.mxu0 0.0
      %2809 = vmatpush.msra.mxu0 0.0
      %2810 = vmatpush.msra.mxu0 0.0
      %2811 = vmatpush.msra.mxu0 0.0
      %2812 = vmatpush.msra.mxu0 %v2798
      %2813 = vmatpush.msra.mxu0 %v2780
      %2814 = vmatpush.msra.mxu0 %v2778
      %2815 = vmatpush.msra.mxu0 %v2776
      %2816 = vmatmul.f32.gmra.mxu0 %v2787
      %v2817 = vpop.f32.mrf.mxu0
      %v2818 = vadd.f32 0.0, %v2817
      %2819 = vmatmul.f32.gmra.mxu0 %v2790
      %v2820 = vpop.f32.mrf.mxu0
      %v2821 = vadd.f32 0.0, %v2820
      %2822 = vmatmul.f32.gmra.mxu0 %v2793
      %v2823 = vpop.f32.mrf.mxu0
      %v2824 = vadd.f32 0.0, %v2823
      %2825 = vmatmul.f32.gmra.mxu0 %v2796
      %v2826 = vpop.f32.mrf.mxu0
      %v2827 = vadd.f32 0.0, %v2826
      %2828 = vdwg.mxu0
      %2829 = vrot.lane.b32.xlu0 %v2448, 112
      %v2830 = vpop.permute.xlu0 %2829
      %2831 = vrot.lane.b32.xlu0 %v2451, 112
      %v2832 = vpop.permute.xlu0 %2831
      %2833 = vrot.lane.b32.xlu0 %v2454, 112
      %v2834 = vpop.permute.xlu0 %2833
      %2835 = vrot.lane.b32.xlu0 %v2457, 112
      %v2836 = vpop.permute.xlu0 %2835
      %2837 = vrot.lane.b32.xlu0 %v2448, 80
      %v2838 = vpop.permute.xlu0 %2837
      %2839 = vrot.lane.b32.xlu0 %v2451, 80
      %v2840 = vpop.permute.xlu0 %2839
      %2841 = vrot.lane.b32.xlu0 %v2454, 80
      %v2842 = vpop.permute.xlu0 %2841
      %2843 = vrot.lane.b32.xlu0 %v2457, 80
      %v2844 = vpop.permute.xlu0 %2843
      %v2845 = vsel %vm667, %v2830, 0
      %v2847 = vsel %vm667, %v2832, 0
      %v2849 = vsel %vm667, %v2834, 0
      %v2851 = vsel %vm667, %v2836, 0
      %v2853 = vsel %vm667, %v2838, 0
      %v2855 = vsel %vm667, %v2840, 0
      %v2857 = vsel %vm667, %v2842, 0
      %v2859 = vsel %vm667, %v2844, 0
      %2861 = vmatpush.xpose.msra.mxu0 0.0
      %2862 = vmatpush.xpose.msra.mxu0 0.0
      %2863 = vmatpush.xpose.msra.mxu0 0.0
      %2864 = vmatpush.xpose.msra.mxu0 0.0
      %2865 = vmatpush.xpose.msra.mxu0 0.0
      %2866 = vmatpush.xpose.msra.mxu0 0.0
      %2867 = vmatpush.xpose.msra.mxu0 0.0
      %2868 = vmatpush.xpose.msra.mxu0 0.0
      %2869 = vmatpush.xpose.msra.mxu0 0.0
      %2870 = vmatpush.xpose.msra.mxu0 0.0
      %2871 = vmatpush.xpose.msra.mxu0 0.0
      %2872 = vmatpush.xpose.msra.mxu0 0.0
      %2873 = vmatpush.xpose.msra.mxu0 %v2859
      %2874 = vmatpush.xpose.msra.mxu0 %v2857
      %2875 = vmatpush.xpose.msra.mxu0 %v2855
      %2876 = vmatpush.xpose.msra.mxu0 %v2853
      %2877 = vmatmul.f32.gmra.mxu0 %v2845
      %v2878 = vpop.f32.mrf.mxu0
      %v2879 = vadd.f32 0.0, %v2878
      %2880 = vmatmul.f32.gmra.mxu0 %v2847
      %v2881 = vpop.f32.mrf.mxu0
      %v2882 = vadd.f32 0.0, %v2881
      %2883 = vmatmul.f32.gmra.mxu0 %v2849
      %v2884 = vpop.f32.mrf.mxu0
      %v2885 = vadd.f32 0.0, %v2884
      %2886 = vmatmul.f32.gmra.mxu0 %v2851
      %v2887 = vpop.f32.mrf.mxu0
      %v2888 = vadd.f32 0.0, %v2887
      %2889 = vdwg.mxu0
      %v2890 = vmul.f32 %v2879, 0.35355338
      %v2891 = vmul.f32 %v2882, 0.35355338
      %v2892 = vmul.f32 %v2885, 0.35355338
      %v2893 = vmul.f32 %v2888, 0.35355338
      %v2894 = vadd.f32 %v2890, %v511
      %v2895 = vadd.f32 %v2891, %v512
      %v2896 = vadd.f32 %v2892, %v513
      %v2897 = vadd.f32 %v2893, %v514
      %v2898 = vsel %vm721, %v2894, -inf
      %2899 = vmax.xlane.f32.xlu0 %v2898
      %v2900 = vpop.xlane.xlu0 %2899
      %v2901 = vsel %vm721, %v2895, -inf
      %2902 = vmax.xlane.f32.xlu0 %v2901
      %v2903 = vpop.xlane.xlu0 %2902
      %v2904 = vsel %vm721, %v2896, -inf
      %2905 = vmax.xlane.f32.xlu0 %v2904
      %v2906 = vpop.xlane.xlu0 %2905
      %v2907 = vsel %vm731, %v2897, -inf
      %2908 = vmax.xlane.f32.xlu0 %v2907
      %v2909 = vpop.xlane.xlu0 %2908
      %v2910 = vmax.f32 %v2900, 0.0
      %v2911 = vmax.f32 %v2903, 0.0
      %v2912 = vmax.f32 %v2906, 0.0
      %v2913 = vmax.f32 %v2909, 0.0
      %v2914 = vsub.f32 %v2894, %v2910
      %v2915 = vsub.f32 %v2895, %v2911
      %v2916 = vsub.f32 %v2896, %v2912
      %v2917 = vsub.f32 %v2897, %v2913
      %v2918 = vmul.f32 %v2914, 1.442695
      %v2919 = vpow.pop %v2918
      %v2920 = vmul.f32 %v2915, 1.442695
      %v2921 = vpow.pop %v2920
      %v2922 = vmul.f32 %v2916, 1.442695
      %v2923 = vpow.pop %v2922
      %v2924 = vmul.f32 %v2917, 1.442695
      %v2925 = vpow.pop %v2924
      %v2926 = vsel %vm721, %v2919, 0.0
      %2927 = vadd.xlane.f32.xlu0 %v2926
      %v2928 = vpop.xlane.xlu0 %2927
      %v2929 = vsel %vm721, %v2921, 0.0
      %2930 = vadd.xlane.f32.xlu0 %v2929
      %v2931 = vpop.xlane.xlu0 %2930
      %v2932 = vsel %vm721, %v2923, 0.0
      %2933 = vadd.xlane.f32.xlu0 %v2932
      %v2934 = vpop.xlane.xlu0 %2933
      %v2935 = vsel %vm731, %v2925, 0.0
      %2936 = vadd.xlane.f32.xlu0 %v2935
      %v2937 = vpop.xlane.xlu0 %2936
      %v2938 = vsub.f32 0.0, %v2910
      %v2939 = vsub.f32 0.0, %v2911
      %v2940 = vsub.f32 0.0, %v2912
      %v2941 = vsub.f32 0.0, %v2913
      %v2942 = vmul.f32 %v2938, 1.442695
      %v2943 = vpow.pop %v2942
      %v2944 = vmul.f32 %v2939, 1.442695
      %v2945 = vpow.pop %v2944
      %v2946 = vmul.f32 %v2940, 1.442695
      %v2947 = vpow.pop %v2946
      %v2948 = vmul.f32 %v2941, 1.442695
      %v2949 = vpow.pop %v2948
      %v2950 = vadd.f32 %v2928, %v2943
      %v2951 = vadd.f32 %v2931, %v2945
      %v2952 = vadd.f32 %v2934, %v2947
      %v2953 = vadd.f32 %v2937, %v2949
      %v2954 = vrcp.pop %v2950
      %v2955 = vrcp.pop %v2951
      %v2956 = vrcp.pop %v2952
      %v2957 = vrcp.pop %v2953
      %v2958 = vmul.f32 %v2919, %v2954
      %v2959 = vmul.f32 %v2921, %v2955
      %v2960 = vmul.f32 %v2923, %v2956
      %v2961 = vmul.f32 %v2925, %v2957
      %2962 = vrot.lane.b32.xlu0 %v2448, 48
      %v2963 = vpop.permute.xlu0 %2962
      %2964 = vrot.lane.b32.xlu0 %v2451, 48
      %v2965 = vpop.permute.xlu0 %2964
      %2966 = vrot.lane.b32.xlu0 %v2454, 48
      %v2967 = vpop.permute.xlu0 %2966
      %2968 = vrot.lane.b32.xlu0 %v2457, 48
      %v2969 = vpop.permute.xlu0 %2968
      %v2974 = vsel %vm721, %v2958, 0
      %v2977 = vsel %vm721, %v2959, 0
      %v2980 = vsel %vm721, %v2960, 0
      %v2983 = vsel %vm721, %v2961, 0
      %v2985 = vsel %vm810, %v2969, 0
      %2987 = vmatpush.msra.mxu0 0.0
      %2988 = vmatpush.msra.mxu0 0.0
      %2989 = vmatpush.msra.mxu0 0.0
      %2990 = vmatpush.msra.mxu0 0.0
      %2991 = vmatpush.msra.mxu0 0.0
      %2992 = vmatpush.msra.mxu0 0.0
      %2993 = vmatpush.msra.mxu0 0.0
      %2994 = vmatpush.msra.mxu0 0.0
      %2995 = vmatpush.msra.mxu0 0.0
      %2996 = vmatpush.msra.mxu0 0.0
      %2997 = vmatpush.msra.mxu0 0.0
      %2998 = vmatpush.msra.mxu0 0.0
      %2999 = vmatpush.msra.mxu0 %v2985
      %3000 = vmatpush.msra.mxu0 %v2967
      %3001 = vmatpush.msra.mxu0 %v2965
      %3002 = vmatpush.msra.mxu0 %v2963
      %3003 = vmatmul.f32.gmra.mxu0 %v2974
      %v3004 = vpop.f32.mrf.mxu0
      %v3005 = vadd.f32 0.0, %v3004
      %3006 = vmatmul.f32.gmra.mxu0 %v2977
      %v3007 = vpop.f32.mrf.mxu0
      %v3008 = vadd.f32 0.0, %v3007
      %3009 = vmatmul.f32.gmra.mxu0 %v2980
      %v3010 = vpop.f32.mrf.mxu0
      %v3011 = vadd.f32 0.0, %v3010
      %3012 = vmatmul.f32.gmra.mxu0 %v2983
      %v3013 = vpop.f32.mrf.mxu0
      %v3014 = vadd.f32 0.0, %v3013
      %3015 = vdwg.mxu0
      %3016 = vrot.lane.b32.xlu0 %v2448, 104
      %v3017 = vpop.permute.xlu0 %3016
      %3018 = vrot.lane.b32.xlu0 %v2451, 104
      %v3019 = vpop.permute.xlu0 %3018
      %3020 = vrot.lane.b32.xlu0 %v2454, 104
      %v3021 = vpop.permute.xlu0 %3020
      %3022 = vrot.lane.b32.xlu0 %v2457, 104
      %v3023 = vpop.permute.xlu0 %3022
      %3024 = vrot.lane.b32.xlu0 %v2448, 72
      %v3025 = vpop.permute.xlu0 %3024
      %3026 = vrot.lane.b32.xlu0 %v2451, 72
      %v3027 = vpop.permute.xlu0 %3026
      %3028 = vrot.lane.b32.xlu0 %v2454, 72
      %v3029 = vpop.permute.xlu0 %3028
      %3030 = vrot.lane.b32.xlu0 %v2457, 72
      %v3031 = vpop.permute.xlu0 %3030
      %v3032 = vsel %vm667, %v3017, 0
      %v3034 = vsel %vm667, %v3019, 0
      %v3036 = vsel %vm667, %v3021, 0
      %v3038 = vsel %vm667, %v3023, 0
      %v3040 = vsel %vm667, %v3025, 0
      %v3042 = vsel %vm667, %v3027, 0
      %v3044 = vsel %vm667, %v3029, 0
      %v3046 = vsel %vm667, %v3031, 0
      %3048 = vmatpush.xpose.msra.mxu0 0.0
      %3049 = vmatpush.xpose.msra.mxu0 0.0
      %3050 = vmatpush.xpose.msra.mxu0 0.0
      %3051 = vmatpush.xpose.msra.mxu0 0.0
      %3052 = vmatpush.xpose.msra.mxu0 0.0
      %3053 = vmatpush.xpose.msra.mxu0 0.0
      %3054 = vmatpush.xpose.msra.mxu0 0.0
      %3055 = vmatpush.xpose.msra.mxu0 0.0
      %3056 = vmatpush.xpose.msra.mxu0 0.0
      %3057 = vmatpush.xpose.msra.mxu0 0.0
      %3058 = vmatpush.xpose.msra.mxu0 0.0
      %3059 = vmatpush.xpose.msra.mxu0 0.0
      %3060 = vmatpush.xpose.msra.mxu0 %v3046
      %3061 = vmatpush.xpose.msra.mxu0 %v3044
      %3062 = vmatpush.xpose.msra.mxu0 %v3042
      %3063 = vmatpush.xpose.msra.mxu0 %v3040
      %3064 = vmatmul.f32.gmra.mxu0 %v3032
      %v3065 = vpop.f32.mrf.mxu0
      %v3066 = vadd.f32 0.0, %v3065
      %3067 = vmatmul.f32.gmra.mxu0 %v3034
      %v3068 = vpop.f32.mrf.mxu0
      %v3069 = vadd.f32 0.0, %v3068
      %3070 = vmatmul.f32.gmra.mxu0 %v3036
      %v3071 = vpop.f32.mrf.mxu0
      %v3072 = vadd.f32 0.0, %v3071
      %3073 = vmatmul.f32.gmra.mxu0 %v3038
      %v3074 = vpop.f32.mrf.mxu0
      %v3075 = vadd.f32 0.0, %v3074
      %3076 = vdwg.mxu0
      %v3077 = vmul.f32 %v3066, 0.35355338
      %v3078 = vmul.f32 %v3069, 0.35355338
      %v3079 = vmul.f32 %v3072, 0.35355338
      %v3080 = vmul.f32 %v3075, 0.35355338
      %v3081 = vadd.f32 %v3077, %v511
      %v3082 = vadd.f32 %v3078, %v512
      %v3083 = vadd.f32 %v3079, %v513
      %v3084 = vadd.f32 %v3080, %v514
      %v3085 = vsel %vm721, %v3081, -inf
      %3086 = vmax.xlane.f32.xlu0 %v3085
      %v3087 = vpop.xlane.xlu0 %3086
      %v3088 = vsel %vm721, %v3082, -inf
      %3089 = vmax.xlane.f32.xlu0 %v3088
      %v3090 = vpop.xlane.xlu0 %3089
      %v3091 = vsel %vm721, %v3083, -inf
      %3092 = vmax.xlane.f32.xlu0 %v3091
      %v3093 = vpop.xlane.xlu0 %3092
      %v3094 = vsel %vm731, %v3084, -inf
      %3095 = vmax.xlane.f32.xlu0 %v3094
      %v3096 = vpop.xlane.xlu0 %3095
      %v3097 = vmax.f32 %v3087, 0.0
      %v3098 = vmax.f32 %v3090, 0.0
      %v3099 = vmax.f32 %v3093, 0.0
      %v3100 = vmax.f32 %v3096, 0.0
      %v3101 = vsub.f32 %v3081, %v3097
      %v3102 = vsub.f32 %v3082, %v3098
      %v3103 = vsub.f32 %v3083, %v3099
      %v3104 = vsub.f32 %v3084, %v3100
      %v3105 = vmul.f32 %v3101, 1.442695
      %v3106 = vpow.pop %v3105
      %v3107 = vmul.f32 %v3102, 1.442695
      %v3108 = vpow.pop %v3107
      %v3109 = vmul.f32 %v3103, 1.442695
      %v3110 = vpow.pop %v3109
      %v3111 = vmul.f32 %v3104, 1.442695
      %v3112 = vpow.pop %v3111
      %v3113 = vsel %vm721, %v3106, 0.0
      %3114 = vadd.xlane.f32.xlu0 %v3113
      %v3115 = vpop.xlane.xlu0 %3114
      %v3116 = vsel %vm721, %v3108, 0.0
      %3117 = vadd.xlane.f32.xlu0 %v3116
      %v3118 = vpop.xlane.xlu0 %3117
      %v3119 = vsel %vm721, %v3110, 0.0
      %3120 = vadd.xlane.f32.xlu0 %v3119
      %v3121 = vpop.xlane.xlu0 %3120
      %v3122 = vsel %vm731, %v3112, 0.0
      %3123 = vadd.xlane.f32.xlu0 %v3122
      %v3124 = vpop.xlane.xlu0 %3123
      %v3125 = vsub.f32 0.0, %v3097
      %v3126 = vsub.f32 0.0, %v3098
      %v3127 = vsub.f32 0.0, %v3099
      %v3128 = vsub.f32 0.0, %v3100
      %v3129 = vmul.f32 %v3125, 1.442695
      %v3130 = vpow.pop %v3129
      %v3131 = vmul.f32 %v3126, 1.442695
      %v3132 = vpow.pop %v3131
      %v3133 = vmul.f32 %v3127, 1.442695
      %v3134 = vpow.pop %v3133
      %v3135 = vmul.f32 %v3128, 1.442695
      %v3136 = vpow.pop %v3135
      %v3137 = vadd.f32 %v3115, %v3130
      %v3138 = vadd.f32 %v3118, %v3132
      %v3139 = vadd.f32 %v3121, %v3134
      %v3140 = vadd.f32 %v3124, %v3136
      %v3141 = vrcp.pop %v3137
      %v3142 = vrcp.pop %v3138
      %v3143 = vrcp.pop %v3139
      %v3144 = vrcp.pop %v3140
      %v3145 = vmul.f32 %v3106, %v3141
      %v3146 = vmul.f32 %v3108, %v3142
      %v3147 = vmul.f32 %v3110, %v3143
      %v3148 = vmul.f32 %v3112, %v3144
      %3149 = vrot.lane.b32.xlu0 %v2448, 40
      %v3150 = vpop.permute.xlu0 %3149
      %3151 = vrot.lane.b32.xlu0 %v2451, 40
      %v3152 = vpop.permute.xlu0 %3151
      %3153 = vrot.lane.b32.xlu0 %v2454, 40
      %v3154 = vpop.permute.xlu0 %3153
      %3155 = vrot.lane.b32.xlu0 %v2457, 40
      %v3156 = vpop.permute.xlu0 %3155
      %v3161 = vsel %vm721, %v3145, 0
      %v3164 = vsel %vm721, %v3146, 0
      %v3167 = vsel %vm721, %v3147, 0
      %v3170 = vsel %vm721, %v3148, 0
      %v3172 = vsel %vm810, %v3156, 0
      %3174 = vmatpush.msra.mxu0 0.0
      %3175 = vmatpush.msra.mxu0 0.0
      %3176 = vmatpush.msra.mxu0 0.0
      %3177 = vmatpush.msra.mxu0 0.0
      %3178 = vmatpush.msra.mxu0 0.0
      %3179 = vmatpush.msra.mxu0 0.0
      %3180 = vmatpush.msra.mxu0 0.0
      %3181 = vmatpush.msra.mxu0 0.0
      %3182 = vmatpush.msra.mxu0 0.0
      %3183 = vmatpush.msra.mxu0 0.0
      %3184 = vmatpush.msra.mxu0 0.0
      %3185 = vmatpush.msra.mxu0 0.0
      %3186 = vmatpush.msra.mxu0 %v3172
      %3187 = vmatpush.msra.mxu0 %v3154
      %3188 = vmatpush.msra.mxu0 %v3152
      %3189 = vmatpush.msra.mxu0 %v3150
      %3190 = vmatmul.f32.gmra.mxu0 %v3161
      %v3191 = vpop.f32.mrf.mxu0
      %v3192 = vadd.f32 0.0, %v3191
      %3193 = vmatmul.f32.gmra.mxu0 %v3164
      %v3194 = vpop.f32.mrf.mxu0
      %v3195 = vadd.f32 0.0, %v3194
      %3196 = vmatmul.f32.gmra.mxu0 %v3167
      %v3197 = vpop.f32.mrf.mxu0
      %v3198 = vadd.f32 0.0, %v3197
      %3199 = vmatmul.f32.gmra.mxu0 %v3170
      %v3200 = vpop.f32.mrf.mxu0
      %v3201 = vadd.f32 0.0, %v3200
      %3202 = vdwg.mxu0
      %3207 = vrot.lane.b32.xlu0 %v2818, 8
      %v3208 = vpop.permute.xlu0 %3207
      %3209 = vrot.lane.b32.xlu0 %v2821, 8
      %v3210 = vpop.permute.xlu0 %3209
      %3211 = vrot.lane.b32.xlu0 %v2824, 8
      %v3212 = vpop.permute.xlu0 %3211
      %3213 = vrot.lane.b32.xlu0 %v2827, 8
      %v3214 = vpop.permute.xlu0 %3213
      %3223 = vrot.lane.b32.xlu0 %v3005, 16
      %v3224 = vpop.permute.xlu0 %3223
      %3225 = vrot.lane.b32.xlu0 %v3008, 16
      %v3226 = vpop.permute.xlu0 %3225
      %3227 = vrot.lane.b32.xlu0 %v3011, 16
      %v3228 = vpop.permute.xlu0 %3227
      %3229 = vrot.lane.b32.xlu0 %v3014, 16
      %v3230 = vpop.permute.xlu0 %3229
      %3239 = vrot.lane.b32.xlu0 %v3192, 24
      %v3240 = vpop.permute.xlu0 %3239
      %3241 = vrot.lane.b32.xlu0 %v3195, 24
      %v3242 = vpop.permute.xlu0 %3241
      %3243 = vrot.lane.b32.xlu0 %v3198, 24
      %v3244 = vpop.permute.xlu0 %3243
      %3245 = vrot.lane.b32.xlu0 %v3201, 24
      %v3246 = vpop.permute.xlu0 %3245
      %v3251 = vsel %vm667, %v2631, %v3208
      %v3252 = vsel %vm667, %v2634, %v3210
      %v3253 = vsel %vm667, %v2637, %v3212
      %v3254 = vsel %vm667, %v2640, %v3214
      %v3255 = vsel %vm1455, %v3251, %v3224
      %v3256 = vsel %vm1455, %v3252, %v3226
      %v3257 = vsel %vm1455, %v3253, %v3228
      %v3258 = vsel %vm1455, %v3254, %v3230
      %v3259 = vsel %vm1460, %v3255, %v3240
      %v3260 = vsel %vm1460, %v3256, %v3242
      %v3261 = vsel %vm1460, %v3257, %v3244
      %v3262 = vsel %vm1460, %v3258, %v3246
      %v3263 = vperm.slane %v2405, 1
      %v3265 = vsel %vm613, %v3259, 0
      %v3268 = vsel %vm613, %v3260, 0
      %v3271 = vsel %vm613, %v3261, 0
      %v3274 = vsel %vm613, %v3262, 0
      %3276 = vmatpush.msra.mxu0 0.0
      %3277 = vmatpush.msra.mxu0 0.0
      %3278 = vmatpush.msra.mxu0 0.0
      %3279 = vmatpush.msra.mxu0 0.0
      %3280 = vmatpush.msra.mxu0 0.0
      %3281 = vmatpush.msra.mxu0 0.0
      %3282 = vmatpush.msra.mxu0 0.0
      %3283 = vmatpush.msra.mxu0 0.0
      %3284 = vmatpush.msra.mxu0 0.0
      %3285 = vmatpush.msra.mxu0 0.0
      %3286 = vmatpush.msra.mxu0 0.0
      %3287 = vmatpush.msra.mxu0 0.0
      %3288 = vmatpush.msra.mxu0 %v2416
      %3289 = vmatpush.msra.mxu0 %v2415
      %3290 = vmatpush.msra.mxu0 %v2414
      %3291 = vmatpush.msra.mxu0 %v2413
      %3292 = vmatmul.f32.gmra.mxu0 %v3265
      %v3293 = vpop.f32.mrf.mxu0
      %v3294 = vadd.f32 %v3263, %v3293
      %3295 = vmatmul.f32.gmra.mxu0 %v3268
      %v3296 = vpop.f32.mrf.mxu0
      %v3297 = vadd.f32 %v3263, %v3296
      %3298 = vmatmul.f32.gmra.mxu0 %v3271
      %v3299 = vpop.f32.mrf.mxu0
      %v3300 = vadd.f32 %v3263, %v3299
      %3301 = vmatmul.f32.gmra.mxu0 %v3274
      %v3302 = vpop.f32.mrf.mxu0
      %v3303 = vadd.f32 %v3263, %v3302
      %3304 = vdwg.mxu0
      %v3305 = vadd.f32 %v2400, %v3294
      %v3306 = vadd.f32 %v2401, %v3297
      %v3307 = vadd.f32 %v2402, %v3300
      %v3308 = vadd.f32 %v2403, %v3303
      %v3309 = vsel %vm613, %v3305, 0.0
      %3310 = vadd.xlane.f32.xlu0 %v3309
      %v3311 = vpop.xlane.xlu0 %3310
      %v3312 = vsel %vm613, %v3306, 0.0
      %3313 = vadd.xlane.f32.xlu0 %v3312
      %v3314 = vpop.xlane.xlu0 %3313
      %v3315 = vsel %vm613, %v3307, 0.0
      %3316 = vadd.xlane.f32.xlu0 %v3315
      %v3317 = vpop.xlane.xlu0 %3316
      %v3318 = vsel %vm1520, %v3308, 0.0
      %3319 = vadd.xlane.f32.xlu0 %v3318
      %v3320 = vpop.xlane.xlu0 %3319
      %v3321 = vmul.f32 %v3311, %v1530
      %v3322 = vmul.f32 %v3314, %v1530
      %v3323 = vmul.f32 %v3317, %v1530
      %v3324 = vmul.f32 %v3320, %v1530
      %v3325 = vsub.f32 %v3305, %v3321
      %v3326 = vsub.f32 %v3306, %v3322
      %v3327 = vsub.f32 %v3307, %v3323
      %v3328 = vsub.f32 %v3308, %v3324
      %v3329 = vmul.f32 %v3325, %v3325
      %v3330 = vmul.f32 %v3326, %v3326
      %v3331 = vmul.f32 %v3327, %v3327
      %v3332 = vmul.f32 %v3328, %v3328
      %v3333 = vsel %vm613, %v3329, 0.0
      %3334 = vadd.xlane.f32.xlu0 %v3333
      %v3335 = vpop.xlane.xlu0 %3334
      %v3336 = vsel %vm613, %v3330, 0.0
      %3337 = vadd.xlane.f32.xlu0 %v3336
      %v3338 = vpop.xlane.xlu0 %3337
      %v3339 = vsel %vm613, %v3331, 0.0
      %3340 = vadd.xlane.f32.xlu0 %v3339
      %v3341 = vpop.xlane.xlu0 %3340
      %v3342 = vsel %vm1520, %v3332, 0.0
      %3343 = vadd.xlane.f32.xlu0 %v3342
      %v3344 = vpop.xlane.xlu0 %3343
      %v3345 = vmul.f32 %v3335, %v1530
      %v3346 = vmul.f32 %v3338, %v1530
      %v3347 = vmul.f32 %v3341, %v1530
      %v3348 = vmul.f32 %v3344, %v1530
      %v3349 = vadd.f32 %v3345, 1e-05
      %v3350 = vadd.f32 %v3346, 1e-05
      %v3351 = vadd.f32 %v3347, 1e-05
      %v3352 = vadd.f32 %v3348, 1e-05
      %v3353 = vrsqrt.pop %v3349
      %v3354 = vmul.f32 %v3353, %v3349
      %v3355 = vmul.f32 %v3354, %v3353
      %v3356 = vmul.f32 0.5, %v3355
      %v3357 = vsub.f32 1.5, %v3356
      %v3358 = vmul.f32 %v3353, %v3357
      %vm3359 = vweird.f32 %v3349
      %vm3360 = vweird.f32 %v3353
      %vm3361 = vmor %vm3359, %vm3360
      %v3362 = vsel %vm3361, %v3353, %v3358
      %v3363 = vrsqrt.pop %v3350
      %v3364 = vmul.f32 %v3363, %v3350
      %v3365 = vmul.f32 %v3364, %v3363
      %v3366 = vmul.f32 0.5, %v3365
      %v3367 = vsub.f32 1.5, %v3366
      %v3368 = vmul.f32 %v3363, %v3367
      %vm3369 = vweird.f32 %v3350
      %vm3370 = vweird.f32 %v3363
      %vm3371 = vmor %vm3369, %vm3370
      %v3372 = vsel %vm3371, %v3363, %v3368
      %v3373 = vrsqrt.pop %v3351
      %v3374 = vmul.f32 %v3373, %v3351
      %v3375 = vmul.f32 %v3374, %v3373
      %v3376 = vmul.f32 0.5, %v3375
      %v3377 = vsub.f32 1.5, %v3376
      %v3378 = vmul.f32 %v3373, %v3377
      %vm3379 = vweird.f32 %v3351
      %vm3380 = vweird.f32 %v3373
      %vm3381 = vmor %vm3379, %vm3380
      %v3382 = vsel %vm3381, %v3373, %v3378
      %v3383 = vrsqrt.pop %v3352
      %v3384 = vmul.f32 %v3383, %v3352
      %v3385 = vmul.f32 %v3384, %v3383
      %v3386 = vmul.f32 0.5, %v3385
      %v3387 = vsub.f32 1.5, %v3386
      %v3388 = vmul.f32 %v3383, %v3387
      %vm3389 = vweird.f32 %v3352
      %vm3390 = vweird.f32 %v3383
      %vm3391 = vmor %vm3389, %vm3390
      %v3392 = vsel %vm3391, %v3383, %v3388
      %v3393 = vmul.f32 %v3325, %v3362
      %v3394 = vmul.f32 %v3326, %v3372
      %v3395 = vmul.f32 %v3327, %v3382
      %v3396 = vmul.f32 %v3328, %v3392
      %v3397 = vperm.slane %v2405, 2
      %v3398 = vmul.f32 %v3393, %v3397
      %v3399 = vmul.f32 %v3394, %v3397
      %v3400 = vmul.f32 %v3395, %v3397
      %v3401 = vmul.f32 %v3396, %v3397
      %v3402 = vperm.slane %v2405, 3
      %v3403 = vadd.f32 %v3398, %v3402
      %v3404 = vadd.f32 %v3399, %v3402
      %v3405 = vadd.f32 %v3400, %v3402
      %v3406 = vadd.f32 %v3401, %v3402
      %s3407 = scalar_lea.vmem %s8, 32
      %v3408 = vld [vmem:[%s3407] sm:$0xff]
      %v3409 = vld [vmem:[%s3407 + $0x8] sm:$0xff]
      %v3410 = vld [vmem:[%s3407 + $0x10] sm:$0xff]
      %v3411 = vld [vmem:[%s3407 + $0x18] sm:$0xff]
      %s3412 = scalar_lea.vmem %s9, 32
      %v3413 = vld [vmem:[%s3412] sm:$0xff]
      %v3414 = vld [vmem:[%s3412 + $0x8] sm:$0xff]
      %v3415 = vld [vmem:[%s3412 + $0x10] sm:$0xff]
      %v3416 = vld [vmem:[%s3412 + $0x18] sm:$0xff]
      %v3417 = vperm.slane %v2405, 4
      %v3419 = vsel %vm613, %v3403, 0
      %v3422 = vsel %vm613, %v3404, 0
      %v3425 = vsel %vm613, %v3405, 0
      %v3428 = vsel %vm613, %v3406, 0
      %3430 = vmatpush.msra.mxu0 0.0
      %3431 = vmatpush.msra.mxu0 0.0
      %3432 = vmatpush.msra.mxu0 0.0
      %3433 = vmatpush.msra.mxu0 0.0
      %3434 = vmatpush.msra.mxu0 0.0
      %3435 = vmatpush.msra.mxu0 0.0
      %3436 = vmatpush.msra.mxu0 0.0
      %3437 = vmatpush.msra.mxu0 0.0
      %3438 = vmatpush.msra.mxu0 0.0
      %3439 = vmatpush.msra.mxu0 0.0
      %3440 = vmatpush.msra.mxu0 0.0
      %3441 = vmatpush.msra.mxu0 0.0
      %3442 = vmatpush.msra.mxu0 %v3411
      %3443 = vmatpush.msra.mxu0 %v3410
      %3444 = vmatpush.msra.mxu0 %v3409
      %3445 = vmatpush.msra.mxu0 %v3408
      %3446 = vmatmul.f32.gmra.mxu0 %v3419
      %v3447 = vpop.f32.mrf.mxu0
      %v3448 = vadd.f32 %v3417, %v3447
      %3449 = vmatmul.f32.gmra.mxu0 %v3422
      %v3450 = vpop.f32.mrf.mxu0
      %v3451 = vadd.f32 %v3417, %v3450
      %3452 = vmatmul.f32.gmra.mxu0 %v3425
      %v3453 = vpop.f32.mrf.mxu0
      %v3454 = vadd.f32 %v3417, %v3453
      %3455 = vmatmul.f32.gmra.mxu0 %v3428
      %v3456 = vpop.f32.mrf.mxu0
      %v3457 = vadd.f32 %v3417, %v3456
      %3458 = vdwg.mxu0
      %3463 = vrot.lane.b32.xlu0 %v3448, 96
      %v3464 = vpop.permute.xlu0 %3463
      %3465 = vrot.lane.b32.xlu0 %v3451, 96
      %v3466 = vpop.permute.xlu0 %3465
      %3467 = vrot.lane.b32.xlu0 %v3454, 96
      %v3468 = vpop.permute.xlu0 %3467
      %3469 = vrot.lane.b32.xlu0 %v3457, 96
      %v3470 = vpop.permute.xlu0 %3469
      %v3471 = vsel %vm1455, %v3448, 0
      %v3473 = vsel %vm1455, %v3451, 0
      %v3475 = vsel %vm1455, %v3454, 0
      %v3477 = vsel %vm1455, %v3457, 0
      %v3479 = vsel %vm1455, %v3464, 0
      %v3481 = vsel %vm1455, %v3466, 0
      %v3483 = vsel %vm1455, %v3468, 0
      %v3485 = vsel %vm1455, %v3470, 0
      %3487 = vmatpush.xpose.msra.mxu0 0.0
      %3488 = vmatpush.xpose.msra.mxu0 0.0
      %3489 = vmatpush.xpose.msra.mxu0 0.0
      %3490 = vmatpush.xpose.msra.mxu0 0.0
      %3491 = vmatpush.xpose.msra.mxu0 0.0
      %3492 = vmatpush.xpose.msra.mxu0 0.0
      %3493 = vmatpush.xpose.msra.mxu0 0.0
      %3494 = vmatpush.xpose.msra.mxu0 0.0
      %3495 = vmatpush.xpose.msra.mxu0 0.0
      %3496 = vmatpush.xpose.msra.mxu0 0.0
      %3497 = vmatpush.xpose.msra.mxu0 0.0
      %3498 = vmatpush.xpose.msra.mxu0 0.0
      %3499 = vmatpush.xpose.msra.mxu0 %v3485
      %3500 = vmatpush.xpose.msra.mxu0 %v3483
      %3501 = vmatpush.xpose.msra.mxu0 %v3481
      %3502 = vmatpush.xpose.msra.mxu0 %v3479
      %3503 = vmatmul.f32.gmra.mxu0 %v3471
      %v3504 = vpop.f32.mrf.mxu0
      %v3505 = vadd.f32 0.0, %v3504
      %3506 = vmatmul.f32.gmra.mxu0 %v3473
      %v3507 = vpop.f32.mrf.mxu0
      %v3508 = vadd.f32 0.0, %v3507
      %3509 = vmatmul.f32.gmra.mxu0 %v3475
      %v3510 = vpop.f32.mrf.mxu0
      %v3511 = vadd.f32 0.0, %v3510
      %3512 = vmatmul.f32.gmra.mxu0 %v3477
      %v3513 = vpop.f32.mrf.mxu0
      %v3514 = vadd.f32 0.0, %v3513
      %3515 = vdwg.mxu0
      %v3516 = vmul.f32 %v3505, 0.25
      %v3517 = vmul.f32 %v3508, 0.25
      %v3518 = vmul.f32 %v3511, 0.25
      %v3519 = vmul.f32 %v3514, 0.25
      %v3520 = vadd.f32 %v3516, %v515
      %v3521 = vadd.f32 %v3517, %v516
      %v3522 = vadd.f32 %v3518, %v517
      %v3523 = vadd.f32 %v3519, %v518
      %v3524 = vsel %vm721, %v3520, -inf
      %3525 = vmax.xlane.f32.xlu0 %v3524
      %v3526 = vpop.xlane.xlu0 %3525
      %v3527 = vsel %vm721, %v3521, -inf
      %3528 = vmax.xlane.f32.xlu0 %v3527
      %v3529 = vpop.xlane.xlu0 %3528
      %v3530 = vsel %vm721, %v3522, -inf
      %3531 = vmax.xlane.f32.xlu0 %v3530
      %v3532 = vpop.xlane.xlu0 %3531
      %v3533 = vsel %vm731, %v3523, -inf
      %3534 = vmax.xlane.f32.xlu0 %v3533
      %v3535 = vpop.xlane.xlu0 %3534
      %v3536 = vmax.f32 %v3526, 0.0
      %v3537 = vmax.f32 %v3529, 0.0
      %v3538 = vmax.f32 %v3532, 0.0
      %v3539 = vmax.f32 %v3535, 0.0
      %v3540 = vsub.f32 %v3520, %v3536
      %v3541 = vsub.f32 %v3521, %v3537
      %v3542 = vsub.f32 %v3522, %v3538
      %v3543 = vsub.f32 %v3523, %v3539
      %v3544 = vmul.f32 %v3540, 1.442695
      %v3545 = vpow.pop %v3544
      %v3546 = vmul.f32 %v3541, 1.442695
      %v3547 = vpow.pop %v3546
      %v3548 = vmul.f32 %v3542, 1.442695
      %v3549 = vpow.pop %v3548
      %v3550 = vmul.f32 %v3543, 1.442695
      %v3551 = vpow.pop %v3550
      %v3552 = vsel %vm721, %v3545, 0.0
      %3553 = vadd.xlane.f32.xlu0 %v3552
      %v3554 = vpop.xlane.xlu0 %3553
      %v3555 = vsel %vm721, %v3547, 0.0
      %3556 = vadd.xlane.f32.xlu0 %v3555
      %v3557 = vpop.xlane.xlu0 %3556
      %v3558 = vsel %vm721, %v3549, 0.0
      %3559 = vadd.xlane.f32.xlu0 %v3558
      %v3560 = vpop.xlane.xlu0 %3559
      %v3561 = vsel %vm731, %v3551, 0.0
      %3562 = vadd.xlane.f32.xlu0 %v3561
      %v3563 = vpop.xlane.xlu0 %3562
      %v3564 = vsub.f32 0.0, %v3536
      %v3565 = vsub.f32 0.0, %v3537
      %v3566 = vsub.f32 0.0, %v3538
      %v3567 = vsub.f32 0.0, %v3539
      %v3568 = vmul.f32 %v3564, 1.442695
      %v3569 = vpow.pop %v3568
      %v3570 = vmul.f32 %v3565, 1.442695
      %v3571 = vpow.pop %v3570
      %v3572 = vmul.f32 %v3566, 1.442695
      %v3573 = vpow.pop %v3572
      %v3574 = vmul.f32 %v3567, 1.442695
      %v3575 = vpow.pop %v3574
      %v3576 = vadd.f32 %v3554, %v3569
      %v3577 = vadd.f32 %v3557, %v3571
      %v3578 = vadd.f32 %v3560, %v3573
      %v3579 = vadd.f32 %v3563, %v3575
      %v3580 = vrcp.pop %v3576
      %v3581 = vrcp.pop %v3577
      %v3582 = vrcp.pop %v3578
      %v3583 = vrcp.pop %v3579
      %v3584 = vmul.f32 %v3545, %v3580
      %v3585 = vmul.f32 %v3547, %v3581
      %v3586 = vmul.f32 %v3549, %v3582
      %v3587 = vmul.f32 %v3551, %v3583
      %3588 = vrot.lane.b32.xlu0 %v3448, 64
      %v3589 = vpop.permute.xlu0 %3588
      %3590 = vrot.lane.b32.xlu0 %v3451, 64
      %v3591 = vpop.permute.xlu0 %3590
      %3592 = vrot.lane.b32.xlu0 %v3454, 64
      %v3593 = vpop.permute.xlu0 %3592
      %3594 = vrot.lane.b32.xlu0 %v3457, 64
      %v3595 = vpop.permute.xlu0 %3594
      %v3600 = vsel %vm721, %v3584, 0
      %v3603 = vsel %vm721, %v3585, 0
      %v3606 = vsel %vm721, %v3586, 0
      %v3609 = vsel %vm721, %v3587, 0
      %v3611 = vsel %vm810, %v3595, 0
      %3613 = vmatpush.msra.mxu0 0.0
      %3614 = vmatpush.msra.mxu0 0.0
      %3615 = vmatpush.msra.mxu0 0.0
      %3616 = vmatpush.msra.mxu0 0.0
      %3617 = vmatpush.msra.mxu0 0.0
      %3618 = vmatpush.msra.mxu0 0.0
      %3619 = vmatpush.msra.mxu0 0.0
      %3620 = vmatpush.msra.mxu0 0.0
      %3621 = vmatpush.msra.mxu0 0.0
      %3622 = vmatpush.msra.mxu0 0.0
      %3623 = vmatpush.msra.mxu0 0.0
      %3624 = vmatpush.msra.mxu0 0.0
      %3625 = vmatpush.msra.mxu0 %v3611
      %3626 = vmatpush.msra.mxu0 %v3593
      %3627 = vmatpush.msra.mxu0 %v3591
      %3628 = vmatpush.msra.mxu0 %v3589
      %3629 = vmatmul.f32.gmra.mxu0 %v3600
      %v3630 = vpop.f32.mrf.mxu0
      %v3631 = vadd.f32 0.0, %v3630
      %3632 = vmatmul.f32.gmra.mxu0 %v3603
      %v3633 = vpop.f32.mrf.mxu0
      %v3634 = vadd.f32 0.0, %v3633
      %3635 = vmatmul.f32.gmra.mxu0 %v3606
      %v3636 = vpop.f32.mrf.mxu0
      %v3637 = vadd.f32 0.0, %v3636
      %3638 = vmatmul.f32.gmra.mxu0 %v3609
      %v3639 = vpop.f32.mrf.mxu0
      %v3640 = vadd.f32 0.0, %v3639
      %3641 = vdwg.mxu0
      %3642 = vrot.lane.b32.xlu0 %v3448, 112
      %v3643 = vpop.permute.xlu0 %3642
      %3644 = vrot.lane.b32.xlu0 %v3451, 112
      %v3645 = vpop.permute.xlu0 %3644
      %3646 = vrot.lane.b32.xlu0 %v3454, 112
      %v3647 = vpop.permute.xlu0 %3646
      %3648 = vrot.lane.b32.xlu0 %v3457, 112
      %v3649 = vpop.permute.xlu0 %3648
      %3650 = vrot.lane.b32.xlu0 %v3448, 80
      %v3651 = vpop.permute.xlu0 %3650
      %3652 = vrot.lane.b32.xlu0 %v3451, 80
      %v3653 = vpop.permute.xlu0 %3652
      %3654 = vrot.lane.b32.xlu0 %v3454, 80
      %v3655 = vpop.permute.xlu0 %3654
      %3656 = vrot.lane.b32.xlu0 %v3457, 80
      %v3657 = vpop.permute.xlu0 %3656
      %v3658 = vsel %vm1455, %v3643, 0
      %v3660 = vsel %vm1455, %v3645, 0
      %v3662 = vsel %vm1455, %v3647, 0
      %v3664 = vsel %vm1455, %v3649, 0
      %v3666 = vsel %vm1455, %v3651, 0
      %v3668 = vsel %vm1455, %v3653, 0
      %v3670 = vsel %vm1455, %v3655, 0
      %v3672 = vsel %vm1455, %v3657, 0
      %3674 = vmatpush.xpose.msra.mxu0 0.0
      %3675 = vmatpush.xpose.msra.mxu0 0.0
      %3676 = vmatpush.xpose.msra.mxu0 0.0
      %3677 = vmatpush.xpose.msra.mxu0 0.0
      %3678 = vmatpush.xpose.msra.mxu0 0.0
      %3679 = vmatpush.xpose.msra.mxu0 0.0
      %3680 = vmatpush.xpose.msra.mxu0 0.0
      %3681 = vmatpush.xpose.msra.mxu0 0.0
      %3682 = vmatpush.xpose.msra.mxu0 0.0
      %3683 = vmatpush.xpose.msra.mxu0 0.0
      %3684 = vmatpush.xpose.msra.mxu0 0.0
      %3685 = vmatpush.xpose.msra.mxu0 0.0
      %3686 = vmatpush.xpose.msra.mxu0 %v3672
      %3687 = vmatpush.xpose.msra.mxu0 %v3670
      %3688 = vmatpush.xpose.msra.mxu0 %v3668
      %3689 = vmatpush.xpose.msra.mxu0 %v3666
      %3690 = vmatmul.f32.gmra.mxu0 %v3658
      %v3691 = vpop.f32.mrf.mxu0
      %v3692 = vadd.f32 0.0, %v3691
      %3693 = vmatmul.f32.gmra.mxu0 %v3660
      %v3694 = vpop.f32.mrf.mxu0
      %v3695 = vadd.f32 0.0, %v3694
      %3696 = vmatmul.f32.gmra.mxu0 %v3662
      %v3697 = vpop.f32.mrf.mxu0
      %v3698 = vadd.f32 0.0, %v3697
      %3699 = vmatmul.f32.gmra.mxu0 %v3664
      %v3700 = vpop.f32.mrf.mxu0
      %v3701 = vadd.f32 0.0, %v3700
      %3702 = vdwg.mxu0
      %v3703 = vmul.f32 %v3692, 0.25
      %v3704 = vmul.f32 %v3695, 0.25
      %v3705 = vmul.f32 %v3698, 0.25
      %v3706 = vmul.f32 %v3701, 0.25
      %v3707 = vadd.f32 %v3703, %v515
      %v3708 = vadd.f32 %v3704, %v516
      %v3709 = vadd.f32 %v3705, %v517
      %v3710 = vadd.f32 %v3706, %v518
      %v3711 = vsel %vm721, %v3707, -inf
      %3712 = vmax.xlane.f32.xlu0 %v3711
      %v3713 = vpop.xlane.xlu0 %3712
      %v3714 = vsel %vm721, %v3708, -inf
      %3715 = vmax.xlane.f32.xlu0 %v3714
      %v3716 = vpop.xlane.xlu0 %3715
      %v3717 = vsel %vm721, %v3709, -inf
      %3718 = vmax.xlane.f32.xlu0 %v3717
      %v3719 = vpop.xlane.xlu0 %3718
      %v3720 = vsel %vm731, %v3710, -inf
      %3721 = vmax.xlane.f32.xlu0 %v3720
      %v3722 = vpop.xlane.xlu0 %3721
      %v3723 = vmax.f32 %v3713, 0.0
      %v3724 = vmax.f32 %v3716, 0.0
      %v3725 = vmax.f32 %v3719, 0.0
      %v3726 = vmax.f32 %v3722, 0.0
      %v3727 = vsub.f32 %v3707, %v3723
      %v3728 = vsub.f32 %v3708, %v3724
      %v3729 = vsub.f32 %v3709, %v3725
      %v3730 = vsub.f32 %v3710, %v3726
      %v3731 = vmul.f32 %v3727, 1.442695
      %v3732 = vpow.pop %v3731
      %v3733 = vmul.f32 %v3728, 1.442695
      %v3734 = vpow.pop %v3733
      %v3735 = vmul.f32 %v3729, 1.442695
      %v3736 = vpow.pop %v3735
      %v3737 = vmul.f32 %v3730, 1.442695
      %v3738 = vpow.pop %v3737
      %v3739 = vsel %vm721, %v3732, 0.0
      %3740 = vadd.xlane.f32.xlu0 %v3739
      %v3741 = vpop.xlane.xlu0 %3740
      %v3742 = vsel %vm721, %v3734, 0.0
      %3743 = vadd.xlane.f32.xlu0 %v3742
      %v3744 = vpop.xlane.xlu0 %3743
      %v3745 = vsel %vm721, %v3736, 0.0
      %3746 = vadd.xlane.f32.xlu0 %v3745
      %v3747 = vpop.xlane.xlu0 %3746
      %v3748 = vsel %vm731, %v3738, 0.0
      %3749 = vadd.xlane.f32.xlu0 %v3748
      %v3750 = vpop.xlane.xlu0 %3749
      %v3751 = vsub.f32 0.0, %v3723
      %v3752 = vsub.f32 0.0, %v3724
      %v3753 = vsub.f32 0.0, %v3725
      %v3754 = vsub.f32 0.0, %v3726
      %v3755 = vmul.f32 %v3751, 1.442695
      %v3756 = vpow.pop %v3755
      %v3757 = vmul.f32 %v3752, 1.442695
      %v3758 = vpow.pop %v3757
      %v3759 = vmul.f32 %v3753, 1.442695
      %v3760 = vpow.pop %v3759
      %v3761 = vmul.f32 %v3754, 1.442695
      %v3762 = vpow.pop %v3761
      %v3763 = vadd.f32 %v3741, %v3756
      %v3764 = vadd.f32 %v3744, %v3758
      %v3765 = vadd.f32 %v3747, %v3760
      %v3766 = vadd.f32 %v3750, %v3762
      %v3767 = vrcp.pop %v3763
      %v3768 = vrcp.pop %v3764
      %v3769 = vrcp.pop %v3765
      %v3770 = vrcp.pop %v3766
      %v3771 = vmul.f32 %v3732, %v3767
      %v3772 = vmul.f32 %v3734, %v3768
      %v3773 = vmul.f32 %v3736, %v3769
      %v3774 = vmul.f32 %v3738, %v3770
      %3775 = vrot.lane.b32.xlu0 %v3448, 48
      %v3776 = vpop.permute.xlu0 %3775
      %3777 = vrot.lane.b32.xlu0 %v3451, 48
      %v3778 = vpop.permute.xlu0 %3777
      %3779 = vrot.lane.b32.xlu0 %v3454, 48
      %v3780 = vpop.permute.xlu0 %3779
      %3781 = vrot.lane.b32.xlu0 %v3457, 48
      %v3782 = vpop.permute.xlu0 %3781
      %v3787 = vsel %vm721, %v3771, 0
      %v3790 = vsel %vm721, %v3772, 0
      %v3793 = vsel %vm721, %v3773, 0
      %v3796 = vsel %vm721, %v3774, 0
      %v3798 = vsel %vm810, %v3782, 0
      %3800 = vmatpush.msra.mxu0 0.0
      %3801 = vmatpush.msra.mxu0 0.0
      %3802 = vmatpush.msra.mxu0 0.0
      %3803 = vmatpush.msra.mxu0 0.0
      %3804 = vmatpush.msra.mxu0 0.0
      %3805 = vmatpush.msra.mxu0 0.0
      %3806 = vmatpush.msra.mxu0 0.0
      %3807 = vmatpush.msra.mxu0 0.0
      %3808 = vmatpush.msra.mxu0 0.0
      %3809 = vmatpush.msra.mxu0 0.0
      %3810 = vmatpush.msra.mxu0 0.0
      %3811 = vmatpush.msra.mxu0 0.0
      %3812 = vmatpush.msra.mxu0 %v3798
      %3813 = vmatpush.msra.mxu0 %v3780
      %3814 = vmatpush.msra.mxu0 %v3778
      %3815 = vmatpush.msra.mxu0 %v3776
      %3816 = vmatmul.f32.gmra.mxu0 %v3787
      %v3817 = vpop.f32.mrf.mxu0
      %v3818 = vadd.f32 0.0, %v3817
      %3819 = vmatmul.f32.gmra.mxu0 %v3790
      %v3820 = vpop.f32.mrf.mxu0
      %v3821 = vadd.f32 0.0, %v3820
      %3822 = vmatmul.f32.gmra.mxu0 %v3793
      %v3823 = vpop.f32.mrf.mxu0
      %v3824 = vadd.f32 0.0, %v3823
      %3825 = vmatmul.f32.gmra.mxu0 %v3796
      %v3826 = vpop.f32.mrf.mxu0
      %v3827 = vadd.f32 0.0, %v3826
      %3828 = vdwg.mxu0
      %3833 = vrot.lane.b32.xlu0 %v3818, 16
      %v3834 = vpop.permute.xlu0 %3833
      %3835 = vrot.lane.b32.xlu0 %v3821, 16
      %v3836 = vpop.permute.xlu0 %3835
      %3837 = vrot.lane.b32.xlu0 %v3824, 16
      %v3838 = vpop.permute.xlu0 %3837
      %3839 = vrot.lane.b32.xlu0 %v3827, 16
      %v3840 = vpop.permute.xlu0 %3839
      %v3845 = vsel %vm1455, %v3631, %v3834
      %v3846 = vsel %vm1455, %v3634, %v3836
      %v3847 = vsel %vm1455, %v3637, %v3838
      %v3848 = vsel %vm1455, %v3640, %v3840
      %v3849 = vperm.slane %v2405, 5
      %v3851 = vsel %vm613, %v3845, 0
      %v3854 = vsel %vm613, %v3846, 0
      %v3857 = vsel %vm613, %v3847, 0
      %v3860 = vsel %vm613, %v3848, 0
      %3862 = vmatpush.msra.mxu0 0.0
      %3863 = vmatpush.msra.mxu0 0.0
      %3864 = vmatpush.msra.mxu0 0.0
      %3865 = vmatpush.msra.mxu0 0.0
      %3866 = vmatpush.msra.mxu0 0.0
      %3867 = vmatpush.msra.mxu0 0.0
      %3868 = vmatpush.msra.mxu0 0.0
      %3869 = vmatpush.msra.mxu0 0.0
      %3870 = vmatpush.msra.mxu0 0.0
      %3871 = vmatpush.msra.mxu0 0.0
      %3872 = vmatpush.msra.mxu0 0.0
      %3873 = vmatpush.msra.mxu0 0.0
      %3874 = vmatpush.msra.mxu0 %v3416
      %3875 = vmatpush.msra.mxu0 %v3415
      %3876 = vmatpush.msra.mxu0 %v3414
      %3877 = vmatpush.msra.mxu0 %v3413
      %3878 = vmatmul.f32.gmra.mxu0 %v3851
      %v3879 = vpop.f32.mrf.mxu0
      %v3880 = vadd.f32 %v3849, %v3879
      %3881 = vmatmul.f32.gmra.mxu0 %v3854
      %v3882 = vpop.f32.mrf.mxu0
      %v3883 = vadd.f32 %v3849, %v3882
      %3884 = vmatmul.f32.gmra.mxu0 %v3857
      %v3885 = vpop.f32.mrf.mxu0
      %v3886 = vadd.f32 %v3849, %v3885
      %3887 = vmatmul.f32.gmra.mxu0 %v3860
      %v3888 = vpop.f32.mrf.mxu0
      %v3889 = vadd.f32 %v3849, %v3888
      %3890 = vdwg.mxu0
      %v3891 = vadd.f32 %v3403, %v3880
      %v3892 = vadd.f32 %v3404, %v3883
      %v3893 = vadd.f32 %v3405, %v3886
      %v3894 = vadd.f32 %v3406, %v3889
      %v3895 = vsel %vm613, %v3891, 0.0
      %3896 = vadd.xlane.f32.xlu0 %v3895
      %v3897 = vpop.xlane.xlu0 %3896
      %v3898 = vsel %vm613, %v3892, 0.0
      %3899 = vadd.xlane.f32.xlu0 %v3898
      %v3900 = vpop.xlane.xlu0 %3899
      %v3901 = vsel %vm613, %v3893, 0.0
      %3902 = vadd.xlane.f32.xlu0 %v3901
      %v3903 = vpop.xlane.xlu0 %3902
      %v3904 = vsel %vm1520, %v3894, 0.0
      %3905 = vadd.xlane.f32.xlu0 %v3904
      %v3906 = vpop.xlane.xlu0 %3905
      %v3907 = vmul.f32 %v3897, %v1530
      %v3908 = vmul.f32 %v3900, %v1530
      %v3909 = vmul.f32 %v3903, %v1530
      %v3910 = vmul.f32 %v3906, %v1530
      %v3911 = vsub.f32 %v3891, %v3907
      %v3912 = vsub.f32 %v3892, %v3908
      %v3913 = vsub.f32 %v3893, %v3909
      %v3914 = vsub.f32 %v3894, %v3910
      %v3915 = vmul.f32 %v3911, %v3911
      %v3916 = vmul.f32 %v3912, %v3912
      %v3917 = vmul.f32 %v3913, %v3913
      %v3918 = vmul.f32 %v3914, %v3914
      %v3919 = vsel %vm613, %v3915, 0.0
      %3920 = vadd.xlane.f32.xlu0 %v3919
      %v3921 = vpop.xlane.xlu0 %3920
      %v3922 = vsel %vm613, %v3916, 0.0
      %3923 = vadd.xlane.f32.xlu0 %v3922
      %v3924 = vpop.xlane.xlu0 %3923
      %v3925 = vsel %vm613, %v3917, 0.0
      %3926 = vadd.xlane.f32.xlu0 %v3925
      %v3927 = vpop.xlane.xlu0 %3926
      %v3928 = vsel %vm1520, %v3918, 0.0
      %3929 = vadd.xlane.f32.xlu0 %v3928
      %v3930 = vpop.xlane.xlu0 %3929
      %v3931 = vmul.f32 %v3921, %v1530
      %v3932 = vmul.f32 %v3924, %v1530
      %v3933 = vmul.f32 %v3927, %v1530
      %v3934 = vmul.f32 %v3930, %v1530
      %v3935 = vadd.f32 %v3931, 1e-05
      %v3936 = vadd.f32 %v3932, 1e-05
      %v3937 = vadd.f32 %v3933, 1e-05
      %v3938 = vadd.f32 %v3934, 1e-05
      %v3939 = vrsqrt.pop %v3935
      %v3940 = vmul.f32 %v3939, %v3935
      %v3941 = vmul.f32 %v3940, %v3939
      %v3942 = vmul.f32 0.5, %v3941
      %v3943 = vsub.f32 1.5, %v3942
      %v3944 = vmul.f32 %v3939, %v3943
      %vm3945 = vweird.f32 %v3935
      %vm3946 = vweird.f32 %v3939
      %vm3947 = vmor %vm3945, %vm3946
      %v3948 = vsel %vm3947, %v3939, %v3944
      %v3949 = vrsqrt.pop %v3936
      %v3950 = vmul.f32 %v3949, %v3936
      %v3951 = vmul.f32 %v3950, %v3949
      %v3952 = vmul.f32 0.5, %v3951
      %v3953 = vsub.f32 1.5, %v3952
      %v3954 = vmul.f32 %v3949, %v3953
      %vm3955 = vweird.f32 %v3936
      %vm3956 = vweird.f32 %v3949
      %vm3957 = vmor %vm3955, %vm3956
      %v3958 = vsel %vm3957, %v3949, %v3954
      %v3959 = vrsqrt.pop %v3937
      %v3960 = vmul.f32 %v3959, %v3937
      %v3961 = vmul.f32 %v3960, %v3959
      %v3962 = vmul.f32 0.5, %v3961
      %v3963 = vsub.f32 1.5, %v3962
      %v3964 = vmul.f32 %v3959, %v3963
      %vm3965 = vweird.f32 %v3937
      %vm3966 = vweird.f32 %v3959
      %vm3967 = vmor %vm3965, %vm3966
      %v3968 = vsel %vm3967, %v3959, %v3964
      %v3969 = vrsqrt.pop %v3938
      %v3970 = vmul.f32 %v3969, %v3938
      %v3971 = vmul.f32 %v3970, %v3969
      %v3972 = vmul.f32 0.5, %v3971
      %v3973 = vsub.f32 1.5, %v3972
      %v3974 = vmul.f32 %v3969, %v3973
      %vm3975 = vweird.f32 %v3938
      %vm3976 = vweird.f32 %v3969
      %vm3977 = vmor %vm3975, %vm3976
      %v3978 = vsel %vm3977, %v3969, %v3974
      %v3979 = vmul.f32 %v3911, %v3948
      %v3980 = vmul.f32 %v3912, %v3958
      %v3981 = vmul.f32 %v3913, %v3968
      %v3982 = vmul.f32 %v3914, %v3978
      %v3983 = vperm.slane %v2405, 6
      %v3984 = vmul.f32 %v3979, %v3983
      %v3985 = vmul.f32 %v3980, %v3983
      %v3986 = vmul.f32 %v3981, %v3983
      %v3987 = vmul.f32 %v3982, %v3983
      %v3988 = vperm.slane %v2405, 7
      %v3989 = vadd.f32 %v3984, %v3988
      %v3990 = vadd.f32 %v3985, %v3988
      %v3991 = vadd.f32 %v3986, %v3988
      %v3992 = vadd.f32 %v3987, %v3988
      %s3993 = scalar_lea.vmem %s10, 32
      %v3994 = vld [vmem:[%s3993] sm:$0xff]
      %v3995 = vld [vmem:[%s3993 + $0x8] sm:$0xff]
      %v3996 = vld [vmem:[%s3993 + $0x10] sm:$0xff]
      %v3997 = vld [vmem:[%s3993 + $0x18] sm:$0xff]
      %v3998 = vperm.slane %v2406, 0
      %v4000 = vsel %vm613, %v3989, 0
      %v4003 = vsel %vm613, %v3990, 0
      %v4006 = vsel %vm613, %v3991, 0
      %v4009 = vsel %vm613, %v3992, 0
      %4011 = vmatpush.msra.mxu0 0.0
      %4012 = vmatpush.msra.mxu0 0.0
      %4013 = vmatpush.msra.mxu0 0.0
      %4014 = vmatpush.msra.mxu0 0.0
      %4015 = vmatpush.msra.mxu0 0.0
      %4016 = vmatpush.msra.mxu0 0.0
      %4017 = vmatpush.msra.mxu0 0.0
      %4018 = vmatpush.msra.mxu0 0.0
      %4019 = vmatpush.msra.mxu0 0.0
      %4020 = vmatpush.msra.mxu0 0.0
      %4021 = vmatpush.msra.mxu0 0.0
      %4022 = vmatpush.msra.mxu0 0.0
      %4023 = vmatpush.msra.mxu0 %v3997
      %4024 = vmatpush.msra.mxu0 %v3996
      %4025 = vmatpush.msra.mxu0 %v3995
      %4026 = vmatpush.msra.mxu0 %v3994
      %4027 = vmatmul.f32.gmra.mxu0 %v4000
      %v4028 = vpop.f32.mrf.mxu0
      %v4029 = vadd.f32 %v3998, %v4028
      %4030 = vmatmul.f32.gmra.mxu0 %v4003
      %v4031 = vpop.f32.mrf.mxu0
      %v4032 = vadd.f32 %v3998, %v4031
      %4033 = vmatmul.f32.gmra.mxu0 %v4006
      %v4034 = vpop.f32.mrf.mxu0
      %v4035 = vadd.f32 %v3998, %v4034
      %4036 = vmatmul.f32.gmra.mxu0 %v4009
      %v4037 = vpop.f32.mrf.mxu0
      %v4038 = vadd.f32 %v3998, %v4037
      %4039 = vdwg.mxu0
      %v4040 = vmax.f32 %v4029, 0.0
      %v4041 = vmax.f32 %v4032, 0.0
      %v4042 = vmax.f32 %v4035, 0.0
      %v4043 = vmax.f32 %v4038, 0.0
      %s4044 = scalar_lea.vmem %s11, 64
      %v4045 = vld [vmem:[%s4044] sm:$0xff]
      %v4046 = vld [vmem:[%s4044 + $0x8] sm:$0xff]
      %v4047 = vld [vmem:[%s4044 + $0x10] sm:$0xff]
      %v4048 = vld [vmem:[%s4044 + $0x18] sm:$0xff]
      %v4049 = vld [vmem:[%s4044 + $0x20] sm:$0xff]
      %v4050 = vld [vmem:[%s4044 + $0x28] sm:$0xff]
      %v4051 = vld [vmem:[%s4044 + $0x30] sm:$0xff]
      %v4052 = vld [vmem:[%s4044 + $0x38] sm:$0xff]
      %v4053 = vperm.slane %v2406, 1
      %v4055 = vsel %vm2260, %v4040, 0
      %v4058 = vsel %vm2260, %v4041, 0
      %v4061 = vsel %vm2260, %v4042, 0
      %v4064 = vsel %vm2260, %v4043, 0
      %4066 = vmatpush.msra.mxu0 0.0
      %4067 = vmatpush.msra.mxu0 0.0
      %4068 = vmatpush.msra.mxu0 0.0
      %4069 = vmatpush.msra.mxu0 0.0
      %4070 = vmatpush.msra.mxu0 0.0
      %4071 = vmatpush.msra.mxu0 0.0
      %4072 = vmatpush.msra.mxu0 0.0
      %4073 = vmatpush.msra.mxu0 0.0
      %4074 = vmatpush.msra.mxu0 %v4052
      %4075 = vmatpush.msra.mxu0 %v4051
      %4076 = vmatpush.msra.mxu0 %v4050
      %4077 = vmatpush.msra.mxu0 %v4049
      %4078 = vmatpush.msra.mxu0 %v4048
      %4079 = vmatpush.msra.mxu0 %v4047
      %4080 = vmatpush.msra.mxu0 %v4046
      %4081 = vmatpush.msra.mxu0 %v4045
      %4082 = vmatmul.f32.gmra.mxu0 %v4055
      %v4083 = vpop.f32.mrf.mxu0
      %v4084 = vadd.f32 %v4053, %v4083
      %4085 = vmatmul.f32.gmra.mxu0 %v4058
      %v4086 = vpop.f32.mrf.mxu0
      %v4087 = vadd.f32 %v4053, %v4086
      %4088 = vmatmul.f32.gmra.mxu0 %v4061
      %v4089 = vpop.f32.mrf.mxu0
      %v4090 = vadd.f32 %v4053, %v4089
      %4091 = vmatmul.f32.gmra.mxu0 %v4064
      %v4092 = vpop.f32.mrf.mxu0
      %v4093 = vadd.f32 %v4053, %v4092
      %4094 = vdwg.mxu0
      %v4095 = vadd.f32 %v3989, %v4084
      %v4096 = vadd.f32 %v3990, %v4087
      %v4097 = vadd.f32 %v3991, %v4090
      %v4098 = vadd.f32 %v3992, %v4093
      %v4099 = vsel %vm613, %v4095, 0.0
      %4100 = vadd.xlane.f32.xlu0 %v4099
      %v4101 = vpop.xlane.xlu0 %4100
      %v4102 = vsel %vm613, %v4096, 0.0
      %4103 = vadd.xlane.f32.xlu0 %v4102
      %v4104 = vpop.xlane.xlu0 %4103
      %v4105 = vsel %vm613, %v4097, 0.0
      %4106 = vadd.xlane.f32.xlu0 %v4105
      %v4107 = vpop.xlane.xlu0 %4106
      %v4108 = vsel %vm1520, %v4098, 0.0
      %4109 = vadd.xlane.f32.xlu0 %v4108
      %v4110 = vpop.xlane.xlu0 %4109
      %v4111 = vmul.f32 %v4101, %v1530
      %v4112 = vmul.f32 %v4104, %v1530
      %v4113 = vmul.f32 %v4107, %v1530
      %v4114 = vmul.f32 %v4110, %v1530
      %v4115 = vsub.f32 %v4095, %v4111
      %v4116 = vsub.f32 %v4096, %v4112
      %v4117 = vsub.f32 %v4097, %v4113
      %v4118 = vsub.f32 %v4098, %v4114
      %v4119 = vmul.f32 %v4115, %v4115
      %v4120 = vmul.f32 %v4116, %v4116
      %v4121 = vmul.f32 %v4117, %v4117
      %v4122 = vmul.f32 %v4118, %v4118
      %v4123 = vsel %vm613, %v4119, 0.0
      %4124 = vadd.xlane.f32.xlu0 %v4123
      %v4125 = vpop.xlane.xlu0 %4124
      %v4126 = vsel %vm613, %v4120, 0.0
      %4127 = vadd.xlane.f32.xlu0 %v4126
      %v4128 = vpop.xlane.xlu0 %4127
      %v4129 = vsel %vm613, %v4121, 0.0
      %4130 = vadd.xlane.f32.xlu0 %v4129
      %v4131 = vpop.xlane.xlu0 %4130
      %v4132 = vsel %vm1520, %v4122, 0.0
      %4133 = vadd.xlane.f32.xlu0 %v4132
      %v4134 = vpop.xlane.xlu0 %4133
      %v4135 = vmul.f32 %v4125, %v1530
      %v4136 = vmul.f32 %v4128, %v1530
      %v4137 = vmul.f32 %v4131, %v1530
      %v4138 = vmul.f32 %v4134, %v1530
      %v4139 = vadd.f32 %v4135, 1e-05
      %v4140 = vadd.f32 %v4136, 1e-05
      %v4141 = vadd.f32 %v4137, 1e-05
      %v4142 = vadd.f32 %v4138, 1e-05
      %v4143 = vrsqrt.pop %v4139
      %v4144 = vmul.f32 %v4143, %v4139
      %v4145 = vmul.f32 %v4144, %v4143
      %v4146 = vmul.f32 0.5, %v4145
      %v4147 = vsub.f32 1.5, %v4146
      %v4148 = vmul.f32 %v4143, %v4147
      %vm4149 = vweird.f32 %v4139
      %vm4150 = vweird.f32 %v4143
      %vm4151 = vmor %vm4149, %vm4150
      %v4152 = vsel %vm4151, %v4143, %v4148
      %v4153 = vrsqrt.pop %v4140
      %v4154 = vmul.f32 %v4153, %v4140
      %v4155 = vmul.f32 %v4154, %v4153
      %v4156 = vmul.f32 0.5, %v4155
      %v4157 = vsub.f32 1.5, %v4156
      %v4158 = vmul.f32 %v4153, %v4157
      %vm4159 = vweird.f32 %v4140
      %vm4160 = vweird.f32 %v4153
      %vm4161 = vmor %vm4159, %vm4160
      %v4162 = vsel %vm4161, %v4153, %v4158
      %v4163 = vrsqrt.pop %v4141
      %v4164 = vmul.f32 %v4163, %v4141
      %v4165 = vmul.f32 %v4164, %v4163
      %v4166 = vmul.f32 0.5, %v4165
      %v4167 = vsub.f32 1.5, %v4166
      %v4168 = vmul.f32 %v4163, %v4167
      %vm4169 = vweird.f32 %v4141
      %vm4170 = vweird.f32 %v4163
      %vm4171 = vmor %vm4169, %vm4170
      %v4172 = vsel %vm4171, %v4163, %v4168
      %v4173 = vrsqrt.pop %v4142
      %v4174 = vmul.f32 %v4173, %v4142
      %v4175 = vmul.f32 %v4174, %v4173
      %v4176 = vmul.f32 0.5, %v4175
      %v4177 = vsub.f32 1.5, %v4176
      %v4178 = vmul.f32 %v4173, %v4177
      %vm4179 = vweird.f32 %v4142
      %vm4180 = vweird.f32 %v4173
      %vm4181 = vmor %vm4179, %vm4180
      %v4182 = vsel %vm4181, %v4173, %v4178
      %v4183 = vmul.f32 %v4115, %v4152
      %v4184 = vmul.f32 %v4116, %v4162
      %v4185 = vmul.f32 %v4117, %v4172
      %v4186 = vmul.f32 %v4118, %v4182
      %v4187 = vperm.slane %v2406, 2
      %v4188 = vmul.f32 %v4183, %v4187
      %v4189 = vmul.f32 %v4184, %v4187
      %v4190 = vmul.f32 %v4185, %v4187
      %v4191 = vmul.f32 %v4186, %v4187
      %v4192 = vperm.slane %v2406, 3
      %v4193 = vadd.f32 %v4188, %v4192
      %v4194 = vadd.f32 %v4189, %v4192
      %v4195 = vadd.f32 %v4190, %v4192
      %v4196 = vadd.f32 %v4191, %v4192
      %v4197 = vld [vmem:[%s13] sm:$0xff]
      %v4198 = vld [vmem:[%s13 + $0x8] sm:$0xff]
      %v4199 = vld [vmem:[%s13 + $0x10] sm:$0xff]
      %v4200 = vld [vmem:[%s13 + $0x18] sm:$0xff]
      %v4201 = vperm.slane %v510, 0
      %v4203 = vsel %vm613, %v4193, 0
      %v4206 = vsel %vm613, %v4194, 0
      %v4209 = vsel %vm613, %v4195, 0
      %v4212 = vsel %vm613, %v4196, 0
      %4214 = vmatpush.msra.mxu0 0.0
      %4215 = vmatpush.msra.mxu0 0.0
      %4216 = vmatpush.msra.mxu0 0.0
      %4217 = vmatpush.msra.mxu0 0.0
      %4218 = vmatpush.msra.mxu0 0.0
      %4219 = vmatpush.msra.mxu0 0.0
      %4220 = vmatpush.msra.mxu0 0.0
      %4221 = vmatpush.msra.mxu0 0.0
      %4222 = vmatpush.msra.mxu0 0.0
      %4223 = vmatpush.msra.mxu0 0.0
      %4224 = vmatpush.msra.mxu0 0.0
      %4225 = vmatpush.msra.mxu0 0.0
      %4226 = vmatpush.msra.mxu0 %v4200
      %4227 = vmatpush.msra.mxu0 %v4199
      %4228 = vmatpush.msra.mxu0 %v4198
      %4229 = vmatpush.msra.mxu0 %v4197
      %4230 = vmatmul.f32.gmra.mxu0 %v4203
      %v4231 = vpop.f32.mrf.mxu0
      %v4232 = vadd.f32 %v4201, %v4231
      %4233 = vmatmul.f32.gmra.mxu0 %v4206
      %v4234 = vpop.f32.mrf.mxu0
      %v4235 = vadd.f32 %v4201, %v4234
      %4236 = vmatmul.f32.gmra.mxu0 %v4209
      %v4237 = vpop.f32.mrf.mxu0
      %v4238 = vadd.f32 %v4201, %v4237
      %4239 = vmatmul.f32.gmra.mxu0 %v4212
      %v4240 = vpop.f32.mrf.mxu0
      %v4241 = vadd.f32 %v4201, %v4240
      %4242 = vdwg.mxu0
      %v4243 = vlaneseq
      %v4244 = vshrl.u32 %v4243, 7
      %v4245 = vlaneseq
      %v4246 = vand.u32 %v4245, 127
      %vm4247 = vcmp.ge.s32.totalorder %v4244, %v4246
      %v4248 = vsel %vm4247, 1, 0
      %v4249 = vcvt.s32.f32 %v4248
      %v4250 = vld [vmem:[%s492 + $0x5] sm:$0x1]
      %v4251 = vsub.f32 %v4250, %v508
      %v4252 = vrcp.pop %v509
      %v4253 = vmul.f32 %v509, %v4252
      %v4254 = vsub.f32 1.0, %v4253
      %v4255 = vmul.f32 %v4252, %v4254
      %v4256 = vadd.f32 %v4252, %v4255
      %vm4257 = vweird.f32 %v509
      %vm4258 = vweird.f32 %v4252
      %vm4259 = vmor %vm4257, %vm4258
      %v4260 = vsel %vm4259, %v4252, %v4256
      %v4261 = vand.u32 2147483647, %v509
      %vm4262 = vcmp.eq.f32.partialorder %v4261, 8.507059e+37
      %v4263 = vand.u32 %v509, 2147483648
      %v4264 = vor.u32 1.1754944e-38, %v4263
      %v4265 = vsel %vm4262, %v4264, %v4260
      %v4266 = vmul.f32 %v4251, %v4265
      %vm4269 = vcmask 1041408
      %v4270 = vrot.slane %v4232, 6
      %v4271 = vrot.slane %v4235, 6
      %v4272 = vsel %vm4269, %v4270, %v4271
      %vm4273 = vcmask 31744
      %v4275 = vsel %vm4273, %v4249, 0
      %vm4277 = vcmask 1043456
      %v4278 = vsel %vm4277, %v4272, 0
      %4280 = vmatpush.msra.mxu0 0.0
      %4281 = vmatpush.msra.mxu0 0.0
      %4282 = vmatpush.msra.mxu0 0.0
      %4283 = vmatpush.msra.mxu0 0.0
      %4284 = vmatpush.msra.mxu0 0.0
      %4285 = vmatpush.msra.mxu0 0.0
      %4286 = vmatpush.msra.mxu0 0.0
      %4287 = vmatpush.msra.mxu0 0.0
      %4288 = vmatpush.msra.mxu0 0.0
      %4289 = vmatpush.msra.mxu0 0.0
      %4290 = vmatpush.msra.mxu0 0.0
      %4291 = vmatpush.msra.mxu0 0.0
      %4292 = vmatpush.msra.mxu0 0.0
      %4293 = vmatpush.msra.mxu0 0.0
      %4294 = vmatpush.msra.mxu0 0.0
      %4295 = vmatpush.msra.mxu0 %v4278
      %4296 = vmatmul.f32.gmra.mxu0 %v4275
      %v4297 = vpop.f32.mrf.mxu0
      %v4298 = vadd.f32 0.0, %v4297
      %4299 = vdwg.mxu0
      %v4300 = vperm.slane %v4266, 0
      %v4301 = vadd.f32 %v4300, %v4298
      %v4302 = vld [vmem:[%s492 + $0xf] sm:$0x1]
      %v4303 = vsub.f32 %v4302, %v508
      %v4304 = vmul.f32 %v4303, %v4265
      %v4306 = vsel %vm4277, %v4238, 0
      %4308 = vmatpush.msra.mxu0 0.0
      %4309 = vmatpush.msra.mxu0 0.0
      %4310 = vmatpush.msra.mxu0 0.0
      %4311 = vmatpush.msra.mxu0 0.0
      %4312 = vmatpush.msra.mxu0 0.0
      %4313 = vmatpush.msra.mxu0 0.0
      %4314 = vmatpush.msra.mxu0 0.0
      %4315 = vmatpush.msra.mxu0 0.0
      %4316 = vmatpush.msra.mxu0 0.0
      %4317 = vmatpush.msra.mxu0 0.0
      %4318 = vmatpush.msra.mxu0 0.0
      %4319 = vmatpush.msra.mxu0 0.0
      %4320 = vmatpush.msra.mxu0 0.0
      %4321 = vmatpush.msra.mxu0 0.0
      %4322 = vmatpush.msra.mxu0 0.0
      %4323 = vmatpush.msra.mxu0 %v4306
      %4324 = vmatmul.f32.gmra.mxu0 %v4275
      %v4325 = vpop.f32.mrf.mxu0
      %v4326 = vadd.f32 0.0, %v4325
      %4327 = vdwg.mxu0
      %v4328 = vperm.slane %v4304, 0
      %v4329 = vadd.f32 %v4328, %v4326
      %v4330 = vld [vmem:[%s492 + $0x19] sm:$0x1]
      %v4331 = vsub.f32 %v4330, %v508
      %v4332 = vmul.f32 %v4331, %v4265
      %v4334 = vrot.slane %v4241, 2
      %v4335 = vsel %vm4277, %v4334, 0
      %4337 = vmatpush.msra.mxu0 0.0
      %4338 = vmatpush.msra.mxu0 0.0
      %4339 = vmatpush.msra.mxu0 0.0
      %4340 = vmatpush.msra.mxu0 0.0
      %4341 = vmatpush.msra.mxu0 0.0
      %4342 = vmatpush.msra.mxu0 0.0
      %4343 = vmatpush.msra.mxu0 0.0
      %4344 = vmatpush.msra.mxu0 0.0
      %4345 = vmatpush.msra.mxu0 0.0
      %4346 = vmatpush.msra.mxu0 0.0
      %4347 = vmatpush.msra.mxu0 0.0
      %4348 = vmatpush.msra.mxu0 0.0
      %4349 = vmatpush.msra.mxu0 0.0
      %4350 = vmatpush.msra.mxu0 0.0
      %4351 = vmatpush.msra.mxu0 0.0
      %4352 = vmatpush.msra.mxu0 %v4335
      %4353 = vmatmul.f32.gmra.mxu0 %v4275
      %v4354 = vpop.f32.mrf.mxu0
      %v4355 = vadd.f32 0.0, %v4354
      %4356 = vdwg.mxu0
      %v4357 = vperm.slane %v4332, 0
      %v4358 = vadd.f32 %v4357, %v4355
      %v4360 = vrot.slane %v4329, 4
      %v4362 = vsel %vm4277, %v4301, %v4360
      %v4363 = vmul.f32 %v4362, %v528
      %v4364 = vmul.f32 %v4358, %v528
      %v4365 = vadd.f32 %v4363, %v523
      %v4366 = vadd.f32 %v4364, %v523
      %v4367 = vsel %vm560, %v4365, 0.0
      %v4368 = vsel %vm560, %v4366, 0.0
      %4369 = vst [vmem:[%s507] sm:$0xff] %v4367
      %4370 = vst [vmem:[%s507 + $0x8] sm:$0xf] %v4368
      %p4371 = scmp.lt.s32.totalorder %s25, 1
      %s4372 = scalar_select %p4371, %s25, 1
      %s4373 = smul.addr %s4372, 2
      %s4374 = smul.addr %s4373, 8
      %s4375 = scalar_lea.vmem %s14, %s4374
      // Predicated region
      $region77: #{motion_transformer_forward.1} parent=75 // pred_check
        %p4376 = pneg %p352
      $region78: #{motion_transformer_forward.1} parent=75 // pred_check_branch
        %4378 = sbr.rel (%p4376) target = $region80
      $region79: #{motion_transformer_forward.1} parent=75 // pred_region
        _
      $region80: #{motion_transformer_forward.1} parent=75 // pred_fallthru
        _
    $region76: #{motion_transformer_forward.1} parent=5 // pred_fallthru
      _
    %p4379 = scmp.le.s32.totalorder 2, %s20
    // Predicated region
    $region81: #{motion_transformer_forward.1} parent=5 // pred_check
      %p4380 = pneg %p4379
    $region82: #{motion_transformer_forward.1} parent=5 // pred_check_branch
      %4382 = sbr.rel (%p4380) target = $region84
    $region83: #{motion_transformer_forward.1} parent=5 // pred_region
      %s4383 = ssub.s32 %s20, 2
      // Predicated region
      $region85: #{motion_transformer_forward.1} parent=83 // pred_check
        %p4384 = pneg %p358
      $region86: #{motion_transformer_forward.1} parent=83 // pred_check_branch
        %4386 = sbr.rel (%p4384) target = $region88
      $region87: #{motion_transformer_forward.1} parent=83 // pred_region
        %p4387 = scmp.lt.s32.totalorder %s26, 1
        %s4388 = scalar_select %p4387, %s26, 1
        %s4389 = smul.addr %s4388, 2
        %s4390 = smul.addr %s4389, 8
        %s4391 = scalar_lea.vmem %s14, %s4390
      $region88: #{motion_transformer_forward.1} parent=83 // pred_fallthru
        _
    $region84: #{motion_transformer_forward.1} parent=5 // pred_fallthru
      _
  $region6: #{motion_transformer_forward.1} parent=0 // loop_footer
    %s24 = sadd.s32 1, %s20
  $region7: #{motion_transformer_forward.1} parent=0 // loop_footer_branch
    %19 = sbr.rel target = $region3
  $region8: #{motion_transformer_forward.1} parent=0 // loop_exit
    _

</llo_original>
